<compile_context>
chip_gen: v6e
topology: v6e:2x2x1
jax: 0.10.0
libtpu: 0.0.40
codegen_flags: <defaults>
</compile_context>

<pallas_src>
import functools
import math

import jax
import jax.numpy as jnp
from jax import lax
from jax.experimental import pallas as pl
from jax.experimental.pallas import tpu as pltpu


# ----------------------------- in-kernel helpers ----------------------------

def _layer_norm(x, w, b, eps=1e-5):
    mu = jnp.mean(x, axis=-1, keepdims=True)
    xc = x - mu
    var = jnp.mean(xc * xc, axis=-1, keepdims=True)
    return xc * lax.rsqrt(var + eps) * w + b


def _erf_approx(x):
    # Abramowitz & Stegun 7.1.26, |err| <= 1.5e-7, elementwise ops only
    # (abs/mul/add/exp/where all have Mosaic lowerings).
    a1, a2, a3, a4, a5 = 0.254829592, -0.284496736, 1.421413741, -1.453152027, 1.061405429
    p = 0.3275911
    ax = jnp.abs(x)
    t = 1.0 / (1.0 + p * ax)
    poly = ((((a5 * t + a4) * t + a3) * t + a2) * t + a1) * t
    y = 1.0 - poly * jnp.exp(-ax * ax)
    return jnp.where(x < 0, -y, y)


def _gelu_exact(x):
    # torch.nn.GELU() default (erf form), to ~1.5e-7.
    return 0.5 * x * (1.0 + _erf_approx(x * (1.0 / math.sqrt(2.0))))


# ------------------------------- Pallas kernel ------------------------------

def _encoder_layer_kernel(x_ref, bias_ref,
                          ln1w_ref, ln1b_ref,
                          wq_ref, wk_ref, wv_ref,
                          bq_ref, bk_ref, bv_ref,
                          wo_ref, bo_ref,
                          ln2w_ref, ln2b_ref,
                          w1_ref, b1_ref, w2_ref, b2_ref,
                          o_ref, *, heads, head_dim):
    """One TransformerBlock per grid step; o_ref carries x across the depth grid."""
    layer = pl.program_id(0)

    @pl.when(layer == 0)
    def _():
        o_ref[...] = x_ref[...]            # initialize the VMEM-resident carry

    x = o_ref[...]                         # (N, D) f32 residual stream, N = B*S
    n, d = x.shape
    scale = 1.0 / math.sqrt(head_dim)
    attn_bias = bias_ref[...]              # (N, N) block-diagonal over batch

    # ---- attention sub-block: x = x + MHA(LN1(x)) ---------------------------
    h = _layer_norm(x, ln1w_ref[...], ln1b_ref[...])     # f32
    h_b = h.astype(jnp.bfloat16)

    acc = jnp.zeros((n, d), jnp.float32)
    for hh in range(heads):                # small static loop; weights are head-major,
        #                                    so activations are never lane-sliced.
        q = jnp.dot(h_b, wq_ref[hh], preferred_element_type=jnp.float32) + bq_ref[hh]
        k = jnp.dot(h_b, wk_ref[hh], preferred_element_type=jnp.float32) + bk_ref[hh]
        v = jnp.dot(h_b, wv_ref[hh], preferred_element_type=jnp.float32) + bv_ref[hh]
        # scores: contract last axes (no explicit transpose); batch separation
        # via the additive block-diagonal bias, so M = N = B*S on the MXU.
        sc = lax.dot_general(
            (q * scale).astype(jnp.bfloat16), k.astype(jnp.bfloat16),
            dimension_numbers=(((1,), (1,)), ((), ())),
            preferred_element_type=jnp.float32)          # (N, N) f32
        sc = sc + attn_bias
        sc = sc - jnp.max(sc, axis=-1, keepdims=True)
        p = jnp.exp(sc)
        p = p * pl.reciprocal(jnp.sum(p, axis=-1, keepdims=True), approx=True)
        # TODO(synk): attention dropout (p=0.1) is identity in eval mode.
        o_h = jnp.dot(p.astype(jnp.bfloat16), v.astype(jnp.bfloat16),
                      preferred_element_type=jnp.float32)            # (N, hd)
        # out-projection folded per head: concat_h(o_h) @ Wo == sum_h o_h @ Wo[h]
        acc = acc + jnp.dot(o_h.astype(jnp.bfloat16), wo_ref[hh],
                            preferred_element_type=jnp.float32)      # (N, D)
    x = x + acc + bo_ref[...]

    # ---- MLP sub-block: x = x + W2 @ GELU(W1 @ LN2(x)) ----------------------
    h2 = _layer_norm(x, ln2w_ref[...], ln2b_ref[...])
    hm = jnp.dot(h2.astype(jnp.bfloat16), w1_ref[...],
                 preferred_element_type=jnp.float32) + b1_ref[...]
    hm = _gelu_exact(hm)
    # TODO(synk): the two MLP dropouts (p=0.1) are identity in eval mode.
    mo = jnp.dot(hm.astype(jnp.bfloat16), w2_ref[...],
                 preferred_element_type=jnp.float32) + b2_ref[...]
    o_ref[...] = x + mo


# --------------------------------- wrapper ----------------------------------

_PARAM_ORDER = ("ln1_w", "ln1_b", "wq", "wk", "wv", "bq", "bk", "bv",
                "wo", "bo", "ln2_w", "ln2_b", "w1", "b1", "w2", "b2")


def _layer_spec(p):
    """Stream one layer's slice of a depth-stacked parameter per grid step."""
    nd = p.ndim
    return pl.BlockSpec((None,) + tuple(p.shape[1:]),
                        lambda l, _nd=nd: (l,) + (0,) * (_nd - 1))


def transformer_encoder_forward(params, x, *, heads):
    """x: (B, S, D) float32, batch_first (as in the PyTorch module)."""
    b, s, d = x.shape
    if d % heads != 0:
        raise ValueError(f"dim={d} must be divisible by heads={heads}")
    hd = d // heads
    depth = params["ln1_w"].shape[0]
    n = b * s

    x2 = x.reshape(n, d).astype(jnp.float32)

    # Additive block-diagonal bias: rows of different batch elements never
    # attend to each other even though the whole (B*S, D) slab is one tile.
    row = jnp.arange(n, dtype=jnp.int32) // s
    attn_bias = jnp.where(row[:, None] == row[None, :], 0.0, -1e30).astype(jnp.float32)

    param_list = [params[name] for name in _PARAM_ORDER]

    out2 = pl.pallas_call(
        functools.partial(_encoder_layer_kernel, heads=heads, head_dim=hd),
        out_shape=jax.ShapeDtypeStruct((n, d), jnp.float32),
        grid=(depth,),
        in_specs=[pl.BlockSpec((n, d), lambda l: (0, 0)),     # x (read once, step 0)
                  pl.BlockSpec((n, n), lambda l: (0, 0))]     # attention bias
                 + [_layer_spec(p) for p in param_list],      # streamed per layer
        out_specs=pl.BlockSpec((n, d), lambda l: (0, 0)),     # VMEM-resident carry
        compiler_params=pltpu.CompilerParams(
            dimension_semantics=("arbitrary",),               # sequential depth carry
            vmem_limit_bytes=32 * 1024 * 1024),               # explicit scoped budget
    )(x2, attn_bias, *param_list)
    return out2.reshape(b, s, d)


# ---------------------------- pure-JAX reference ----------------------------

def transformer_encoder_ref(params, x, *, heads):
    """f32 / HIGHEST-precision reference with exact-erf GELU (torch semantics)."""
    depth = params["ln1_w"].shape[0]
    B, S, d = x.shape
    hd = d // heads
    scale = 1.0 / math.sqrt(hd)
    hp = lax.Precision.HIGHEST
    f32 = lambda a: a.astype(jnp.float32)

    def ln(t, w, b):
        mu = jnp.mean(t, axis=-1, keepdims=True)
        var = jnp.mean((t - mu) ** 2, axis=-1, keepdims=True)
        return (t - mu) * lax.rsqrt(var + 1e-5) * w + b

    for l in range(depth):
        h = ln(x, params["ln1_w"][l], params["ln1_b"][l])
        q = jnp.einsum("bsd,hdk->bhsk", h, f32(params["wq"][l]), precision=hp) + params["bq"][l][None]
        k = jnp.einsum("bsd,hdk->bhsk", h, f32(params["wk"][l]), precision=hp) + params["bk"][l][None]
        v = jnp.einsum("bsd,hdk->bhsk", h, f32(params["wv"][l]), precision=hp) + params["bv"][l][None]
        sc = jnp.einsum("bhqd,bhkd->bhqk", q * scale, k, precision=hp)
        p = jax.nn.softmax(sc, axis=-1)
        o = jnp.einsum("bhqk,bhkd->bhqd", p, v, precision=hp)
        attn = jnp.einsum("bhsd,hdo->bso", o, f32(params["wo"][l]), precision=hp) + params["bo"][l]
        x = x + attn
        h2 = ln(x, params["ln2_w"][l], params["ln2_b"][l])
        hm = jax.nn.gelu(jnp.einsum("bsd,df->bsf", h2, f32(params["w1"][l]), precision=hp)
                         + params["b1"][l], approximate=False)
        x = x + jnp.einsum("bsf,fd->bsd", hm, f32(params["w2"][l]), precision=hp) + params["b2"][l]
    return x


# ----------------------------------- init -----------------------------------

def init_params(key, depth, dim, heads, mlp_dim):
    assert dim % heads == 0
    hd = dim // heads
    ks = jax.random.split(key, 12)

    def u(k, shape, fan_in, dtype=jnp.float32):
        bound = 1.0 / math.sqrt(fan_in)
        return jax.random.uniform(k, shape, jnp.float32, -bound, bound).astype(dtype)

    wdt = jnp.bfloat16  # matmul weights stored bf16; biases / LN params stay f32
    p = {}
    p["ln1_w"] = jnp.ones((depth, 1, dim), jnp.float32)
    p["ln1_b"] = jnp.zeros((depth, 1, dim), jnp.float32)
    p["ln2_w"] = jnp.ones((depth, 1, dim), jnp.float32)
    p["ln2_b"] = jnp.zeros((depth, 1, dim), jnp.float32)
    # attention weights: head-major, pre-transposed to (in, out) so kernels do x @ W
    p["wq"] = u(ks[0], (depth, heads, dim, hd), dim, wdt)
    p["wk"] = u(ks[1], (depth, heads, dim, hd), dim, wdt)
    p["wv"] = u(ks[2], (depth, heads, dim, hd), dim, wdt)
    p["bq"] = u(ks[3], (depth, heads, 1, hd), dim)
    p["bk"] = u(ks[4], (depth, heads, 1, hd), dim)
    p["bv"] = u(ks[5], (depth, heads, 1, hd), dim)
    p["wo"] = u(ks[6], (depth, heads, hd, dim), dim, wdt)
    p["bo"] = u(ks[7], (depth, 1, dim), dim)
    p["w1"] = u(ks[8], (depth, dim, mlp_dim), dim, wdt)
    p["b1"] = u(ks[9], (depth, 1, mlp_dim), dim)
    p["w2"] = u(ks[10], (depth, mlp_dim, dim), mlp_dim, wdt)
    p["b2"] = u(ks[11], (depth, 1, dim), mlp_dim)
    return p


# ----------------------------------- main ------------------------------------

if __name__ == "__main__":
    depth, dim, heads, mlp_dim = 8, 32, 4, 64
    B, S = 2, 8

    key = jax.random.PRNGKey(0)
    kp, kx = jax.random.split(key)
    params = init_params(kp, depth, dim, heads, mlp_dim)
    x = jax.random.normal(kx, (B, S, dim), jnp.float32)

    fwd = jax.jit(functools.partial(transformer_encoder_forward, heads=heads))
    out = fwd(params, x)
    jax.block_until_ready(out)

    assert out.shape == (B, S, dim), out.shape
    assert bool(jnp.all(jnp.isfinite(out)))

    ref = transformer_encoder_ref(params, x, heads=heads)
    max_abs = float(jnp.max(jnp.abs(out - ref)))
    ref_mag = float(jnp.max(jnp.abs(ref)))
    rel_err = max_abs / max(ref_mag, 1e-3)
    # relative tolerance sized for bf16 matmul operands through 8 layers
    assert rel_err < 5e-2, f"mismatch vs reference: rel={rel_err} abs={max_abs}"

    print("KERNEL_OK")
</pallas_src>

<mosaic_0001>
module attributes {stable_mosaic.version = 11 : i64} {
  func.func @_encoder_layer_kernel(%arg0: i32, %arg1: memref<16x32xf32, #tpu.memory_space<vmem>>, %arg2: memref<16x16xf32, #tpu.memory_space<vmem>>, %arg3: memref<1x1x32xf32, #tpu.memory_space<vmem>>, %arg4: memref<1x1x32xf32, #tpu.memory_space<vmem>>, %arg5: memref<1x4x32x8xbf16, #tpu.memory_space<vmem>>, %arg6: memref<1x4x32x8xbf16, #tpu.memory_space<vmem>>, %arg7: memref<1x4x32x8xbf16, #tpu.memory_space<vmem>>, %arg8: memref<1x4x1x8xf32, #tpu.memory_space<vmem>>, %arg9: memref<1x4x1x8xf32, #tpu.memory_space<vmem>>, %arg10: memref<1x4x1x8xf32, #tpu.memory_space<vmem>>, %arg11: memref<1x4x8x32xbf16, #tpu.memory_space<vmem>>, %arg12: memref<1x1x32xf32, #tpu.memory_space<vmem>>, %arg13: memref<1x1x32xf32, #tpu.memory_space<vmem>>, %arg14: memref<1x1x32xf32, #tpu.memory_space<vmem>>, %arg15: memref<1x32x64xbf16, #tpu.memory_space<vmem>>, %arg16: memref<1x1x64xf32, #tpu.memory_space<vmem>>, %arg17: memref<1x64x32xbf16, #tpu.memory_space<vmem>>, %arg18: memref<1x1x32xf32, #tpu.memory_space<vmem>>, %arg19: memref<16x32xf32, #tpu.memory_space<vmem>>) attributes {dimension_semantics = [#tpu.dimension_semantics<arbitrary>], iteration_bounds = array<i64: 8>, scalar_prefetch = 0 : i64, scratch_operands = 0 : i64, tpu.core_type = #tpu.core_type<tc>, window_params = [{pipeline_mode = #tpu.pipeline_mode<synchronous>, transform_indices = @transform_0, window_bounds = array<i64: 16, 32>}, {pipeline_mode = #tpu.pipeline_mode<synchronous>, transform_indices = @transform_1, window_bounds = array<i64: 16, 16>}, {transform_indices = @transform_2, window_bounds = array<i64: 1, 1, 32>}, {transform_indices = @transform_3, window_bounds = array<i64: 1, 1, 32>}, {transform_indices = @transform_4, window_bounds = array<i64: 1, 4, 32, 8>}, {transform_indices = @transform_5, window_bounds = array<i64: 1, 4, 32, 8>}, {transform_indices = @transform_6, window_bounds = array<i64: 1, 4, 32, 8>}, {transform_indices = @transform_7, window_bounds = array<i64: 1, 4, 1, 8>}, {transform_indices = @transform_8, window_bounds = array<i64: 1, 4, 1, 8>}, {transform_indices = @transform_9, window_bounds = array<i64: 1, 4, 1, 8>}, {transform_indices = @transform_10, window_bounds = array<i64: 1, 4, 8, 32>}, {transform_indices = @transform_11, window_bounds = array<i64: 1, 1, 32>}, {transform_indices = @transform_12, window_bounds = array<i64: 1, 1, 32>}, {transform_indices = @transform_13, window_bounds = array<i64: 1, 1, 32>}, {transform_indices = @transform_14, window_bounds = array<i64: 1, 32, 64>}, {transform_indices = @transform_15, window_bounds = array<i64: 1, 1, 64>}, {transform_indices = @transform_16, window_bounds = array<i64: 1, 64, 32>}, {transform_indices = @transform_17, window_bounds = array<i64: 1, 1, 32>}, {pipeline_mode = #tpu.pipeline_mode<synchronous>, transform_indices = @transform_18, window_bounds = array<i64: 16, 32>}]} {
    %c0_i32 = arith.constant 0 : i32
    %0 = arith.cmpi eq, %arg0, %c0_i32 : i32
    %1 = arith.extui %0 : i1 to i32
    %c0_i32_0 = arith.constant 0 : i32
    %2 = arith.cmpi ne, %1, %c0_i32_0 : i32
    scf.if %2 {
      %c0_205 = arith.constant 0 : index
      %c0_206 = arith.constant 0 : index
      %298 = vector.load %arg1[%c0_205, %c0_206] : memref<16x32xf32, #tpu.memory_space<vmem>>, vector<16x32xf32>
      %c0_207 = arith.constant 0 : index
      %c0_208 = arith.constant 0 : index
      %299 = vector.load %arg19[%c0_207, %c0_208] : memref<16x32xf32, #tpu.memory_space<vmem>>, vector<16x32xf32>
      tpu.vector_store %arg19[%c0_207, %c0_208], %298 {strides = array<i32>} : memref<16x32xf32, #tpu.memory_space<vmem>>, vector<16x32xf32>,
    } else {
    }
    %c0 = arith.constant 0 : index
    %c0_1 = arith.constant 0 : index
    %3 = vector.load %arg19[%c0, %c0_1] : memref<16x32xf32, #tpu.memory_space<vmem>>, vector<16x32xf32>
    %c0_2 = arith.constant 0 : index
    %c0_3 = arith.constant 0 : index
    %4 = vector.load %arg2[%c0_2, %c0_3] : memref<16x16xf32, #tpu.memory_space<vmem>>, vector<16x16xf32>
    %c0_4 = arith.constant 0 : index
    %c0_5 = arith.constant 0 : index
    %c0_6 = arith.constant 0 : index
    %5 = vector.load %arg3[%c0_4, %c0_5, %c0_6] : memref<1x1x32xf32, #tpu.memory_space<vmem>>, vector<1x1x32xf32>
    %6 = vector.shape_cast %5 : vector<1x1x32xf32> to vector<1x32xf32>
    %c0_7 = arith.constant 0 : index
    %c0_8 = arith.constant 0 : index
    %c0_9 = arith.constant 0 : index
    %7 = vector.load %arg4[%c0_7, %c0_8, %c0_9] : memref<1x1x32xf32, #tpu.memory_space<vmem>>, vector<1x1x32xf32>
    %8 = vector.shape_cast %7 : vector<1x1x32xf32> to vector<1x32xf32>
    %cst = arith.constant dense<0.000000e+00> : vector<16xf32>
    %9 = vector.multi_reduction <add>, %3, %cst [1] : vector<16x32xf32> to vector<16xf32>
    %10 = vector.shape_cast %9 : vector<16xf32> to vector<16x1xf32>
    %cst_10 = arith.constant 3.200000e+01 : f32
    %11 = vector.broadcast %cst_10 : f32 to vector<16x1xf32>
    %12 = arith.divf %10, %11 : vector<16x1xf32>
    %13 = vector.broadcast %12 : vector<16x1xf32> to vector<16x32xf32>
    %14 = arith.subf %3, %13 : vector<16x32xf32>
    %15 = arith.mulf %14, %14 : vector<16x32xf32>
    %cst_11 = arith.constant dense<0.000000e+00> : vector<16xf32>
    %16 = vector.multi_reduction <add>, %15, %cst_11 [1] : vector<16x32xf32> to vector<16xf32>
    %17 = vector.shape_cast %16 : vector<16xf32> to vector<16x1xf32>
    %cst_12 = arith.constant 3.200000e+01 : f32
    %18 = vector.broadcast %cst_12 : f32 to vector<16x1xf32>
    %19 = arith.divf %17, %18 : vector<16x1xf32>
    %cst_13 = arith.constant 9.99999974E-6 : f32
    %20 = vector.broadcast %cst_13 : f32 to vector<16x1xf32>
    %21 = arith.addf %19, %20 : vector<16x1xf32>
    %22 = math.rsqrt %21 : vector<16x1xf32>
    %23 = vector.broadcast %22 : vector<16x1xf32> to vector<16x32xf32>
    %24 = arith.mulf %14, %23 : vector<16x32xf32>
    %25 = vector.broadcast %6 : vector<1x32xf32> to vector<16x32xf32>
    %26 = arith.mulf %24, %25 : vector<16x32xf32>
    %27 = vector.broadcast %8 : vector<1x32xf32> to vector<16x32xf32>
    %28 = arith.addf %26, %27 : vector<16x32xf32>
    %29 = arith.truncf %28 : vector<16x32xf32> to vector<16x32xbf16>
    %cst_14 = arith.constant 0.000000e+00 : f32
    %30 = vector.broadcast %cst_14 : f32 to vector<16x32xf32>
    %c0_15 = arith.constant 0 : index
    %c0_16 = arith.constant 0 : index
    %c0_17 = arith.constant 0 : index
    %c0_18 = arith.constant 0 : index
    %31 = vector.load %arg5[%c0_15, %c0_16, %c0_17, %c0_18] : memref<1x4x32x8xbf16, #tpu.memory_space<vmem>>, vector<1x1x32x8xbf16>
    %32 = vector.shape_cast %31 : vector<1x1x32x8xbf16> to vector<32x8xbf16>
    %cst_19 = arith.constant dense<0.000000e+00> : vector<16x8xf32>
    %33 = tpu.matmul %29, %32, %cst_19 {dimension_numbers = #tpu.dot_dimension_numbers<[1], [0], [0], [1], [0, 0, 1, 1], [], []>} : vector<16x32xbf16>, vector<32x8xbf16>, vector<16x8xf32> -> vector<16x8xf32>
    %c0_20 = arith.constant 0 : index
    %c0_21 = arith.constant 0 : index
    %c0_22 = arith.constant 0 : index
    %c0_23 = arith.constant 0 : index
    %34 = vector.load %arg8[%c0_20, %c0_21, %c0_22, %c0_23] : memref<1x4x1x8xf32, #tpu.memory_space<vmem>>, vector<1x1x1x8xf32>
    %35 = vector.shape_cast %34 : vector<1x1x1x8xf32> to vector<1x8xf32>
    %36 = vector.broadcast %35 : vector<1x8xf32> to vector<16x8xf32>
    %37 = arith.addf %33, %36 : vector<16x8xf32>
    %c0_24 = arith.constant 0 : index
    %c0_25 = arith.constant 0 : index
    %c0_26 = arith.constant 0 : index
    %c0_27 = arith.constant 0 : index
    %38 = vector.load %arg6[%c0_24, %c0_25, %c0_26, %c0_27] : memref<1x4x32x8xbf16, #tpu.memory_space<vmem>>, vector<1x1x32x8xbf16>
    %39 = vector.shape_cast %38 : vector<1x1x32x8xbf16> to vector<32x8xbf16>
    %cst_28 = arith.constant dense<0.000000e+00> : vector<16x8xf32>
    %40 = tpu.matmul %29, %39, %cst_28 {dimension_numbers = #tpu.dot_dimension_numbers<[1], [0], [0], [1], [0, 0, 1, 1], [], []>} : vector<16x32xbf16>, vector<32x8xbf16>, vector<16x8xf32> -> vector<16x8xf32>
    %c0_29 = arith.constant 0 : index
    %c0_30 = arith.constant 0 : index
    %c0_31 = arith.constant 0 : index
    %c0_32 = arith.constant 0 : index
    %41 = vector.load %arg9[%c0_29, %c0_30, %c0_31, %c0_32] : memref<1x4x1x8xf32, #tpu.memory_space<vmem>>, vector<1x1x1x8xf32>
    %42 = vector.shape_cast %41 : vector<1x1x1x8xf32> to vector<1x8xf32>
    %43 = vector.broadcast %42 : vector<1x8xf32> to vector<16x8xf32>
    %44 = arith.addf %40, %43 : vector<16x8xf32>
    %c0_33 = arith.constant 0 : index
    %c0_34 = arith.constant 0 : index
    %c0_35 = arith.constant 0 : index
    %c0_36 = arith.constant 0 : index
    %45 = vector.load %arg7[%c0_33, %c0_34, %c0_35, %c0_36] : memref<1x4x32x8xbf16, #tpu.memory_space<vmem>>, vector<1x1x32x8xbf16>
    %46 = vector.shape_cast %45 : vector<1x1x32x8xbf16> to vector<32x8xbf16>
    %cst_37 = arith.constant dense<0.000000e+00> : vector<16x8xf32>
    %47 = tpu.matmul %29, %46, %cst_37 {dimension_numbers = #tpu.dot_dimension_numbers<[1], [0], [0], [1], [0, 0, 1, 1], [], []>} : vector<16x32xbf16>, vector<32x8xbf16>, vector<16x8xf32> -> vector<16x8xf32>
    %c0_38 = arith.constant 0 : index
    %c0_39 = arith.constant 0 : index
    %c0_40 = arith.constant 0 : index
    %c0_41 = arith.constant 0 : index
    %48 = vector.load %arg10[%c0_38, %c0_39, %c0_40, %c0_41] : memref<1x4x1x8xf32, #tpu.memory_space<vmem>>, vector<1x1x1x8xf32>
    %49 = vector.shape_cast %48 : vector<1x1x1x8xf32> to vector<1x8xf32>
    %50 = vector.broadcast %49 : vector<1x8xf32> to vector<16x8xf32>
    %51 = arith.addf %47, %50 : vector<16x8xf32>
    %cst_42 = arith.constant 0.353553385 : f32
    %52 = vector.broadcast %cst_42 : f32 to vector<16x8xf32>
    %53 = arith.mulf %37, %52 : vector<16x8xf32>
    %54 = arith.truncf %53 : vector<16x8xf32> to vector<16x8xbf16>
    %55 = arith.truncf %44 : vector<16x8xf32> to vector<16x8xbf16>
    %cst_43 = arith.constant dense<0.000000e+00> : vector<16x16xf32>
    %56 = tpu.matmul %54, %55, %cst_43 {dimension_numbers = #tpu.dot_dimension_numbers<[1], [1], [0], [0], [0, 0, 1, 0], [], []>} : vector<16x8xbf16>, vector<16x8xbf16>, vector<16x16xf32> -> vector<16x16xf32>
    %57 = arith.addf %56, %4 : vector<16x16xf32>
    %cst_44 = arith.constant dense<0xFF800000> : vector<16xf32>
    %58 = vector.multi_reduction <maximumf>, %57, %cst_44 [1] : vector<16x16xf32> to vector<16xf32>
    %59 = vector.shape_cast %58 : vector<16xf32> to vector<16x1xf32>
    %60 = vector.broadcast %59 : vector<16x1xf32> to vector<16x16xf32>
    %61 = arith.subf %57, %60 : vector<16x16xf32>
    %62 = math.exp %61 : vector<16x16xf32>
    %cst_45 = arith.constant dense<0.000000e+00> : vector<16xf32>
    %63 = vector.multi_reduction <add>, %62, %cst_45 [1] : vector<16x16xf32> to vector<16xf32>
    %64 = vector.shape_cast %63 : vector<16xf32> to vector<16x1xf32>
    %65 = tpu.reciprocal %64 {approx = true} : vector<16x1xf32> -> vector<16x1xf32>
    %66 = vector.broadcast %65 : vector<16x1xf32> to vector<16x16xf32>
    %67 = arith.mulf %62, %66 : vector<16x16xf32>
    %68 = arith.truncf %67 : vector<16x16xf32> to vector<16x16xbf16>
    %69 = arith.truncf %51 : vector<16x8xf32> to vector<16x8xbf16>
    %cst_46 = arith.constant dense<0.000000e+00> : vector<16x8xf32>
    %70 = tpu.matmul %68, %69, %cst_46 {dimension_numbers = #tpu.dot_dimension_numbers<[1], [0], [0], [1], [0, 0, 1, 1], [], []>} : vector<16x16xbf16>, vector<16x8xbf16>, vector<16x8xf32> -> vector<16x8xf32>
    %71 = arith.truncf %70 : vector<16x8xf32> to vector<16x8xbf16>
    %c0_47 = arith.constant 0 : index
    %c0_48 = arith.constant 0 : index
    %c0_49 = arith.constant 0 : index
    %c0_50 = arith.constant 0 : index
    %72 = vector.load %arg11[%c0_47, %c0_48, %c0_49, %c0_50] : memref<1x4x8x32xbf16, #tpu.memory_space<vmem>>, vector<1x1x8x32xbf16>
    %73 = vector.shape_cast %72 : vector<1x1x8x32xbf16> to vector<8x32xbf16>
    %cst_51 = arith.constant dense<0.000000e+00> : vector<16x32xf32>
    %74 = tpu.matmul %71, %73, %cst_51 {dimension_numbers = #tpu.dot_dimension_numbers<[1], [0], [0], [1], [0, 0, 1, 1], [], []>} : vector<16x8xbf16>, vector<8x32xbf16>, vector<16x32xf32> -> vector<16x32xf32>
    %75 = arith.addf %30, %74 : vector<16x32xf32>
    %c0_52 = arith.constant 0 : index
    %c1 = arith.constant 1 : index
    %c0_53 = arith.constant 0 : index
    %c0_54 = arith.constant 0 : index
    %76 = vector.load %arg5[%c0_52, %c1, %c0_53, %c0_54] : memref<1x4x32x8xbf16, #tpu.memory_space<vmem>>, vector<1x1x32x8xbf16>
    %77 = vector.shape_cast %76 : vector<1x1x32x8xbf16> to vector<32x8xbf16>
    %cst_55 = arith.constant dense<0.000000e+00> : vector<16x8xf32>
    %78 = tpu.matmul %29, %77, %cst_55 {dimension_numbers = #tpu.dot_dimension_numbers<[1], [0], [0], [1], [0, 0, 1, 1], [], []>} : vector<16x32xbf16>, vector<32x8xbf16>, vector<16x8xf32> -> vector<16x8xf32>
    %c0_56 = arith.constant 0 : index
    %c1_57 = arith.constant 1 : index
    %c0_58 = arith.constant 0 : index
    %c0_59 = arith.constant 0 : index
    %79 = vector.load %arg8[%c0_56, %c1_57, %c0_58, %c0_59] : memref<1x4x1x8xf32, #tpu.memory_space<vmem>>, vector<1x1x1x8xf32>
    %80 = vector.shape_cast %79 : vector<1x1x1x8xf32> to vector<1x8xf32>
    %81 = vector.broadcast %80 : vector<1x8xf32> to vector<16x8xf32>
    %82 = arith.addf %78, %81 : vector<16x8xf32>
    %c0_60 = arith.constant 0 : index
    %c1_61 = arith.constant 1 : index
    %c0_62 = arith.constant 0 : index
    %c0_63 = arith.constant 0 : index
    %83 = vector.load %arg6[%c0_60, %c1_61, %c0_62, %c0_63] : memref<1x4x32x8xbf16, #tpu.memory_space<vmem>>, vector<1x1x32x8xbf16>
    %84 = vector.shape_cast %83 : vector<1x1x32x8xbf16> to vector<32x8xbf16>
    %cst_64 = arith.constant dense<0.000000e+00> : vector<16x8xf32>
    %85 = tpu.matmul %29, %84, %cst_64 {dimension_numbers = #tpu.dot_dimension_numbers<[1], [0], [0], [1], [0, 0, 1, 1], [], []>} : vector<16x32xbf16>, vector<32x8xbf16>, vector<16x8xf32> -> vector<16x8xf32>
    %c0_65 = arith.constant 0 : index
    %c1_66 = arith.constant 1 : index
    %c0_67 = arith.constant 0 : index
    %c0_68 = arith.constant 0 : index
    %86 = vector.load %arg9[%c0_65, %c1_66, %c0_67, %c0_68] : memref<1x4x1x8xf32, #tpu.memory_space<vmem>>, vector<1x1x1x8xf32>
    %87 = vector.shape_cast %86 : vector<1x1x1x8xf32> to vector<1x8xf32>
    %88 = vector.broadcast %87 : vector<1x8xf32> to vector<16x8xf32>
    %89 = arith.addf %85, %88 : vector<16x8xf32>
    %c0_69 = arith.constant 0 : index
    %c1_70 = arith.constant 1 : index
    %c0_71 = arith.constant 0 : index
    %c0_72 = arith.constant 0 : index
    %90 = vector.load %arg7[%c0_69, %c1_70, %c0_71, %c0_72] : memref<1x4x32x8xbf16, #tpu.memory_space<vmem>>, vector<1x1x32x8xbf16>
    %91 = vector.shape_cast %90 : vector<1x1x32x8xbf16> to vector<32x8xbf16>
    %cst_73 = arith.constant dense<0.000000e+00> : vector<16x8xf32>
    %92 = tpu.matmul %29, %91, %cst_73 {dimension_numbers = #tpu.dot_dimension_numbers<[1], [0], [0], [1], [0, 0, 1, 1], [], []>} : vector<16x32xbf16>, vector<32x8xbf16>, vector<16x8xf32> -> vector<16x8xf32>
    %c0_74 = arith.constant 0 : index
    %c1_75 = arith.constant 1 : index
    %c0_76 = arith.constant 0 : index
    %c0_77 = arith.constant 0 : index
    %93 = vector.load %arg10[%c0_74, %c1_75, %c0_76, %c0_77] : memref<1x4x1x8xf32, #tpu.memory_space<vmem>>, vector<1x1x1x8xf32>
    %94 = vector.shape_cast %93 : vector<1x1x1x8xf32> to vector<1x8xf32>
    %95 = vector.broadcast %94 : vector<1x8xf32> to vector<16x8xf32>
    %96 = arith.addf %92, %95 : vector<16x8xf32>
    %cst_78 = arith.constant 0.353553385 : f32
    %97 = vector.broadcast %cst_78 : f32 to vector<16x8xf32>
    %98 = arith.mulf %82, %97 : vector<16x8xf32>
    %99 = arith.truncf %98 : vector<16x8xf32> to vector<16x8xbf16>
    %100 = arith.truncf %89 : vector<16x8xf32> to vector<16x8xbf16>
    %cst_79 = arith.constant dense<0.000000e+00> : vector<16x16xf32>
    %101 = tpu.matmul %99, %100, %cst_79 {dimension_numbers = #tpu.dot_dimension_numbers<[1], [1], [0], [0], [0, 0, 1, 0], [], []>} : vector<16x8xbf16>, vector<16x8xbf16>, vector<16x16xf32> -> vector<16x16xf32>
    %102 = arith.addf %101, %4 : vector<16x16xf32>
    %cst_80 = arith.constant dense<0xFF800000> : vector<16xf32>
    %103 = vector.multi_reduction <maximumf>, %102, %cst_80 [1] : vector<16x16xf32> to vector<16xf32>
    %104 = vector.shape_cast %103 : vector<16xf32> to vector<16x1xf32>
    %105 = vector.broadcast %104 : vector<16x1xf32> to vector<16x16xf32>
    %106 = arith.subf %102, %105 : vector<16x16xf32>
    %107 = math.exp %106 : vector<16x16xf32>
    %cst_81 = arith.constant dense<0.000000e+00> : vector<16xf32>
    %108 = vector.multi_reduction <add>, %107, %cst_81 [1] : vector<16x16xf32> to vector<16xf32>
    %109 = vector.shape_cast %108 : vector<16xf32> to vector<16x1xf32>
    %110 = tpu.reciprocal %109 {approx = true} : vector<16x1xf32> -> vector<16x1xf32>
    %111 = vector.broadcast %110 : vector<16x1xf32> to vector<16x16xf32>
    %112 = arith.mulf %107, %111 : vector<16x16xf32>
    %113 = arith.truncf %112 : vector<16x16xf32> to vector<16x16xbf16>
    %114 = arith.truncf %96 : vector<16x8xf32> to vector<16x8xbf16>
    %cst_82 = arith.constant dense<0.000000e+00> : vector<16x8xf32>
    %115 = tpu.matmul %113, %114, %cst_82 {dimension_numbers = #tpu.dot_dimension_numbers<[1], [0], [0], [1], [0, 0, 1, 1], [], []>} : vector<16x16xbf16>, vector<16x8xbf16>, vector<16x8xf32> -> vector<16x8xf32>
    %116 = arith.truncf %115 : vector<16x8xf32> to vector<16x8xbf16>
    %c0_83 = arith.constant 0 : index
    %c1_84 = arith.constant 1 : index
    %c0_85 = arith.constant 0 : index
    %c0_86 = arith.constant 0 : index
    %117 = vector.load %arg11[%c0_83, %c1_84, %c0_85, %c0_86] : memref<1x4x8x32xbf16, #tpu.memory_space<vmem>>, vector<1x1x8x32xbf16>
    %118 = vector.shape_cast %117 : vector<1x1x8x32xbf16> to vector<8x32xbf16>
    %cst_87 = arith.constant dense<0.000000e+00> : vector<16x32xf32>
    %119 = tpu.matmul %116, %118, %cst_87 {dimension_numbers = #tpu.dot_dimension_numbers<[1], [0], [0], [1], [0, 0, 1, 1], [], []>} : vector<16x8xbf16>, vector<8x32xbf16>, vector<16x32xf32> -> vector<16x32xf32>
    %120 = arith.addf %75, %119 : vector<16x32xf32>
    %c0_88 = arith.constant 0 : index
    %c2 = arith.constant 2 : index
    %c0_89 = arith.constant 0 : index
    %c0_90 = arith.constant 0 : index
    %121 = vector.load %arg5[%c0_88, %c2, %c0_89, %c0_90] : memref<1x4x32x8xbf16, #tpu.memory_space<vmem>>, vector<1x1x32x8xbf16>
    %122 = vector.shape_cast %121 : vector<1x1x32x8xbf16> to vector<32x8xbf16>
    %cst_91 = arith.constant dense<0.000000e+00> : vector<16x8xf32>
    %123 = tpu.matmul %29, %122, %cst_91 {dimension_numbers = #tpu.dot_dimension_numbers<[1], [0], [0], [1], [0, 0, 1, 1], [], []>} : vector<16x32xbf16>, vector<32x8xbf16>, vector<16x8xf32> -> vector<16x8xf32>
    %c0_92 = arith.constant 0 : index
    %c2_93 = arith.constant 2 : index
    %c0_94 = arith.constant 0 : index
    %c0_95 = arith.constant 0 : index
    %124 = vector.load %arg8[%c0_92, %c2_93, %c0_94, %c0_95] : memref<1x4x1x8xf32, #tpu.memory_space<vmem>>, vector<1x1x1x8xf32>
    %125 = vector.shape_cast %124 : vector<1x1x1x8xf32> to vector<1x8xf32>
    %126 = vector.broadcast %125 : vector<1x8xf32> to vector<16x8xf32>
    %127 = arith.addf %123, %126 : vector<16x8xf32>
    %c0_96 = arith.constant 0 : index
    %c2_97 = arith.constant 2 : index
    %c0_98 = arith.constant 0 : index
    %c0_99 = arith.constant 0 : index
    %128 = vector.load %arg6[%c0_96, %c2_97, %c0_98, %c0_99] : memref<1x4x32x8xbf16, #tpu.memory_space<vmem>>, vector<1x1x32x8xbf16>
    %129 = vector.shape_cast %128 : vector<1x1x32x8xbf16> to vector<32x8xbf16>
    %cst_100 = arith.constant dense<0.000000e+00> : vector<16x8xf32>
    %130 = tpu.matmul %29, %129, %cst_100 {dimension_numbers = #tpu.dot_dimension_numbers<[1], [0], [0], [1], [0, 0, 1, 1], [], []>} : vector<16x32xbf16>, vector<32x8xbf16>, vector<16x8xf32> -> vector<16x8xf32>
    %c0_101 = arith.constant 0 : index
    %c2_102 = arith.constant 2 : index
    %c0_103 = arith.constant 0 : index
    %c0_104 = arith.constant 0 : index
    %131 = vector.load %arg9[%c0_101, %c2_102, %c0_103, %c0_104] : memref<1x4x1x8xf32, #tpu.memory_space<vmem>>, vector<1x1x1x8xf32>
    %132 = vector.shape_cast %131 : vector<1x1x1x8xf32> to vector<1x8xf32>
    %133 = vector.broadcast %132 : vector<1x8xf32> to vector<16x8xf32>
    %134 = arith.addf %130, %133 : vector<16x8xf32>
    %c0_105 = arith.constant 0 : index
    %c2_106 = arith.constant 2 : index
    %c0_107 = arith.constant 0 : index
    %c0_108 = arith.constant 0 : index
    %135 = vector.load %arg7[%c0_105, %c2_106, %c0_107, %c0_108] : memref<1x4x32x8xbf16, #tpu.memory_space<vmem>>, vector<1x1x32x8xbf16>
    %136 = vector.shape_cast %135 : vector<1x1x32x8xbf16> to vector<32x8xbf16>
    %cst_109 = arith.constant dense<0.000000e+00> : vector<16x8xf32>
    %137 = tpu.matmul %29, %136, %cst_109 {dimension_numbers = #tpu.dot_dimension_numbers<[1], [0], [0], [1], [0, 0, 1, 1], [], []>} : vector<16x32xbf16>, vector<32x8xbf16>, vector<16x8xf32> -> vector<16x8xf32>
    %c0_110 = arith.constant 0 : index
    %c2_111 = arith.constant 2 : index
    %c0_112 = arith.constant 0 : index
    %c0_113 = arith.constant 0 : index
    %138 = vector.load %arg10[%c0_110, %c2_111, %c0_112, %c0_113] : memref<1x4x1x8xf32, #tpu.memory_space<vmem>>, vector<1x1x1x8xf32>
    %139 = vector.shape_cast %138 : vector<1x1x1x8xf32> to vector<1x8xf32>
    %140 = vector.broadcast %139 : vector<1x8xf32> to vector<16x8xf32>
    %141 = arith.addf %137, %140 : vector<16x8xf32>
    %cst_114 = arith.constant 0.353553385 : f32
    %142 = vector.broadcast %cst_114 : f32 to vector<16x8xf32>
    %143 = arith.mulf %127, %142 : vector<16x8xf32>
    %144 = arith.truncf %143 : vector<16x8xf32> to vector<16x8xbf16>
    %145 = arith.truncf %134 : vector<16x8xf32> to vector<16x8xbf16>
    %cst_115 = arith.constant dense<0.000000e+00> : vector<16x16xf32>
    %146 = tpu.matmul %144, %145, %cst_115 {dimension_numbers = #tpu.dot_dimension_numbers<[1], [1], [0], [0], [0, 0, 1, 0], [], []>} : vector<16x8xbf16>, vector<16x8xbf16>, vector<16x16xf32> -> vector<16x16xf32>
    %147 = arith.addf %146, %4 : vector<16x16xf32>
    %cst_116 = arith.constant dense<0xFF800000> : vector<16xf32>
    %148 = vector.multi_reduction <maximumf>, %147, %cst_116 [1] : vector<16x16xf32> to vector<16xf32>
    %149 = vector.shape_cast %148 : vector<16xf32> to vector<16x1xf32>
    %150 = vector.broadcast %149 : vector<16x1xf32> to vector<16x16xf32>
    %151 = arith.subf %147, %150 : vector<16x16xf32>
    %152 = math.exp %151 : vector<16x16xf32>
    %cst_117 = arith.constant dense<0.000000e+00> : vector<16xf32>
    %153 = vector.multi_reduction <add>, %152, %cst_117 [1] : vector<16x16xf32> to vector<16xf32>
    %154 = vector.shape_cast %153 : vector<16xf32> to vector<16x1xf32>
    %155 = tpu.reciprocal %154 {approx = true} : vector<16x1xf32> -> vector<16x1xf32>
    %156 = vector.broadcast %155 : vector<16x1xf32> to vector<16x16xf32>
    %157 = arith.mulf %152, %156 : vector<16x16xf32>
    %158 = arith.truncf %157 : vector<16x16xf32> to vector<16x16xbf16>
    %159 = arith.truncf %141 : vector<16x8xf32> to vector<16x8xbf16>
    %cst_118 = arith.constant dense<0.000000e+00> : vector<16x8xf32>
    %160 = tpu.matmul %158, %159, %cst_118 {dimension_numbers = #tpu.dot_dimension_numbers<[1], [0], [0], [1], [0, 0, 1, 1], [], []>} : vector<16x16xbf16>, vector<16x8xbf16>, vector<16x8xf32> -> vector<16x8xf32>
    %161 = arith.truncf %160 : vector<16x8xf32> to vector<16x8xbf16>
    %c0_119 = arith.constant 0 : index
    %c2_120 = arith.constant 2 : index
    %c0_121 = arith.constant 0 : index
    %c0_122 = arith.constant 0 : index
    %162 = vector.load %arg11[%c0_119, %c2_120, %c0_121, %c0_122] : memref<1x4x8x32xbf16, #tpu.memory_space<vmem>>, vector<1x1x8x32xbf16>
    %163 = vector.shape_cast %162 : vector<1x1x8x32xbf16> to vector<8x32xbf16>
    %cst_123 = arith.constant dense<0.000000e+00> : vector<16x32xf32>
    %164 = tpu.matmul %161, %163, %cst_123 {dimension_numbers = #tpu.dot_dimension_numbers<[1], [0], [0], [1], [0, 0, 1, 1], [], []>} : vector<16x8xbf16>, vector<8x32xbf16>, vector<16x32xf32> -> vector<16x32xf32>
    %165 = arith.addf %120, %164 : vector<16x32xf32>
    %c0_124 = arith.constant 0 : index
    %c3 = arith.constant 3 : index
    %c0_125 = arith.constant 0 : index
    %c0_126 = arith.constant 0 : index
    %166 = vector.load %arg5[%c0_124, %c3, %c0_125, %c0_126] : memref<1x4x32x8xbf16, #tpu.memory_space<vmem>>, vector<1x1x32x8xbf16>
    %167 = vector.shape_cast %166 : vector<1x1x32x8xbf16> to vector<32x8xbf16>
    %cst_127 = arith.constant dense<0.000000e+00> : vector<16x8xf32>
    %168 = tpu.matmul %29, %167, %cst_127 {dimension_numbers = #tpu.dot_dimension_numbers<[1], [0], [0], [1], [0, 0, 1, 1], [], []>} : vector<16x32xbf16>, vector<32x8xbf16>, vector<16x8xf32> -> vector<16x8xf32>
    %c0_128 = arith.constant 0 : index
    %c3_129 = arith.constant 3 : index
    %c0_130 = arith.constant 0 : index
    %c0_131 = arith.constant 0 : index
    %169 = vector.load %arg8[%c0_128, %c3_129, %c0_130, %c0_131] : memref<1x4x1x8xf32, #tpu.memory_space<vmem>>, vector<1x1x1x8xf32>
    %170 = vector.shape_cast %169 : vector<1x1x1x8xf32> to vector<1x8xf32>
    %171 = vector.broadcast %170 : vector<1x8xf32> to vector<16x8xf32>
    %172 = arith.addf %168, %171 : vector<16x8xf32>
    %c0_132 = arith.constant 0 : index
    %c3_133 = arith.constant 3 : index
    %c0_134 = arith.constant 0 : index
    %c0_135 = arith.constant 0 : index
    %173 = vector.load %arg6[%c0_132, %c3_133, %c0_134, %c0_135] : memref<1x4x32x8xbf16, #tpu.memory_space<vmem>>, vector<1x1x32x8xbf16>
    %174 = vector.shape_cast %173 : vector<1x1x32x8xbf16> to vector<32x8xbf16>
    %cst_136 = arith.constant dense<0.000000e+00> : vector<16x8xf32>
    %175 = tpu.matmul %29, %174, %cst_136 {dimension_numbers = #tpu.dot_dimension_numbers<[1], [0], [0], [1], [0, 0, 1, 1], [], []>} : vector<16x32xbf16>, vector<32x8xbf16>, vector<16x8xf32> -> vector<16x8xf32>
    %c0_137 = arith.constant 0 : index
    %c3_138 = arith.constant 3 : index
    %c0_139 = arith.constant 0 : index
    %c0_140 = arith.constant 0 : index
    %176 = vector.load %arg9[%c0_137, %c3_138, %c0_139, %c0_140] : memref<1x4x1x8xf32, #tpu.memory_space<vmem>>, vector<1x1x1x8xf32>
    %177 = vector.shape_cast %176 : vector<1x1x1x8xf32> to vector<1x8xf32>
    %178 = vector.broadcast %177 : vector<1x8xf32> to vector<16x8xf32>
    %179 = arith.addf %175, %178 : vector<16x8xf32>
    %c0_141 = arith.constant 0 : index
    %c3_142 = arith.constant 3 : index
    %c0_143 = arith.constant 0 : index
    %c0_144 = arith.constant 0 : index
    %180 = vector.load %arg7[%c0_141, %c3_142, %c0_143, %c0_144] : memref<1x4x32x8xbf16, #tpu.memory_space<vmem>>, vector<1x1x32x8xbf16>
    %181 = vector.shape_cast %180 : vector<1x1x32x8xbf16> to vector<32x8xbf16>
    %cst_145 = arith.constant dense<0.000000e+00> : vector<16x8xf32>
    %182 = tpu.matmul %29, %181, %cst_145 {dimension_numbers = #tpu.dot_dimension_numbers<[1], [0], [0], [1], [0, 0, 1, 1], [], []>} : vector<16x32xbf16>, vector<32x8xbf16>, vector<16x8xf32> -> vector<16x8xf32>
    %c0_146 = arith.constant 0 : index
    %c3_147 = arith.constant 3 : index
    %c0_148 = arith.constant 0 : index
    %c0_149 = arith.constant 0 : index
    %183 = vector.load %arg10[%c0_146, %c3_147, %c0_148, %c0_149] : memref<1x4x1x8xf32, #tpu.memory_space<vmem>>, vector<1x1x1x8xf32>
    %184 = vector.shape_cast %183 : vector<1x1x1x8xf32> to vector<1x8xf32>
    %185 = vector.broadcast %184 : vector<1x8xf32> to vector<16x8xf32>
    %186 = arith.addf %182, %185 : vector<16x8xf32>
    %cst_150 = arith.constant 0.353553385 : f32
    %187 = vector.broadcast %cst_150 : f32 to vector<16x8xf32>
    %188 = arith.mulf %172, %187 : vector<16x8xf32>
    %189 = arith.truncf %188 : vector<16x8xf32> to vector<16x8xbf16>
    %190 = arith.truncf %179 : vector<16x8xf32> to vector<16x8xbf16>
    %cst_151 = arith.constant dense<0.000000e+00> : vector<16x16xf32>
    %191 = tpu.matmul %189, %190, %cst_151 {dimension_numbers = #tpu.dot_dimension_numbers<[1], [1], [0], [0], [0, 0, 1, 0], [], []>} : vector<16x8xbf16>, vector<16x8xbf16>, vector<16x16xf32> -> vector<16x16xf32>
    %192 = arith.addf %191, %4 : vector<16x16xf32>
    %cst_152 = arith.constant dense<0xFF800000> : vector<16xf32>
    %193 = vector.multi_reduction <maximumf>, %192, %cst_152 [1] : vector<16x16xf32> to vector<16xf32>
    %194 = vector.shape_cast %193 : vector<16xf32> to vector<16x1xf32>
    %195 = vector.broadcast %194 : vector<16x1xf32> to vector<16x16xf32>
    %196 = arith.subf %192, %195 : vector<16x16xf32>
    %197 = math.exp %196 : vector<16x16xf32>
    %cst_153 = arith.constant dense<0.000000e+00> : vector<16xf32>
    %198 = vector.multi_reduction <add>, %197, %cst_153 [1] : vector<16x16xf32> to vector<16xf32>
    %199 = vector.shape_cast %198 : vector<16xf32> to vector<16x1xf32>
    %200 = tpu.reciprocal %199 {approx = true} : vector<16x1xf32> -> vector<16x1xf32>
    %201 = vector.broadcast %200 : vector<16x1xf32> to vector<16x16xf32>
    %202 = arith.mulf %197, %201 : vector<16x16xf32>
    %203 = arith.truncf %202 : vector<16x16xf32> to vector<16x16xbf16>
    %204 = arith.truncf %186 : vector<16x8xf32> to vector<16x8xbf16>
    %cst_154 = arith.constant dense<0.000000e+00> : vector<16x8xf32>
    %205 = tpu.matmul %203, %204, %cst_154 {dimension_numbers = #tpu.dot_dimension_numbers<[1], [0], [0], [1], [0, 0, 1, 1], [], []>} : vector<16x16xbf16>, vector<16x8xbf16>, vector<16x8xf32> -> vector<16x8xf32>
    %206 = arith.truncf %205 : vector<16x8xf32> to vector<16x8xbf16>
    %c0_155 = arith.constant 0 : index
    %c3_156 = arith.constant 3 : index
    %c0_157 = arith.constant 0 : index
    %c0_158 = arith.constant 0 : index
    %207 = vector.load %arg11[%c0_155, %c3_156, %c0_157, %c0_158] : memref<1x4x8x32xbf16, #tpu.memory_space<vmem>>, vector<1x1x8x32xbf16>
    %208 = vector.shape_cast %207 : vector<1x1x8x32xbf16> to vector<8x32xbf16>
    %cst_159 = arith.constant dense<0.000000e+00> : vector<16x32xf32>
    %209 = tpu.matmul %206, %208, %cst_159 {dimension_numbers = #tpu.dot_dimension_numbers<[1], [0], [0], [1], [0, 0, 1, 1], [], []>} : vector<16x8xbf16>, vector<8x32xbf16>, vector<16x32xf32> -> vector<16x32xf32>
    %210 = arith.addf %165, %209 : vector<16x32xf32>
    %211 = arith.addf %3, %210 : vector<16x32xf32>
    %c0_160 = arith.constant 0 : index
    %c0_161 = arith.constant 0 : index
    %c0_162 = arith.constant 0 : index
    %212 = vector.load %arg12[%c0_160, %c0_161, %c0_162] : memref<1x1x32xf32, #tpu.memory_space<vmem>>, vector<1x1x32xf32>
    %213 = vector.shape_cast %212 : vector<1x1x32xf32> to vector<1x32xf32>
    %214 = vector.broadcast %213 : vector<1x32xf32> to vector<16x32xf32>
    %215 = arith.addf %211, %214 : vector<16x32xf32>
    %c0_163 = arith.constant 0 : index
    %c0_164 = arith.constant 0 : index
    %c0_165 = arith.constant 0 : index
    %216 = vector.load %arg13[%c0_163, %c0_164, %c0_165] : memref<1x1x32xf32, #tpu.memory_space<vmem>>, vector<1x1x32xf32>
    %217 = vector.shape_cast %216 : vector<1x1x32xf32> to vector<1x32xf32>
    %c0_166 = arith.constant 0 : index
    %c0_167 = arith.constant 0 : index
    %c0_168 = arith.constant 0 : index
    %218 = vector.load %arg14[%c0_166, %c0_167, %c0_168] : memref<1x1x32xf32, #tpu.memory_space<vmem>>, vector<1x1x32xf32>
    %219 = vector.shape_cast %218 : vector<1x1x32xf32> to vector<1x32xf32>
    %cst_169 = arith.constant dense<0.000000e+00> : vector<16xf32>
    %220 = vector.multi_reduction <add>, %215, %cst_169 [1] : vector<16x32xf32> to vector<16xf32>
    %221 = vector.shape_cast %220 : vector<16xf32> to vector<16x1xf32>
    %cst_170 = arith.constant 3.200000e+01 : f32
    %222 = vector.broadcast %cst_170 : f32 to vector<16x1xf32>
    %223 = arith.divf %221, %222 : vector<16x1xf32>
    %224 = vector.broadcast %223 : vector<16x1xf32> to vector<16x32xf32>
    %225 = arith.subf %215, %224 : vector<16x32xf32>
    %226 = arith.mulf %225, %225 : vector<16x32xf32>
    %cst_171 = arith.constant dense<0.000000e+00> : vector<16xf32>
    %227 = vector.multi_reduction <add>, %226, %cst_171 [1] : vector<16x32xf32> to vector<16xf32>
    %228 = vector.shape_cast %227 : vector<16xf32> to vector<16x1xf32>
    %cst_172 = arith.constant 3.200000e+01 : f32
    %229 = vector.broadcast %cst_172 : f32 to vector<16x1xf32>
    %230 = arith.divf %228, %229 : vector<16x1xf32>
    %cst_173 = arith.constant 9.99999974E-6 : f32
    %231 = vector.broadcast %cst_173 : f32 to vector<16x1xf32>
    %232 = arith.addf %230, %231 : vector<16x1xf32>
    %233 = math.rsqrt %232 : vector<16x1xf32>
    %234 = vector.broadcast %233 : vector<16x1xf32> to vector<16x32xf32>
    %235 = arith.mulf %225, %234 : vector<16x32xf32>
    %236 = vector.broadcast %217 : vector<1x32xf32> to vector<16x32xf32>
    %237 = arith.mulf %235, %236 : vector<16x32xf32>
    %238 = vector.broadcast %219 : vector<1x32xf32> to vector<16x32xf32>
    %239 = arith.addf %237, %238 : vector<16x32xf32>
    %240 = arith.truncf %239 : vector<16x32xf32> to vector<16x32xbf16>
    %c0_174 = arith.constant 0 : index
    %c0_175 = arith.constant 0 : index
    %c0_176 = arith.constant 0 : index
    %241 = vector.load %arg15[%c0_174, %c0_175, %c0_176] : memref<1x32x64xbf16, #tpu.memory_space<vmem>>, vector<1x32x64xbf16>
    %242 = vector.shape_cast %241 : vector<1x32x64xbf16> to vector<32x64xbf16>
    %cst_177 = arith.constant dense<0.000000e+00> : vector<16x64xf32>
    %243 = tpu.matmul %240, %242, %cst_177 {dimension_numbers = #tpu.dot_dimension_numbers<[1], [0], [0], [1], [0, 0, 1, 1], [], []>} : vector<16x32xbf16>, vector<32x64xbf16>, vector<16x64xf32> -> vector<16x64xf32>
    %c0_178 = arith.constant 0 : index
    %c0_179 = arith.constant 0 : index
    %c0_180 = arith.constant 0 : index
    %244 = vector.load %arg16[%c0_178, %c0_179, %c0_180] : memref<1x1x64xf32, #tpu.memory_space<vmem>>, vector<1x1x64xf32>
    %245 = vector.shape_cast %244 : vector<1x1x64xf32> to vector<1x64xf32>
    %246 = vector.broadcast %245 : vector<1x64xf32> to vector<16x64xf32>
    %247 = arith.addf %243, %246 : vector<16x64xf32>
    %cst_181 = arith.constant 5.000000e-01 : f32
    %248 = vector.broadcast %cst_181 : f32 to vector<16x64xf32>
    %249 = arith.mulf %248, %247 : vector<16x64xf32>
    %cst_182 = arith.constant 0.707106769 : f32
    %250 = vector.broadcast %cst_182 : f32 to vector<16x64xf32>
    %251 = arith.mulf %247, %250 : vector<16x64xf32>
    %252 = math.absf %251 : vector<16x64xf32>
    %cst_183 = arith.constant 0.327591091 : f32
    %253 = vector.broadcast %cst_183 : f32 to vector<16x64xf32>
    %254 = arith.mulf %253, %252 : vector<16x64xf32>
    %cst_184 = arith.constant 1.000000e+00 : f32
    %255 = vector.broadcast %cst_184 : f32 to vector<16x64xf32>
    %256 = arith.addf %255, %254 : vector<16x64xf32>
    %cst_185 = arith.constant 1.000000e+00 : f32
    %257 = vector.broadcast %cst_185 : f32 to vector<16x64xf32>
    %258 = arith.divf %257, %256 : vector<16x64xf32>
    %cst_186 = arith.constant 1.06140542 : f32
    %259 = vector.broadcast %cst_186 : f32 to vector<16x64xf32>
    %260 = arith.mulf %259, %258 : vector<16x64xf32>
    %cst_187 = arith.constant -1.45315206 : f32
    %261 = vector.broadcast %cst_187 : f32 to vector<16x64xf32>
    %262 = arith.addf %260, %261 : vector<16x64xf32>
    %263 = arith.mulf %262, %258 : vector<16x64xf32>
    %cst_188 = arith.constant 1.42141378 : f32
    %264 = vector.broadcast %cst_188 : f32 to vector<16x64xf32>
    %265 = arith.addf %263, %264 : vector<16x64xf32>
    %266 = arith.mulf %265, %258 : vector<16x64xf32>
    %cst_189 = arith.constant -0.284496725 : f32
    %267 = vector.broadcast %cst_189 : f32 to vector<16x64xf32>
    %268 = arith.addf %266, %267 : vector<16x64xf32>
    %269 = arith.mulf %268, %258 : vector<16x64xf32>
    %cst_190 = arith.constant 0.254829586 : f32
    %270 = vector.broadcast %cst_190 : f32 to vector<16x64xf32>
    %271 = arith.addf %269, %270 : vector<16x64xf32>
    %272 = arith.mulf %271, %258 : vector<16x64xf32>
    %cst_191 = arith.constant 0.000000e+00 : f32
    %273 = vector.broadcast %cst_191 : f32 to vector<16x64xf32>
    %274 = arith.subf %273, %252 : vector<16x64xf32>
    %275 = arith.mulf %274, %252 : vector<16x64xf32>
    %276 = math.exp %275 : vector<16x64xf32>
    %277 = arith.mulf %272, %276 : vector<16x64xf32>
    %cst_192 = arith.constant 1.000000e+00 : f32
    %278 = vector.broadcast %cst_192 : f32 to vector<16x64xf32>
    %279 = arith.subf %278, %277 : vector<16x64xf32>
    %cst_193 = arith.constant 0.000000e+00 : f32
    %280 = vector.broadcast %cst_193 : f32 to vector<16x64xf32>
    %281 = arith.cmpf olt, %251, %280 : vector<16x64xf32>
    %cst_194 = arith.constant 0.000000e+00 : f32
    %282 = vector.broadcast %cst_194 : f32 to vector<16x64xf32>
    %283 = arith.subf %282, %279 : vector<16x64xf32>
    %284 = arith.select %281, %283, %279 : vector<16x64xi1>, vector<16x64xf32>
    %cst_195 = arith.constant 1.000000e+00 : f32
    %285 = vector.broadcast %cst_195 : f32 to vector<16x64xf32>
    %286 = arith.addf %285, %284 : vector<16x64xf32>
    %287 = arith.mulf %249, %286 : vector<16x64xf32>
    %288 = arith.truncf %287 : vector<16x64xf32> to vector<16x64xbf16>
    %c0_196 = arith.constant 0 : index
    %c0_197 = arith.constant 0 : index
    %c0_198 = arith.constant 0 : index
    %289 = vector.load %arg17[%c0_196, %c0_197, %c0_198] : memref<1x64x32xbf16, #tpu.memory_space<vmem>>, vector<1x64x32xbf16>
    %290 = vector.shape_cast %289 : vector<1x64x32xbf16> to vector<64x32xbf16>
    %cst_199 = arith.constant dense<0.000000e+00> : vector<16x32xf32>
    %291 = tpu.matmul %288, %290, %cst_199 {dimension_numbers = #tpu.dot_dimension_numbers<[1], [0], [0], [1], [0, 0, 1, 1], [], []>} : vector<16x64xbf16>, vector<64x32xbf16>, vector<16x32xf32> -> vector<16x32xf32>
    %c0_200 = arith.constant 0 : index
    %c0_201 = arith.constant 0 : index
    %c0_202 = arith.constant 0 : index
    %292 = vector.load %arg18[%c0_200, %c0_201, %c0_202] : memref<1x1x32xf32, #tpu.memory_space<vmem>>, vector<1x1x32xf32>
    %293 = vector.shape_cast %292 : vector<1x1x32xf32> to vector<1x32xf32>
    %294 = vector.broadcast %293 : vector<1x32xf32> to vector<16x32xf32>
    %295 = arith.addf %291, %294 : vector<16x32xf32>
    %296 = arith.addf %215, %295 : vector<16x32xf32>
    %c0_203 = arith.constant 0 : index
    %c0_204 = arith.constant 0 : index
    %297 = vector.load %arg19[%c0_203, %c0_204] : memref<16x32xf32, #tpu.memory_space<vmem>>, vector<16x32xf32>
    tpu.vector_store %arg19[%c0_203, %c0_204], %296 {strides = array<i32>} : memref<16x32xf32, #tpu.memory_space<vmem>>, vector<16x32xf32>,
    return
  }
  func.func @transform_0(%arg0: i32) -> (i32, i32) {
    %c0_i32 = arith.constant 0 : i32
    %c0_i32_0 = arith.constant 0 : i32
    %c0_i32_1 = arith.constant 0 : i32
    return %c0_i32, %c0_i32_0 : i32, i32
  }
  func.func @transform_1(%arg0: i32) -> (i32, i32) {
    %c0_i32 = arith.constant 0 : i32
    %c0_i32_0 = arith.constant 0 : i32
    %c0_i32_1 = arith.constant 0 : i32
    return %c0_i32, %c0_i32_0 : i32, i32
  }
  func.func @transform_2(%arg0: i32) -> (i32, i32, i32) {
    %c0_i32 = arith.constant 0 : i32
    %c0_i32_0 = arith.constant 0 : i32
    %c0_i32_1 = arith.constant 0 : i32
    return %arg0, %c0_i32, %c0_i32_0 : i32, i32, i32
  }
  func.func @transform_3(%arg0: i32) -> (i32, i32, i32) {
    %c0_i32 = arith.constant 0 : i32
    %c0_i32_0 = arith.constant 0 : i32
    %c0_i32_1 = arith.constant 0 : i32
    return %arg0, %c0_i32, %c0_i32_0 : i32, i32, i32
  }
  func.func @transform_4(%arg0: i32) -> (i32, i32, i32, i32) {
    %c0_i32 = arith.constant 0 : i32
    %c0_i32_0 = arith.constant 0 : i32
    %c0_i32_1 = arith.constant 0 : i32
    %c0_i32_2 = arith.constant 0 : i32
    return %arg0, %c0_i32, %c0_i32_0, %c0_i32_1 : i32, i32, i32, i32
  }
  func.func @transform_5(%arg0: i32) -> (i32, i32, i32, i32) {
    %c0_i32 = arith.constant 0 : i32
    %c0_i32_0 = arith.constant 0 : i32
    %c0_i32_1 = arith.constant 0 : i32
    %c0_i32_2 = arith.constant 0 : i32
    return %arg0, %c0_i32, %c0_i32_0, %c0_i32_1 : i32, i32, i32, i32
  }
  func.func @transform_6(%arg0: i32) -> (i32, i32, i32, i32) {
    %c0_i32 = arith.constant 0 : i32
    %c0_i32_0 = arith.constant 0 : i32
    %c0_i32_1 = arith.constant 0 : i32
    %c0_i32_2 = arith.constant 0 : i32
    return %arg0, %c0_i32, %c0_i32_0, %c0_i32_1 : i32, i32, i32, i32
  }
  func.func @transform_7(%arg0: i32) -> (i32, i32, i32, i32) {
    %c0_i32 = arith.constant 0 : i32
    %c0_i32_0 = arith.constant 0 : i32
    %c0_i32_1 = arith.constant 0 : i32
    %c0_i32_2 = arith.constant 0 : i32
    return %arg0, %c0_i32, %c0_i32_0, %c0_i32_1 : i32, i32, i32, i32
  }
  func.func @transform_8(%arg0: i32) -> (i32, i32, i32, i32) {
    %c0_i32 = arith.constant 0 : i32
    %c0_i32_0 = arith.constant 0 : i32
    %c0_i32_1 = arith.constant 0 : i32
    %c0_i32_2 = arith.constant 0 : i32
    return %arg0, %c0_i32, %c0_i32_0, %c0_i32_1 : i32, i32, i32, i32
  }
  func.func @transform_9(%arg0: i32) -> (i32, i32, i32, i32) {
    %c0_i32 = arith.constant 0 : i32
    %c0_i32_0 = arith.constant 0 : i32
    %c0_i32_1 = arith.constant 0 : i32
    %c0_i32_2 = arith.constant 0 : i32
    return %arg0, %c0_i32, %c0_i32_0, %c0_i32_1 : i32, i32, i32, i32
  }
  func.func @transform_10(%arg0: i32) -> (i32, i32, i32, i32) {
    %c0_i32 = arith.constant 0 : i32
    %c0_i32_0 = arith.constant 0 : i32
    %c0_i32_1 = arith.constant 0 : i32
    %c0_i32_2 = arith.constant 0 : i32
    return %arg0, %c0_i32, %c0_i32_0, %c0_i32_1 : i32, i32, i32, i32
  }
  func.func @transform_11(%arg0: i32) -> (i32, i32, i32) {
    %c0_i32 = arith.constant 0 : i32
    %c0_i32_0 = arith.constant 0 : i32
    %c0_i32_1 = arith.constant 0 : i32
    return %arg0, %c0_i32, %c0_i32_0 : i32, i32, i32
  }
  func.func @transform_12(%arg0: i32) -> (i32, i32, i32) {
    %c0_i32 = arith.constant 0 : i32
    %c0_i32_0 = arith.constant 0 : i32
    %c0_i32_1 = arith.constant 0 : i32
    return %arg0, %c0_i32, %c0_i32_0 : i32, i32, i32
  }
  func.func @transform_13(%arg0: i32) -> (i32, i32, i32) {
    %c0_i32 = arith.constant 0 : i32
    %c0_i32_0 = arith.constant 0 : i32
    %c0_i32_1 = arith.constant 0 : i32
    return %arg0, %c0_i32, %c0_i32_0 : i32, i32, i32
  }
  func.func @transform_14(%arg0: i32) -> (i32, i32, i32) {
    %c0_i32 = arith.constant 0 : i32
    %c0_i32_0 = arith.constant 0 : i32
    %c0_i32_1 = arith.constant 0 : i32
    return %arg0, %c0_i32, %c0_i32_0 : i32, i32, i32
  }
  func.func @transform_15(%arg0: i32) -> (i32, i32, i32) {
    %c0_i32 = arith.constant 0 : i32
    %c0_i32_0 = arith.constant 0 : i32
    %c0_i32_1 = arith.constant 0 : i32
    return %arg0, %c0_i32, %c0_i32_0 : i32, i32, i32
  }
  func.func @transform_16(%arg0: i32) -> (i32, i32, i32) {
    %c0_i32 = arith.constant 0 : i32
    %c0_i32_0 = arith.constant 0 : i32
    %c0_i32_1 = arith.constant 0 : i32
    return %arg0, %c0_i32, %c0_i32_0 : i32, i32, i32
  }
  func.func @transform_17(%arg0: i32) -> (i32, i32, i32) {
    %c0_i32 = arith.constant 0 : i32
    %c0_i32_0 = arith.constant 0 : i32
    %c0_i32_1 = arith.constant 0 : i32
    return %arg0, %c0_i32, %c0_i32_0 : i32, i32, i32
  }
  func.func @transform_18(%arg0: i32) -> (i32, i32) {
    %c0_i32 = arith.constant 0 : i32
    %c0_i32_0 = arith.constant 0 : i32
    %c0_i32_1 = arith.constant 0 : i32
    return %c0_i32, %c0_i32_0 : i32, i32
  }
}

</mosaic_0001>

<llo_original>
// kernel: transformer_encoder_forward.1
$region0: #{transformer_encoder_forward.1}
  #allocation0 [shape = 'u32[]', space=smem, size = 0x4, offset = 0x4, fixed_abs, tag = 'smem constant byte address 0x4 - core index']
  #allocation1 [shape = 'u32[144,128]{1,0:T(1,128)}', space=vmem, size = 0x12000, scoped, tag = 'internal scratch']
  %s0 = inlined_call_operand.vmem [shape: f32[16,32], index: 0, kind: input, shape index: {}]
  %s1 = inlined_call_operand.vmem [shape: f32[16,16], index: 1, kind: input, shape index: {}]
  %s2 = inlined_call_operand.vmem [shape: f32[8,1,32], index: 2, kind: input, shape index: {}]
  %s3 = inlined_call_operand.vmem [shape: f32[8,1,32], index: 3, kind: input, shape index: {}]
  %s4 = inlined_call_operand.vmem [shape: bf16[8,4,32,8], index: 4, kind: input, shape index: {}]
  %s5 = inlined_call_operand.vmem [shape: bf16[8,4,32,8], index: 5, kind: input, shape index: {}]
  %s6 = inlined_call_operand.vmem [shape: bf16[8,4,32,8], index: 6, kind: input, shape index: {}]
  %s7 = inlined_call_operand.vmem [shape: f32[8,4,1,8], index: 7, kind: input, shape index: {}]
  %s8 = inlined_call_operand.vmem [shape: f32[8,4,1,8], index: 8, kind: input, shape index: {}]
  %s9 = inlined_call_operand.vmem [shape: f32[8,4,1,8], index: 9, kind: input, shape index: {}]
  %s10 = inlined_call_operand.vmem [shape: bf16[8,4,8,32], index: 10, kind: input, shape index: {}]
  %s11 = inlined_call_operand.vmem [shape: f32[8,1,32], index: 11, kind: input, shape index: {}]
  %s12 = inlined_call_operand.vmem [shape: f32[8,1,32], index: 12, kind: input, shape index: {}]
  %s13 = inlined_call_operand.vmem [shape: f32[8,1,32], index: 13, kind: input, shape index: {}]
  %s14 = inlined_call_operand.vmem [shape: bf16[8,32,64], index: 14, kind: input, shape index: {}]
  %s15 = inlined_call_operand.vmem [shape: f32[8,1,64], index: 15, kind: input, shape index: {}]
  %s16 = inlined_call_operand.vmem [shape: bf16[8,64,32], index: 16, kind: input, shape index: {}]
  %s17 = inlined_call_operand.vmem [shape: f32[8,1,32], index: 17, kind: input, shape index: {}]
  %s18 = inlined_call_operand.hbm [shape: f32[16,32], index: 18, kind: output, shape index: {}]
  %s19 = sld [smem:[#allocation0]]
  $region109: #{transformer_encoder_forward.1} parent=0
    _
  %s21 = ssub.s32 1, %s19
  %s22 = scalar_select 0, %s21, %s19
  $region1: #{transformer_encoder_forward.1} parent=0
    #allocation2 [shape = 'u8[8192]{0}', space=vmem, size = 0x2000, scoped, tag = 'output window, operand 0, single buffered']
    #allocation3 [shape = 's32[2]{0}', space=sflag, size = 0x8, scoped, tag = 'scoped memory for transformer_encoder_forward.1']
    %23 = vsyncpa [#allocation3], 0
    loop: start=0, step=1, limit=10
    $region2: #{transformer_encoder_forward.1} parent=1 // loop_pre_header
      _
    $region3: #{transformer_encoder_forward.1} parent=1 // loop_header
      %s25 = sphi 0, %s29
      %p26 = scmp.ge.s32.totalorder %s25, 10
      %s33 = sphi 0, %s33
      %s35 = sphi 0, %s33
      %s36 = sphi 0, %s35
      %s50 = sphi 0, %s36
      %s54 = sphi 0, %s54
      %s56 = sphi 0, %s54
      %s57 = sphi 0, %s56
      %s71 = sphi 0, %s57
      %s77 = sphi 0, %s79
      %s80 = sphi 0, %s77
      %s81 = sphi 0, %s80
      %s97 = sphi 0, %s81
      %s103 = sphi 0, %s105
      %s106 = sphi 0, %s103
      %s107 = sphi 0, %s106
      %s123 = sphi 0, %s107
      %s129 = sphi 0, %s131
      %s132 = sphi 0, %s129
      %s133 = sphi 0, %s132
      %s149 = sphi 0, %s133
      %s155 = sphi 0, %s157
      %s158 = sphi 0, %s155
      %s159 = sphi 0, %s158
      %s175 = sphi 0, %s159
      %s181 = sphi 0, %s183
      %s184 = sphi 0, %s181
      %s185 = sphi 0, %s184
      %s201 = sphi 0, %s185
      %s207 = sphi 0, %s209
      %s210 = sphi 0, %s207
      %s211 = sphi 0, %s210
      %s227 = sphi 0, %s211
      %s233 = sphi 0, %s235
      %s236 = sphi 0, %s233
      %s237 = sphi 0, %s236
      %s253 = sphi 0, %s237
      %s259 = sphi 0, %s261
      %s262 = sphi 0, %s259
      %s263 = sphi 0, %s262
      %s279 = sphi 0, %s263
      %s285 = sphi 0, %s287
      %s288 = sphi 0, %s285
      %s289 = sphi 0, %s288
      %s305 = sphi 0, %s289
      %s311 = sphi 0, %s313
      %s314 = sphi 0, %s311
      %s315 = sphi 0, %s314
      %s331 = sphi 0, %s315
      %s337 = sphi 0, %s339
      %s340 = sphi 0, %s337
      %s341 = sphi 0, %s340
      %s357 = sphi 0, %s341
      %s363 = sphi 0, %s365
      %s366 = sphi 0, %s363
      %s367 = sphi 0, %s366
      %s383 = sphi 0, %s367
      %s389 = sphi 0, %s391
      %s392 = sphi 0, %s389
      %s393 = sphi 0, %s392
      %s409 = sphi 0, %s393
      %s415 = sphi 0, %s417
      %s418 = sphi 0, %s415
      %s419 = sphi 0, %s418
      %s435 = sphi 0, %s419
      %s441 = sphi 0, %s443
      %s444 = sphi 0, %s441
      %s445 = sphi 0, %s444
      %s461 = sphi 0, %s445
      %s467 = sphi 0, %s469
      %s470 = sphi 0, %s467
      %s471 = sphi 0, %s470
      %s487 = sphi 0, %s471
      %s491 = sphi 0, %s491
      %s493 = sphi 0, %s491
      %s494 = sphi 0, %s493
      %s508 = sphi 0, %s494
    $region4: #{transformer_encoder_forward.1} parent=1 // loop_header_branch
      %28 = sbr.rel (%p26) target = $region8
    $region5: #{transformer_encoder_forward.1} parent=1 // loop_body
      %s30 = ssub.s32 %s25, 1
      %s31 = ssub.s32 %s25, 2
      %s32 = sadd.s32 %s25, 1
      %s34 = sadd.s32 %s33, 1
      %p37 = scmp.eq.s32.totalorder %s25, 7
      %p38 = scmp.ne.s32.totalorder %s33, %s35
      %p39 = scmp.eq.s32.totalorder %s25, 0
      %p40 = por %p38, %p39
      %p41 = scmp.ne.s32.totalorder %s33, %s35
      %p42 = scmp.eq.s32.totalorder %s30, 7
      %p43 = por %p41, %p42
      %p44 = scmp.ne.s32.totalorder %s35, %s36
      %p45 = scmp.eq.s32.totalorder %s30, 0
      %p46 = por %p44, %p45
      %p47 = scmp.ne.s32.totalorder %s35, %s36
      %p48 = scmp.eq.s32.totalorder %s31, 7
      %p49 = por %p47, %p48
      %p51 = scmp.ne.s32.totalorder %s36, %s50
      %p52 = scmp.eq.s32.totalorder %s31, 0
      %p53 = por %p51, %p52
      %s55 = sadd.s32 %s54, 1
      %p58 = scmp.eq.s32.totalorder %s25, 7
      %p59 = scmp.ne.s32.totalorder %s54, %s56
      %p60 = scmp.eq.s32.totalorder %s25, 0
      %p61 = por %p59, %p60
      %p62 = scmp.ne.s32.totalorder %s54, %s56
      %p63 = scmp.eq.s32.totalorder %s30, 7
      %p64 = por %p62, %p63
      %p65 = scmp.ne.s32.totalorder %s56, %s57
      %p66 = scmp.eq.s32.totalorder %s30, 0
      %p67 = por %p65, %p66
      %p68 = scmp.ne.s32.totalorder %s56, %s57
      %p69 = scmp.eq.s32.totalorder %s31, 7
      %p70 = por %p68, %p69
      %p72 = scmp.ne.s32.totalorder %s57, %s71
      %p73 = scmp.eq.s32.totalorder %s31, 0
      %p74 = por %p72, %p73
      %s75 = ssub.s32 %s25, %s32
      %p76 = scmp.eq.s32.totalorder %s75, 0
      %s78 = sadd.s32 %s77, 1
      %s79 = scalar_select %p76, %s77, %s78
      %p82 = pneg %p76
      %p83 = scmp.eq.s32.totalorder %s25, 7
      %p84 = por %p82, %p83
      %p85 = scmp.ne.s32.totalorder %s77, %s80
      %p86 = scmp.eq.s32.totalorder %s25, 0
      %p87 = por %p85, %p86
      %p88 = scmp.ne.s32.totalorder %s77, %s80
      %p89 = scmp.eq.s32.totalorder %s30, 7
      %p90 = por %p88, %p89
      %p91 = scmp.ne.s32.totalorder %s80, %s81
      %p92 = scmp.eq.s32.totalorder %s30, 0
      %p93 = por %p91, %p92
      %p94 = scmp.ne.s32.totalorder %s80, %s81
      %p95 = scmp.eq.s32.totalorder %s31, 7
      %p96 = por %p94, %p95
      %p98 = scmp.ne.s32.totalorder %s81, %s97
      %p99 = scmp.eq.s32.totalorder %s31, 0
      %p100 = por %p98, %p99
      %s101 = ssub.s32 %s25, %s32
      %p102 = scmp.eq.s32.totalorder %s101, 0
      %s104 = sadd.s32 %s103, 1
      %s105 = scalar_select %p102, %s103, %s104
      %p108 = pneg %p102
      %p109 = scmp.eq.s32.totalorder %s25, 7
      %p110 = por %p108, %p109
      %p111 = scmp.ne.s32.totalorder %s103, %s106
      %p112 = scmp.eq.s32.totalorder %s25, 0
      %p113 = por %p111, %p112
      %p114 = scmp.ne.s32.totalorder %s103, %s106
      %p115 = scmp.eq.s32.totalorder %s30, 7
      %p116 = por %p114, %p115
      %p117 = scmp.ne.s32.totalorder %s106, %s107
      %p118 = scmp.eq.s32.totalorder %s30, 0
      %p119 = por %p117, %p118
      %p120 = scmp.ne.s32.totalorder %s106, %s107
      %p121 = scmp.eq.s32.totalorder %s31, 7
      %p122 = por %p120, %p121
      %p124 = scmp.ne.s32.totalorder %s107, %s123
      %p125 = scmp.eq.s32.totalorder %s31, 0
      %p126 = por %p124, %p125
      %s127 = ssub.s32 %s25, %s32
      %p128 = scmp.eq.s32.totalorder %s127, 0
      %s130 = sadd.s32 %s129, 1
      %s131 = scalar_select %p128, %s129, %s130
      %p134 = pneg %p128
      %p135 = scmp.eq.s32.totalorder %s25, 7
      %p136 = por %p134, %p135
      %p137 = scmp.ne.s32.totalorder %s129, %s132
      %p138 = scmp.eq.s32.totalorder %s25, 0
      %p139 = por %p137, %p138
      %p140 = scmp.ne.s32.totalorder %s129, %s132
      %p141 = scmp.eq.s32.totalorder %s30, 7
      %p142 = por %p140, %p141
      %p143 = scmp.ne.s32.totalorder %s132, %s133
      %p144 = scmp.eq.s32.totalorder %s30, 0
      %p145 = por %p143, %p144
      %p146 = scmp.ne.s32.totalorder %s132, %s133
      %p147 = scmp.eq.s32.totalorder %s31, 7
      %p148 = por %p146, %p147
      %p150 = scmp.ne.s32.totalorder %s133, %s149
      %p151 = scmp.eq.s32.totalorder %s31, 0
      %p152 = por %p150, %p151
      %s153 = ssub.s32 %s25, %s32
      %p154 = scmp.eq.s32.totalorder %s153, 0
      %s156 = sadd.s32 %s155, 1
      %s157 = scalar_select %p154, %s155, %s156
      %p160 = pneg %p154
      %p161 = scmp.eq.s32.totalorder %s25, 7
      %p162 = por %p160, %p161
      %p163 = scmp.ne.s32.totalorder %s155, %s158
      %p164 = scmp.eq.s32.totalorder %s25, 0
      %p165 = por %p163, %p164
      %p166 = scmp.ne.s32.totalorder %s155, %s158
      %p167 = scmp.eq.s32.totalorder %s30, 7
      %p168 = por %p166, %p167
      %p169 = scmp.ne.s32.totalorder %s158, %s159
      %p170 = scmp.eq.s32.totalorder %s30, 0
      %p171 = por %p169, %p170
      %p172 = scmp.ne.s32.totalorder %s158, %s159
      %p173 = scmp.eq.s32.totalorder %s31, 7
      %p174 = por %p172, %p173
      %p176 = scmp.ne.s32.totalorder %s159, %s175
      %p177 = scmp.eq.s32.totalorder %s31, 0
      %p178 = por %p176, %p177
      %s179 = ssub.s32 %s25, %s32
      %p180 = scmp.eq.s32.totalorder %s179, 0
      %s182 = sadd.s32 %s181, 1
      %s183 = scalar_select %p180, %s181, %s182
      %p186 = pneg %p180
      %p187 = scmp.eq.s32.totalorder %s25, 7
      %p188 = por %p186, %p187
      %p189 = scmp.ne.s32.totalorder %s181, %s184
      %p190 = scmp.eq.s32.totalorder %s25, 0
      %p191 = por %p189, %p190
      %p192 = scmp.ne.s32.totalorder %s181, %s184
      %p193 = scmp.eq.s32.totalorder %s30, 7
      %p194 = por %p192, %p193
      %p195 = scmp.ne.s32.totalorder %s184, %s185
      %p196 = scmp.eq.s32.totalorder %s30, 0
      %p197 = por %p195, %p196
      %p198 = scmp.ne.s32.totalorder %s184, %s185
      %p199 = scmp.eq.s32.totalorder %s31, 7
      %p200 = por %p198, %p199
      %p202 = scmp.ne.s32.totalorder %s185, %s201
      %p203 = scmp.eq.s32.totalorder %s31, 0
      %p204 = por %p202, %p203
      %s205 = ssub.s32 %s25, %s32
      %p206 = scmp.eq.s32.totalorder %s205, 0
      %s208 = sadd.s32 %s207, 1
      %s209 = scalar_select %p206, %s207, %s208
      %p212 = pneg %p206
      %p213 = scmp.eq.s32.totalorder %s25, 7
      %p214 = por %p212, %p213
      %p215 = scmp.ne.s32.totalorder %s207, %s210
      %p216 = scmp.eq.s32.totalorder %s25, 0
      %p217 = por %p215, %p216
      %p218 = scmp.ne.s32.totalorder %s207, %s210
      %p219 = scmp.eq.s32.totalorder %s30, 7
      %p220 = por %p218, %p219
      %p221 = scmp.ne.s32.totalorder %s210, %s211
      %p222 = scmp.eq.s32.totalorder %s30, 0
      %p223 = por %p221, %p222
      %p224 = scmp.ne.s32.totalorder %s210, %s211
      %p225 = scmp.eq.s32.totalorder %s31, 7
      %p226 = por %p224, %p225
      %p228 = scmp.ne.s32.totalorder %s211, %s227
      %p229 = scmp.eq.s32.totalorder %s31, 0
      %p230 = por %p228, %p229
      %s231 = ssub.s32 %s25, %s32
      %p232 = scmp.eq.s32.totalorder %s231, 0
      %s234 = sadd.s32 %s233, 1
      %s235 = scalar_select %p232, %s233, %s234
      %p238 = pneg %p232
      %p239 = scmp.eq.s32.totalorder %s25, 7
      %p240 = por %p238, %p239
      %p241 = scmp.ne.s32.totalorder %s233, %s236
      %p242 = scmp.eq.s32.totalorder %s25, 0
      %p243 = por %p241, %p242
      %p244 = scmp.ne.s32.totalorder %s233, %s236
      %p245 = scmp.eq.s32.totalorder %s30, 7
      %p246 = por %p244, %p245
      %p247 = scmp.ne.s32.totalorder %s236, %s237
      %p248 = scmp.eq.s32.totalorder %s30, 0
      %p249 = por %p247, %p248
      %p250 = scmp.ne.s32.totalorder %s236, %s237
      %p251 = scmp.eq.s32.totalorder %s31, 7
      %p252 = por %p250, %p251
      %p254 = scmp.ne.s32.totalorder %s237, %s253
      %p255 = scmp.eq.s32.totalorder %s31, 0
      %p256 = por %p254, %p255
      %s257 = ssub.s32 %s25, %s32
      %p258 = scmp.eq.s32.totalorder %s257, 0
      %s260 = sadd.s32 %s259, 1
      %s261 = scalar_select %p258, %s259, %s260
      %p264 = pneg %p258
      %p265 = scmp.eq.s32.totalorder %s25, 7
      %p266 = por %p264, %p265
      %p267 = scmp.ne.s32.totalorder %s259, %s262
      %p268 = scmp.eq.s32.totalorder %s25, 0
      %p269 = por %p267, %p268
      %p270 = scmp.ne.s32.totalorder %s259, %s262
      %p271 = scmp.eq.s32.totalorder %s30, 7
      %p272 = por %p270, %p271
      %p273 = scmp.ne.s32.totalorder %s262, %s263
      %p274 = scmp.eq.s32.totalorder %s30, 0
      %p275 = por %p273, %p274
      %p276 = scmp.ne.s32.totalorder %s262, %s263
      %p277 = scmp.eq.s32.totalorder %s31, 7
      %p278 = por %p276, %p277
      %p280 = scmp.ne.s32.totalorder %s263, %s279
      %p281 = scmp.eq.s32.totalorder %s31, 0
      %p282 = por %p280, %p281
      %s283 = ssub.s32 %s25, %s32
      %p284 = scmp.eq.s32.totalorder %s283, 0
      %s286 = sadd.s32 %s285, 1
      %s287 = scalar_select %p284, %s285, %s286
      %p290 = pneg %p284
      %p291 = scmp.eq.s32.totalorder %s25, 7
      %p292 = por %p290, %p291
      %p293 = scmp.ne.s32.totalorder %s285, %s288
      %p294 = scmp.eq.s32.totalorder %s25, 0
      %p295 = por %p293, %p294
      %p296 = scmp.ne.s32.totalorder %s285, %s288
      %p297 = scmp.eq.s32.totalorder %s30, 7
      %p298 = por %p296, %p297
      %p299 = scmp.ne.s32.totalorder %s288, %s289
      %p300 = scmp.eq.s32.totalorder %s30, 0
      %p301 = por %p299, %p300
      %p302 = scmp.ne.s32.totalorder %s288, %s289
      %p303 = scmp.eq.s32.totalorder %s31, 7
      %p304 = por %p302, %p303
      %p306 = scmp.ne.s32.totalorder %s289, %s305
      %p307 = scmp.eq.s32.totalorder %s31, 0
      %p308 = por %p306, %p307
      %s309 = ssub.s32 %s25, %s32
      %p310 = scmp.eq.s32.totalorder %s309, 0
      %s312 = sadd.s32 %s311, 1
      %s313 = scalar_select %p310, %s311, %s312
      %p316 = pneg %p310
      %p317 = scmp.eq.s32.totalorder %s25, 7
      %p318 = por %p316, %p317
      %p319 = scmp.ne.s32.totalorder %s311, %s314
      %p320 = scmp.eq.s32.totalorder %s25, 0
      %p321 = por %p319, %p320
      %p322 = scmp.ne.s32.totalorder %s311, %s314
      %p323 = scmp.eq.s32.totalorder %s30, 7
      %p324 = por %p322, %p323
      %p325 = scmp.ne.s32.totalorder %s314, %s315
      %p326 = scmp.eq.s32.totalorder %s30, 0
      %p327 = por %p325, %p326
      %p328 = scmp.ne.s32.totalorder %s314, %s315
      %p329 = scmp.eq.s32.totalorder %s31, 7
      %p330 = por %p328, %p329
      %p332 = scmp.ne.s32.totalorder %s315, %s331
      %p333 = scmp.eq.s32.totalorder %s31, 0
      %p334 = por %p332, %p333
      %s335 = ssub.s32 %s25, %s32
      %p336 = scmp.eq.s32.totalorder %s335, 0
      %s338 = sadd.s32 %s337, 1
      %s339 = scalar_select %p336, %s337, %s338
      %p342 = pneg %p336
      %p343 = scmp.eq.s32.totalorder %s25, 7
      %p344 = por %p342, %p343
      %p345 = scmp.ne.s32.totalorder %s337, %s340
      %p346 = scmp.eq.s32.totalorder %s25, 0
      %p347 = por %p345, %p346
      %p348 = scmp.ne.s32.totalorder %s337, %s340
      %p349 = scmp.eq.s32.totalorder %s30, 7
      %p350 = por %p348, %p349
      %p351 = scmp.ne.s32.totalorder %s340, %s341
      %p352 = scmp.eq.s32.totalorder %s30, 0
      %p353 = por %p351, %p352
      %p354 = scmp.ne.s32.totalorder %s340, %s341
      %p355 = scmp.eq.s32.totalorder %s31, 7
      %p356 = por %p354, %p355
      %p358 = scmp.ne.s32.totalorder %s341, %s357
      %p359 = scmp.eq.s32.totalorder %s31, 0
      %p360 = por %p358, %p359
      %s361 = ssub.s32 %s25, %s32
      %p362 = scmp.eq.s32.totalorder %s361, 0
      %s364 = sadd.s32 %s363, 1
      %s365 = scalar_select %p362, %s363, %s364
      %p368 = pneg %p362
      %p369 = scmp.eq.s32.totalorder %s25, 7
      %p370 = por %p368, %p369
      %p371 = scmp.ne.s32.totalorder %s363, %s366
      %p372 = scmp.eq.s32.totalorder %s25, 0
      %p373 = por %p371, %p372
      %p374 = scmp.ne.s32.totalorder %s363, %s366
      %p375 = scmp.eq.s32.totalorder %s30, 7
      %p376 = por %p374, %p375
      %p377 = scmp.ne.s32.totalorder %s366, %s367
      %p378 = scmp.eq.s32.totalorder %s30, 0
      %p379 = por %p377, %p378
      %p380 = scmp.ne.s32.totalorder %s366, %s367
      %p381 = scmp.eq.s32.totalorder %s31, 7
      %p382 = por %p380, %p381
      %p384 = scmp.ne.s32.totalorder %s367, %s383
      %p385 = scmp.eq.s32.totalorder %s31, 0
      %p386 = por %p384, %p385
      %s387 = ssub.s32 %s25, %s32
      %p388 = scmp.eq.s32.totalorder %s387, 0
      %s390 = sadd.s32 %s389, 1
      %s391 = scalar_select %p388, %s389, %s390
      %p394 = pneg %p388
      %p395 = scmp.eq.s32.totalorder %s25, 7
      %p396 = por %p394, %p395
      %p397 = scmp.ne.s32.totalorder %s389, %s392
      %p398 = scmp.eq.s32.totalorder %s25, 0
      %p399 = por %p397, %p398
      %p400 = scmp.ne.s32.totalorder %s389, %s392
      %p401 = scmp.eq.s32.totalorder %s30, 7
      %p402 = por %p400, %p401
      %p403 = scmp.ne.s32.totalorder %s392, %s393
      %p404 = scmp.eq.s32.totalorder %s30, 0
      %p405 = por %p403, %p404
      %p406 = scmp.ne.s32.totalorder %s392, %s393
      %p407 = scmp.eq.s32.totalorder %s31, 7
      %p408 = por %p406, %p407
      %p410 = scmp.ne.s32.totalorder %s393, %s409
      %p411 = scmp.eq.s32.totalorder %s31, 0
      %p412 = por %p410, %p411
      %s413 = ssub.s32 %s25, %s32
      %p414 = scmp.eq.s32.totalorder %s413, 0
      %s416 = sadd.s32 %s415, 1
      %s417 = scalar_select %p414, %s415, %s416
      %p420 = pneg %p414
      %p421 = scmp.eq.s32.totalorder %s25, 7
      %p422 = por %p420, %p421
      %p423 = scmp.ne.s32.totalorder %s415, %s418
      %p424 = scmp.eq.s32.totalorder %s25, 0
      %p425 = por %p423, %p424
      %p426 = scmp.ne.s32.totalorder %s415, %s418
      %p427 = scmp.eq.s32.totalorder %s30, 7
      %p428 = por %p426, %p427
      %p429 = scmp.ne.s32.totalorder %s418, %s419
      %p430 = scmp.eq.s32.totalorder %s30, 0
      %p431 = por %p429, %p430
      %p432 = scmp.ne.s32.totalorder %s418, %s419
      %p433 = scmp.eq.s32.totalorder %s31, 7
      %p434 = por %p432, %p433
      %p436 = scmp.ne.s32.totalorder %s419, %s435
      %p437 = scmp.eq.s32.totalorder %s31, 0
      %p438 = por %p436, %p437
      %s439 = ssub.s32 %s25, %s32
      %p440 = scmp.eq.s32.totalorder %s439, 0
      %s442 = sadd.s32 %s441, 1
      %s443 = scalar_select %p440, %s441, %s442
      %p446 = pneg %p440
      %p447 = scmp.eq.s32.totalorder %s25, 7
      %p448 = por %p446, %p447
      %p449 = scmp.ne.s32.totalorder %s441, %s444
      %p450 = scmp.eq.s32.totalorder %s25, 0
      %p451 = por %p449, %p450
      %p452 = scmp.ne.s32.totalorder %s441, %s444
      %p453 = scmp.eq.s32.totalorder %s30, 7
      %p454 = por %p452, %p453
      %p455 = scmp.ne.s32.totalorder %s444, %s445
      %p456 = scmp.eq.s32.totalorder %s30, 0
      %p457 = por %p455, %p456
      %p458 = scmp.ne.s32.totalorder %s444, %s445
      %p459 = scmp.eq.s32.totalorder %s31, 7
      %p460 = por %p458, %p459
      %p462 = scmp.ne.s32.totalorder %s445, %s461
      %p463 = scmp.eq.s32.totalorder %s31, 0
      %p464 = por %p462, %p463
      %s465 = ssub.s32 %s25, %s32
      %p466 = scmp.eq.s32.totalorder %s465, 0
      %s468 = sadd.s32 %s467, 1
      %s469 = scalar_select %p466, %s467, %s468
      %p472 = pneg %p466
      %p473 = scmp.eq.s32.totalorder %s25, 7
      %p474 = por %p472, %p473
      %p475 = scmp.ne.s32.totalorder %s467, %s470
      %p476 = scmp.eq.s32.totalorder %s25, 0
      %p477 = por %p475, %p476
      %p478 = scmp.ne.s32.totalorder %s467, %s470
      %p479 = scmp.eq.s32.totalorder %s30, 7
      %p480 = por %p478, %p479
      %p481 = scmp.ne.s32.totalorder %s470, %s471
      %p482 = scmp.eq.s32.totalorder %s30, 0
      %p483 = por %p481, %p482
      %p484 = scmp.ne.s32.totalorder %s470, %s471
      %p485 = scmp.eq.s32.totalorder %s31, 7
      %p486 = por %p484, %p485
      %p488 = scmp.ne.s32.totalorder %s471, %s487
      %p489 = scmp.eq.s32.totalorder %s31, 0
      %p490 = por %p488, %p489
      %s492 = sadd.s32 %s491, 1
      %p495 = scmp.eq.s32.totalorder %s25, 7
      %p496 = scmp.ne.s32.totalorder %s491, %s493
      %p497 = scmp.eq.s32.totalorder %s25, 0
      %p498 = por %p496, %p497
      %p499 = scmp.ne.s32.totalorder %s491, %s493
      %p500 = scmp.eq.s32.totalorder %s30, 7
      %p501 = por %p499, %p500
      %p502 = scmp.ne.s32.totalorder %s493, %s494
      %p503 = scmp.eq.s32.totalorder %s30, 0
      %p504 = por %p502, %p503
      %p505 = scmp.ne.s32.totalorder %s493, %s494
      %p506 = scmp.eq.s32.totalorder %s31, 7
      %p507 = por %p505, %p506
      %p509 = scmp.ne.s32.totalorder %s494, %s508
      %p510 = scmp.eq.s32.totalorder %s31, 0
      %p511 = por %p509, %p510
      %p512 = scmp.le.s32.totalorder 1, %s25
      %p513 = scmp.lt.s32.totalorder %s25, 9
      %p514 = pnand %p512, %p513
      %p515 = pneg %p514
      // Predicated region
      $region9: #{transformer_encoder_forward.1} parent=5 // pred_check
        _
      $region10: #{transformer_encoder_forward.1} parent=5 // pred_check_branch
        %517 = sbr.rel (%p514) target = $region12
      $region11: #{transformer_encoder_forward.1} parent=5 // pred_region
        %s518 = ssub.s32 %s25, 1
        // Predicated region
        $region13: #{transformer_encoder_forward.1} parent=11 // pred_check
          %p519 = pneg %p46
        $region14: #{transformer_encoder_forward.1} parent=11 // pred_check_branch
          %521 = sbr.rel (%p519) target = $region16
        $region15: #{transformer_encoder_forward.1} parent=11 // pred_region
          _
        $region16: #{transformer_encoder_forward.1} parent=11 // pred_fallthru
          _
        // Predicated region
        $region17: #{transformer_encoder_forward.1} parent=11 // pred_check
          %p522 = pneg %p67
        $region18: #{transformer_encoder_forward.1} parent=11 // pred_check_branch
          %524 = sbr.rel (%p522) target = $region20
        $region19: #{transformer_encoder_forward.1} parent=11 // pred_region
          _
        $region20: #{transformer_encoder_forward.1} parent=11 // pred_fallthru
          _
      $region12: #{transformer_encoder_forward.1} parent=5 // pred_fallthru
        _
      %p525 = scmp.lt.s32.totalorder %s25, 8
      // Predicated region
      $region21: #{transformer_encoder_forward.1} parent=5 // pred_check
        %p526 = pneg %p525
      $region22: #{transformer_encoder_forward.1} parent=5 // pred_check_branch
        %528 = sbr.rel (%p526) target = $region24
      $region23: #{transformer_encoder_forward.1} parent=5 // pred_region
        // Predicated region
        $region25: #{transformer_encoder_forward.1} parent=23 // pred_check
          %p529 = pneg %p87
        $region26: #{transformer_encoder_forward.1} parent=23 // pred_check_branch
          %531 = sbr.rel (%p529) target = $region28
        $region27: #{transformer_encoder_forward.1} parent=23 // pred_region
          %p532 = scmp.lt.s32.totalorder %s25, 7
          %s533 = scalar_select %p532, %s25, 7
          %s534 = scalar_lea.vmem %s2, %s533
        $region28: #{transformer_encoder_forward.1} parent=23 // pred_fallthru
          _
        // Predicated region
        $region29: #{transformer_encoder_forward.1} parent=23 // pred_check
          %p535 = pneg %p113
        $region30: #{transformer_encoder_forward.1} parent=23 // pred_check_branch
          %537 = sbr.rel (%p535) target = $region32
        $region31: #{transformer_encoder_forward.1} parent=23 // pred_region
          %p538 = scmp.lt.s32.totalorder %s25, 7
          %s539 = scalar_select %p538, %s25, 7
          %s540 = scalar_lea.vmem %s3, %s539
        $region32: #{transformer_encoder_forward.1} parent=23 // pred_fallthru
          _
        // Predicated region
        $region33: #{transformer_encoder_forward.1} parent=23 // pred_check
          %p541 = pneg %p139
        $region34: #{transformer_encoder_forward.1} parent=23 // pred_check_branch
          %543 = sbr.rel (%p541) target = $region36
        $region35: #{transformer_encoder_forward.1} parent=23 // pred_region
          %p544 = scmp.lt.s32.totalorder %s25, 7
          %s545 = scalar_select %p544, %s25, 7
          %s546 = smul.addr %s545, 16
          %s547 = smul.addr %s546, 4
          %s548 = scalar_lea.vmem %s4, %s547
        $region36: #{transformer_encoder_forward.1} parent=23 // pred_fallthru
          _
        // Predicated region
        $region37: #{transformer_encoder_forward.1} parent=23 // pred_check
          %p549 = pneg %p165
        $region38: #{transformer_encoder_forward.1} parent=23 // pred_check_branch
          %551 = sbr.rel (%p549) target = $region40
        $region39: #{transformer_encoder_forward.1} parent=23 // pred_region
          %p552 = scmp.lt.s32.totalorder %s25, 7
          %s553 = scalar_select %p552, %s25, 7
          %s554 = smul.addr %s553, 16
          %s555 = smul.addr %s554, 4
          %s556 = scalar_lea.vmem %s5, %s555
        $region40: #{transformer_encoder_forward.1} parent=23 // pred_fallthru
          _
        // Predicated region
        $region41: #{transformer_encoder_forward.1} parent=23 // pred_check
          %p557 = pneg %p191
        $region42: #{transformer_encoder_forward.1} parent=23 // pred_check_branch
          %559 = sbr.rel (%p557) target = $region44
        $region43: #{transformer_encoder_forward.1} parent=23 // pred_region
          %p560 = scmp.lt.s32.totalorder %s25, 7
          %s561 = scalar_select %p560, %s25, 7
          %s562 = smul.addr %s561, 16
          %s563 = smul.addr %s562, 4
          %s564 = scalar_lea.vmem %s6, %s563
        $region44: #{transformer_encoder_forward.1} parent=23 // pred_fallthru
          _
        // Predicated region
        $region45: #{transformer_encoder_forward.1} parent=23 // pred_check
          %p565 = pneg %p217
        $region46: #{transformer_encoder_forward.1} parent=23 // pred_check_branch
          %567 = sbr.rel (%p565) target = $region48
        $region47: #{transformer_encoder_forward.1} parent=23 // pred_region
          %p568 = scmp.lt.s32.totalorder %s25, 7
          %s569 = scalar_select %p568, %s25, 7
          %s570 = smul.addr %s569, 4
          %s571 = scalar_lea.vmem %s7, %s570
        $region48: #{transformer_encoder_forward.1} parent=23 // pred_fallthru
          _
        // Predicated region
        $region49: #{transformer_encoder_forward.1} parent=23 // pred_check
          %p572 = pneg %p243
        $region50: #{transformer_encoder_forward.1} parent=23 // pred_check_branch
          %574 = sbr.rel (%p572) target = $region52
        $region51: #{transformer_encoder_forward.1} parent=23 // pred_region
          %p575 = scmp.lt.s32.totalorder %s25, 7
          %s576 = scalar_select %p575, %s25, 7
          %s577 = smul.addr %s576, 4
          %s578 = scalar_lea.vmem %s8, %s577
        $region52: #{transformer_encoder_forward.1} parent=23 // pred_fallthru
          _
        // Predicated region
        $region53: #{transformer_encoder_forward.1} parent=23 // pred_check
          %p579 = pneg %p269
        $region54: #{transformer_encoder_forward.1} parent=23 // pred_check_branch
          %581 = sbr.rel (%p579) target = $region56
        $region55: #{transformer_encoder_forward.1} parent=23 // pred_region
          %p582 = scmp.lt.s32.totalorder %s25, 7
          %s583 = scalar_select %p582, %s25, 7
          %s584 = smul.addr %s583, 4
          %s585 = scalar_lea.vmem %s9, %s584
        $region56: #{transformer_encoder_forward.1} parent=23 // pred_fallthru
          _
        // Predicated region
        $region57: #{transformer_encoder_forward.1} parent=23 // pred_check
          %p586 = pneg %p295
        $region58: #{transformer_encoder_forward.1} parent=23 // pred_check_branch
          %588 = sbr.rel (%p586) target = $region60
        $region59: #{transformer_encoder_forward.1} parent=23 // pred_region
          %p589 = scmp.lt.s32.totalorder %s25, 7
          %s590 = scalar_select %p589, %s25, 7
          %s591 = smul.addr %s590, 4
          %s592 = smul.addr %s591, 4
          %s593 = scalar_lea.vmem %s10, %s592
        $region60: #{transformer_encoder_forward.1} parent=23 // pred_fallthru
          _
        // Predicated region
        $region61: #{transformer_encoder_forward.1} parent=23 // pred_check
          %p594 = pneg %p321
        $region62: #{transformer_encoder_forward.1} parent=23 // pred_check_branch
          %596 = sbr.rel (%p594) target = $region64
        $region63: #{transformer_encoder_forward.1} parent=23 // pred_region
          %p597 = scmp.lt.s32.totalorder %s25, 7
          %s598 = scalar_select %p597, %s25, 7
          %s599 = scalar_lea.vmem %s11, %s598
        $region64: #{transformer_encoder_forward.1} parent=23 // pred_fallthru
          _
        // Predicated region
        $region65: #{transformer_encoder_forward.1} parent=23 // pred_check
          %p600 = pneg %p347
        $region66: #{transformer_encoder_forward.1} parent=23 // pred_check_branch
          %602 = sbr.rel (%p600) target = $region68
        $region67: #{transformer_encoder_forward.1} parent=23 // pred_region
          %p603 = scmp.lt.s32.totalorder %s25, 7
          %s604 = scalar_select %p603, %s25, 7
          %s605 = scalar_lea.vmem %s12, %s604
        $region68: #{transformer_encoder_forward.1} parent=23 // pred_fallthru
          _
        // Predicated region
        $region69: #{transformer_encoder_forward.1} parent=23 // pred_check
          %p606 = pneg %p373
        $region70: #{transformer_encoder_forward.1} parent=23 // pred_check_branch
          %608 = sbr.rel (%p606) target = $region72
        $region71: #{transformer_encoder_forward.1} parent=23 // pred_region
          %p609 = scmp.lt.s32.totalorder %s25, 7
          %s610 = scalar_select %p609, %s25, 7
          %s611 = scalar_lea.vmem %s13, %s610
        $region72: #{transformer_encoder_forward.1} parent=23 // pred_fallthru
          _
        // Predicated region
        $region73: #{transformer_encoder_forward.1} parent=23 // pred_check
          %p612 = pneg %p399
        $region74: #{transformer_encoder_forward.1} parent=23 // pred_check_branch
          %614 = sbr.rel (%p612) target = $region76
        $region75: #{transformer_encoder_forward.1} parent=23 // pred_region
          %p615 = scmp.lt.s32.totalorder %s25, 7
          %s616 = scalar_select %p615, %s25, 7
          %s617 = smul.addr %s616, 4
          %s618 = smul.addr %s617, 4
          %s619 = scalar_lea.vmem %s14, %s618
        $region76: #{transformer_encoder_forward.1} parent=23 // pred_fallthru
          _
        // Predicated region
        $region77: #{transformer_encoder_forward.1} parent=23 // pred_check
          %p620 = pneg %p425
        $region78: #{transformer_encoder_forward.1} parent=23 // pred_check_branch
          %622 = sbr.rel (%p620) target = $region80
        $region79: #{transformer_encoder_forward.1} parent=23 // pred_region
          %p623 = scmp.lt.s32.totalorder %s25, 7
          %s624 = scalar_select %p623, %s25, 7
          %s625 = scalar_lea.vmem %s15, %s624
        $region80: #{transformer_encoder_forward.1} parent=23 // pred_fallthru
          _
        // Predicated region
        $region81: #{transformer_encoder_forward.1} parent=23 // pred_check
          %p626 = pneg %p451
        $region82: #{transformer_encoder_forward.1} parent=23 // pred_check_branch
          %628 = sbr.rel (%p626) target = $region84
        $region83: #{transformer_encoder_forward.1} parent=23 // pred_region
          %p629 = scmp.lt.s32.totalorder %s25, 7
          %s630 = scalar_select %p629, %s25, 7
          %s631 = smul.addr %s630, 8
          %s632 = smul.addr %s631, 4
          %s633 = scalar_lea.vmem %s16, %s632
        $region84: #{transformer_encoder_forward.1} parent=23 // pred_fallthru
          _
        // Predicated region
        $region85: #{transformer_encoder_forward.1} parent=23 // pred_check
          %p634 = pneg %p477
        $region86: #{transformer_encoder_forward.1} parent=23 // pred_check_branch
          %636 = sbr.rel (%p634) target = $region88
        $region87: #{transformer_encoder_forward.1} parent=23 // pred_region
          %p637 = scmp.lt.s32.totalorder %s25, 7
          %s638 = scalar_select %p637, %s25, 7
          %s639 = scalar_lea.vmem %s17, %s638
        $region88: #{transformer_encoder_forward.1} parent=23 // pred_fallthru
          _
      $region24: #{transformer_encoder_forward.1} parent=5 // pred_fallthru
        _
      %p640 = scmp.le.s32.totalorder 1, %s25
      %p641 = scmp.lt.s32.totalorder %s25, 9
      %p642 = pnand %p640, %p641
      %p643 = pneg %p642
      // Predicated region
      $region89: #{transformer_encoder_forward.1} parent=5 // pred_check
        _
      $region90: #{transformer_encoder_forward.1} parent=5 // pred_check_branch
        %645 = sbr.rel (%p642) target = $region92
      $region91: #{transformer_encoder_forward.1} parent=5 // pred_region
        %s646 = ssub.s32 %s25, 1
        %p647 = pneg %p46
        %p648 = pneg %p43
        %p649 = pneg %p67
        %p650 = pneg %p64
        %p651 = scmp.lt.s32.totalorder %s30, 7
        %s652 = scalar_select %p651, %s30, 7
        %s653 = scalar_lea.vmem %s2, %s652
        %p654 = pneg %p93
        %p655 = pneg %p90
        %p656 = scmp.lt.s32.totalorder %s30, 7
        %s657 = scalar_select %p656, %s30, 7
        %s658 = scalar_lea.vmem %s3, %s657
        %p659 = pneg %p119
        %p660 = pneg %p116
        %p661 = scmp.lt.s32.totalorder %s30, 7
        %s662 = scalar_select %p661, %s30, 7
        %s663 = smul.addr %s662, 16
        %s664 = smul.addr %s663, 4
        %s665 = scalar_lea.vmem %s4, %s664
        %p666 = pneg %p145
        %p667 = pneg %p142
        %p668 = scmp.lt.s32.totalorder %s30, 7
        %s669 = scalar_select %p668, %s30, 7
        %s670 = smul.addr %s669, 16
        %s671 = smul.addr %s670, 4
        %s672 = scalar_lea.vmem %s5, %s671
        %p673 = pneg %p171
        %p674 = pneg %p168
        %p675 = scmp.lt.s32.totalorder %s30, 7
        %s676 = scalar_select %p675, %s30, 7
        %s677 = smul.addr %s676, 16
        %s678 = smul.addr %s677, 4
        %s679 = scalar_lea.vmem %s6, %s678
        %p680 = pneg %p197
        %p681 = pneg %p194
        %p682 = scmp.lt.s32.totalorder %s30, 7
        %s683 = scalar_select %p682, %s30, 7
        %s684 = smul.addr %s683, 4
        %s685 = scalar_lea.vmem %s7, %s684
        %p686 = pneg %p223
        %p687 = pneg %p220
        %p688 = scmp.lt.s32.totalorder %s30, 7
        %s689 = scalar_select %p688, %s30, 7
        %s690 = smul.addr %s689, 4
        %s691 = scalar_lea.vmem %s8, %s690
        %p692 = pneg %p249
        %p693 = pneg %p246
        %p694 = scmp.lt.s32.totalorder %s30, 7
        %s695 = scalar_select %p694, %s30, 7
        %s696 = smul.addr %s695, 4
        %s697 = scalar_lea.vmem %s9, %s696
        %p698 = pneg %p275
        %p699 = pneg %p272
        %p700 = scmp.lt.s32.totalorder %s30, 7
        %s701 = scalar_select %p700, %s30, 7
        %s702 = smul.addr %s701, 4
        %s703 = smul.addr %s702, 4
        %s704 = scalar_lea.vmem %s10, %s703
        %p705 = pneg %p301
        %p706 = pneg %p298
        %p707 = scmp.lt.s32.totalorder %s30, 7
        %s708 = scalar_select %p707, %s30, 7
        %s709 = scalar_lea.vmem %s11, %s708
        %p710 = pneg %p327
        %p711 = pneg %p324
        %p712 = scmp.lt.s32.totalorder %s30, 7
        %s713 = scalar_select %p712, %s30, 7
        %s714 = scalar_lea.vmem %s12, %s713
        %p715 = pneg %p353
        %p716 = pneg %p350
        %p717 = scmp.lt.s32.totalorder %s30, 7
        %s718 = scalar_select %p717, %s30, 7
        %s719 = scalar_lea.vmem %s13, %s718
        %p720 = pneg %p379
        %p721 = pneg %p376
        %p722 = scmp.lt.s32.totalorder %s30, 7
        %s723 = scalar_select %p722, %s30, 7
        %s724 = smul.addr %s723, 4
        %s725 = smul.addr %s724, 4
        %s726 = scalar_lea.vmem %s14, %s725
        %p727 = pneg %p405
        %p728 = pneg %p402
        %p729 = scmp.lt.s32.totalorder %s30, 7
        %s730 = scalar_select %p729, %s30, 7
        %s731 = scalar_lea.vmem %s15, %s730
        %p732 = pneg %p431
        %p733 = pneg %p428
        %p734 = scmp.lt.s32.totalorder %s30, 7
        %s735 = scalar_select %p734, %s30, 7
        %s736 = smul.addr %s735, 8
        %s737 = smul.addr %s736, 4
        %s738 = scalar_lea.vmem %s16, %s737
        %p739 = pneg %p457
        %p740 = pneg %p454
        %p741 = scmp.lt.s32.totalorder %s30, 7
        %s742 = scalar_select %p741, %s30, 7
        %s743 = scalar_lea.vmem %s17, %s742
        %p744 = pneg %p483
        %p745 = pneg %p480
        %p746 = pneg %p504
        %p747 = pneg %p501
        %p748 = scmp.lt.s32.totalorder %s30, 7
        %s749 = scalar_select %p748, %s30, 7
        %s750 = scalar_lea.vmem %s2, %s749
        %p751 = scmp.lt.s32.totalorder %s30, 7
        %s752 = scalar_select %p751, %s30, 7
        %s753 = scalar_lea.vmem %s3, %s752
        %p754 = scmp.lt.s32.totalorder %s30, 7
        %s755 = scalar_select %p754, %s30, 7
        %s756 = smul.addr %s755, 16
        %s757 = smul.addr %s756, 4
        %s758 = scalar_lea.vmem %s4, %s757
        %p759 = scmp.lt.s32.totalorder %s30, 7
        %s760 = scalar_select %p759, %s30, 7
        %s761 = smul.addr %s760, 16
        %s762 = smul.addr %s761, 4
        %s763 = scalar_lea.vmem %s5, %s762
        %p764 = scmp.lt.s32.totalorder %s30, 7
        %s765 = scalar_select %p764, %s30, 7
        %s766 = smul.addr %s765, 16
        %s767 = smul.addr %s766, 4
        %s768 = scalar_lea.vmem %s6, %s767
        %p769 = scmp.lt.s32.totalorder %s30, 7
        %s770 = scalar_select %p769, %s30, 7
        %s771 = smul.addr %s770, 4
        %s772 = scalar_lea.vmem %s7, %s771
        %p773 = scmp.lt.s32.totalorder %s30, 7
        %s774 = scalar_select %p773, %s30, 7
        %s775 = smul.addr %s774, 4
        %s776 = scalar_lea.vmem %s8, %s775
        %p777 = scmp.lt.s32.totalorder %s30, 7
        %s778 = scalar_select %p777, %s30, 7
        %s779 = smul.addr %s778, 4
        %s780 = scalar_lea.vmem %s9, %s779
        %p781 = scmp.lt.s32.totalorder %s30, 7
        %s782 = scalar_select %p781, %s30, 7
        %s783 = smul.addr %s782, 4
        %s784 = smul.addr %s783, 4
        %s785 = scalar_lea.vmem %s10, %s784
        %p786 = scmp.lt.s32.totalorder %s30, 7
        %s787 = scalar_select %p786, %s30, 7
        %s788 = scalar_lea.vmem %s11, %s787
        %p789 = scmp.lt.s32.totalorder %s30, 7
        %s790 = scalar_select %p789, %s30, 7
        %s791 = scalar_lea.vmem %s12, %s790
        %p792 = scmp.lt.s32.totalorder %s30, 7
        %s793 = scalar_select %p792, %s30, 7
        %s794 = scalar_lea.vmem %s13, %s793
        %p795 = scmp.lt.s32.totalorder %s30, 7
        %s796 = scalar_select %p795, %s30, 7
        %s797 = smul.addr %s796, 4
        %s798 = smul.addr %s797, 4
        %s799 = scalar_lea.vmem %s14, %s798
        %p800 = scmp.lt.s32.totalorder %s30, 7
        %s801 = scalar_select %p800, %s30, 7
        %s802 = scalar_lea.vmem %s15, %s801
        %p803 = scmp.lt.s32.totalorder %s30, 7
        %s804 = scalar_select %p803, %s30, 7
        %s805 = smul.addr %s804, 8
        %s806 = smul.addr %s805, 4
        %s807 = scalar_lea.vmem %s16, %s806
        %p808 = scmp.lt.s32.totalorder %s30, 7
        %s809 = scalar_select %p808, %s30, 7
        %s810 = scalar_lea.vmem %s17, %s809
        %p812 = scmp.eq.s32.totalorder %s30, 0
        // Predicated region
        $region93: #{transformer_encoder_forward.1} parent=91 // pred_check
          %p813 = pneg %p812
        $region94: #{transformer_encoder_forward.1} parent=91 // pred_check_branch
          %815 = sbr.rel (%p813) target = $region96
        $region95: #{transformer_encoder_forward.1} parent=91 // pred_region
          %v816 = vld [vmem:[%s0] sm:$0xff]
          %v817 = vld [vmem:[%s0 + $0x8] sm:$0xff]
          %vm818 = vcmask 261120
          %819 = vst.msk [vmem:[#allocation2] sm:$0xff] %vm818, %v816
          %820 = vst.msk [vmem:[#allocation2 + $0x8] sm:$0xff] %vm818, %v817
        $region96: #{transformer_encoder_forward.1} parent=91 // pred_fallthru
          _
        %v821 = vld [vmem:[#allocation2] sm:$0xff]
        %v822 = vld [vmem:[#allocation2 + $0x8] sm:$0xff]
        %v823 = vld [vmem:[%s1] sm:$0xff]
        %v824 = vld [vmem:[%s1 + $0x8] sm:$0xff]
        %v825 = vld [vmem:[%s750] sm:$0x1]
        %v826 = vld [vmem:[%s753] sm:$0x1]
        %vm827 = vcmask 261120
        %v828 = vsel %vm827, %v821, 0.0
        %829 = vadd.xlane.f32.xlu0 %v828
        %v830 = vpop.xlane.xlu0 %829
        %v831 = vsel %vm827, %v822, 0.0
        %832 = vadd.xlane.f32.xlu0 %v831
        %v833 = vpop.xlane.xlu0 %832
        %v834 = vrcp.pop 32.0
        %v835 = vmul.f32 %v830, %v834
        %v836 = vmul.f32 %v833, %v834
        %v837 = vsub.f32 %v821, %v835
        %v838 = vsub.f32 %v822, %v836
        %v839 = vmul.f32 %v837, %v837
        %v840 = vmul.f32 %v838, %v838
        %v841 = vsel %vm827, %v839, 0.0
        %842 = vadd.xlane.f32.xlu0 %v841
        %v843 = vpop.xlane.xlu0 %842
        %v844 = vsel %vm827, %v840, 0.0
        %845 = vadd.xlane.f32.xlu0 %v844
        %v846 = vpop.xlane.xlu0 %845
        %v847 = vmul.f32 %v843, %v834
        %v848 = vmul.f32 %v846, %v834
        %v849 = vadd.f32 %v847, 1e-05
        %v850 = vadd.f32 %v848, 1e-05
        %v851 = vrsqrt.pop %v849
        %v852 = vrsqrt.pop %v850
        %v853 = vmul.f32 %v837, %v851
        %v854 = vmul.f32 %v838, %v852
        %v856 = vlaneseq
        %v857 = vshrl.u32 %v856, 7
        %v858 = vsub.s32 0, %v857
        %v859 = vrot.slane %v825, %v858
        %v861 = vmul.f32 %v853, %v859
        %v862 = vmul.f32 %v854, %v859
        %v864 = vlaneseq
        %v865 = vshrl.u32 %v864, 7
        %v866 = vsub.s32 0, %v865
        %v867 = vrot.slane %v826, %v866
        %v869 = vadd.f32 %v861, %v867
        %v870 = vadd.f32 %v862, %v867
        %v871 = vpack.c.bf16 %v870, %v869
        %v872 = vld [vmem:[%s758] sm:$0xf]
        %v873 = vld [vmem:[%s758 + $0x4] sm:$0xf]
        %v874 = vld [vmem:[%s758 + $0x8] sm:$0xf]
        %v875 = vld [vmem:[%s758 + $0xc] sm:$0xf]
        %v876 = vld [vmem:[%s772] sm:$0x1]
        %v878 = vlaneseq
        %v879 = vshrl.u32 %v878, 7
        %v880 = vsub.s32 0, %v879
        %v881 = vrot.slane %v876, %v880
        %v887 = vunpack.c.l.b16 %v872
        %v888 = vunpack.c.l.b16 %v873
        %v889 = vunpack.c.l.b16 %v874
        %v890 = vunpack.c.l.b16 %v875
        %v891 = vpack.c.b16 %v888, %v887
        %v892 = vpack.c.b16 %v890, %v889
        %v896 = vsel %vm827, %v871, 0
        %898 = vmatprep.subr.bf16.mxu0 0
        %899 = vmatpush1.bf16.msra.mxu0 0
        %900 = vmatprep.subr.bf16.mxu0 0
        %901 = vmatpush1.bf16.msra.mxu0 0
        %902 = vmatprep.subr.bf16.mxu0 0
        %903 = vmatpush1.bf16.msra.mxu0 0
        %904 = vmatprep.subr.bf16.mxu0 0
        %905 = vmatpush1.bf16.msra.mxu0 0
        %906 = vmatprep.subr.bf16.mxu0 0
        %907 = vmatpush1.bf16.msra.mxu0 0
        %908 = vmatprep.subr.bf16.mxu0 0
        %909 = vmatpush1.bf16.msra.mxu0 0
        %910 = vmatprep.subr.bf16.mxu0 0
        %911 = vmatpush1.bf16.msra.mxu0 %v892
        %912 = vmatprep.subr.bf16.mxu0 0
        %913 = vmatpush1.bf16.msra.mxu0 %v891
        %914 = vmatprep.subr.bf16.mxu0 0
        %915 = vmatpush2.bf16.msra.mxu0 0
        %916 = vmatprep.subr.bf16.mxu0 0
        %917 = vmatpush2.bf16.msra.mxu0 0
        %918 = vmatprep.subr.bf16.mxu0 0
        %919 = vmatpush2.bf16.msra.mxu0 0
        %920 = vmatprep.subr.bf16.mxu0 0
        %921 = vmatpush2.bf16.msra.mxu0 0
        %922 = vmatprep.subr.bf16.mxu0 0
        %923 = vmatpush2.bf16.msra.mxu0 0
        %924 = vmatprep.subr.bf16.mxu0 0
        %925 = vmatpush2.bf16.msra.mxu0 0
        %926 = vmatprep.subr.bf16.mxu0 0
        %927 = vmatpush2.bf16.msra.mxu0 0
        %928 = vmatprep.subr.bf16.mxu0 0
        %929 = vmatpush2.bf16.msra.mxu0 0
        %930 = vmatprep.mubr.bf16.mxu0 0
        %931 = vmatmul.mubr.bf16.gmra.mxu0 %v896
        %v932 = vpop.f32.mrf.mxu0
        %v933 = vadd.f32 %v881, %v932
        %v934 = vpop.f32.mrf.mxu0
        %v935 = vpop.f32.mrf.mxu0
        %v936 = vadd.f32 %v881, %v935
        %v937 = vpop.f32.mrf.mxu0
        %938 = vdwg.mxu0
        %v939 = vld [vmem:[%s763] sm:$0xf]
        %v940 = vld [vmem:[%s763 + $0x4] sm:$0xf]
        %v941 = vld [vmem:[%s763 + $0x8] sm:$0xf]
        %v942 = vld [vmem:[%s763 + $0xc] sm:$0xf]
        %v943 = vld [vmem:[%s776] sm:$0x1]
        %v945 = vlaneseq
        %v946 = vshrl.u32 %v945, 7
        %v947 = vsub.s32 0, %v946
        %v948 = vrot.slane %v943, %v947
        %v954 = vunpack.c.l.b16 %v939
        %v955 = vunpack.c.l.b16 %v940
        %v956 = vunpack.c.l.b16 %v941
        %v957 = vunpack.c.l.b16 %v942
        %v958 = vpack.c.b16 %v955, %v954
        %v959 = vpack.c.b16 %v957, %v956
        %962 = vmatprep.subr.bf16.mxu0 0
        %963 = vmatpush1.bf16.msra.mxu0 0
        %964 = vmatprep.subr.bf16.mxu0 0
        %965 = vmatpush1.bf16.msra.mxu0 0
        %966 = vmatprep.subr.bf16.mxu0 0
        %967 = vmatpush1.bf16.msra.mxu0 0
        %968 = vmatprep.subr.bf16.mxu0 0
        %969 = vmatpush1.bf16.msra.mxu0 0
        %970 = vmatprep.subr.bf16.mxu0 0
        %971 = vmatpush1.bf16.msra.mxu0 0
        %972 = vmatprep.subr.bf16.mxu0 0
        %973 = vmatpush1.bf16.msra.mxu0 0
        %974 = vmatprep.subr.bf16.mxu0 0
        %975 = vmatpush1.bf16.msra.mxu0 %v959
        %976 = vmatprep.subr.bf16.mxu0 0
        %977 = vmatpush1.bf16.msra.mxu0 %v958
        %978 = vmatprep.subr.bf16.mxu0 0
        %979 = vmatpush2.bf16.msra.mxu0 0
        %980 = vmatprep.subr.bf16.mxu0 0
        %981 = vmatpush2.bf16.msra.mxu0 0
        %982 = vmatprep.subr.bf16.mxu0 0
        %983 = vmatpush2.bf16.msra.mxu0 0
        %984 = vmatprep.subr.bf16.mxu0 0
        %985 = vmatpush2.bf16.msra.mxu0 0
        %986 = vmatprep.subr.bf16.mxu0 0
        %987 = vmatpush2.bf16.msra.mxu0 0
        %988 = vmatprep.subr.bf16.mxu0 0
        %989 = vmatpush2.bf16.msra.mxu0 0
        %990 = vmatprep.subr.bf16.mxu0 0
        %991 = vmatpush2.bf16.msra.mxu0 0
        %992 = vmatprep.subr.bf16.mxu0 0
        %993 = vmatpush2.bf16.msra.mxu0 0
        %994 = vmatprep.mubr.bf16.mxu0 0
        %995 = vmatmul.mubr.bf16.gmra.mxu0 %v896
        %v996 = vpop.f32.mrf.mxu0
        %v997 = vadd.f32 %v948, %v996
        %v998 = vpop.f32.mrf.mxu0
        %v999 = vpop.f32.mrf.mxu0
        %v1000 = vadd.f32 %v948, %v999
        %v1001 = vpop.f32.mrf.mxu0
        %1002 = vdwg.mxu0
        %v1003 = vld [vmem:[%s768] sm:$0xf]
        %v1004 = vld [vmem:[%s768 + $0x4] sm:$0xf]
        %v1005 = vld [vmem:[%s768 + $0x8] sm:$0xf]
        %v1006 = vld [vmem:[%s768 + $0xc] sm:$0xf]
        %v1007 = vld [vmem:[%s780] sm:$0x1]
        %v1009 = vlaneseq
        %v1010 = vshrl.u32 %v1009, 7
        %v1011 = vsub.s32 0, %v1010
        %v1012 = vrot.slane %v1007, %v1011
        %v1018 = vunpack.c.l.b16 %v1003
        %v1019 = vunpack.c.l.b16 %v1004
        %v1020 = vunpack.c.l.b16 %v1005
        %v1021 = vunpack.c.l.b16 %v1006
        %v1022 = vpack.c.b16 %v1019, %v1018
        %v1023 = vpack.c.b16 %v1021, %v1020
        %1026 = vmatprep.subr.bf16.mxu0 0
        %1027 = vmatpush1.bf16.msra.mxu0 0
        %1028 = vmatprep.subr.bf16.mxu0 0
        %1029 = vmatpush1.bf16.msra.mxu0 0
        %1030 = vmatprep.subr.bf16.mxu0 0
        %1031 = vmatpush1.bf16.msra.mxu0 0
        %1032 = vmatprep.subr.bf16.mxu0 0
        %1033 = vmatpush1.bf16.msra.mxu0 0
        %1034 = vmatprep.subr.bf16.mxu0 0
        %1035 = vmatpush1.bf16.msra.mxu0 0
        %1036 = vmatprep.subr.bf16.mxu0 0
        %1037 = vmatpush1.bf16.msra.mxu0 0
        %1038 = vmatprep.subr.bf16.mxu0 0
        %1039 = vmatpush1.bf16.msra.mxu0 %v1023
        %1040 = vmatprep.subr.bf16.mxu0 0
        %1041 = vmatpush1.bf16.msra.mxu0 %v1022
        %1042 = vmatprep.subr.bf16.mxu0 0
        %1043 = vmatpush2.bf16.msra.mxu0 0
        %1044 = vmatprep.subr.bf16.mxu0 0
        %1045 = vmatpush2.bf16.msra.mxu0 0
        %1046 = vmatprep.subr.bf16.mxu0 0
        %1047 = vmatpush2.bf16.msra.mxu0 0
        %1048 = vmatprep.subr.bf16.mxu0 0
        %1049 = vmatpush2.bf16.msra.mxu0 0
        %1050 = vmatprep.subr.bf16.mxu0 0
        %1051 = vmatpush2.bf16.msra.mxu0 0
        %1052 = vmatprep.subr.bf16.mxu0 0
        %1053 = vmatpush2.bf16.msra.mxu0 0
        %1054 = vmatprep.subr.bf16.mxu0 0
        %1055 = vmatpush2.bf16.msra.mxu0 0
        %1056 = vmatprep.subr.bf16.mxu0 0
        %1057 = vmatpush2.bf16.msra.mxu0 0
        %1058 = vmatprep.mubr.bf16.mxu0 0
        %1059 = vmatmul.mubr.bf16.gmra.mxu0 %v896
        %v1060 = vpop.f32.mrf.mxu0
        %v1061 = vadd.f32 %v1012, %v1060
        %v1062 = vpop.f32.mrf.mxu0
        %v1063 = vpop.f32.mrf.mxu0
        %v1064 = vadd.f32 %v1012, %v1063
        %v1065 = vpop.f32.mrf.mxu0
        %1066 = vdwg.mxu0
        %v1067 = vmul.f32 %v933, 0.35355338
        %v1068 = vmul.f32 %v936, 0.35355338
        %v1069 = vpack.c.bf16 %v1068, %v1067
        %v1070 = vpack.c.bf16 %v1000, %v997
        %vm1071 = vcmask 64512
        %v1073 = vsel %vm1071, %v1069, 0
        %v1076 = vsel %vm1071, %v1070, 0
        %1078 = vmatprep.subr.bf16.mxu0 0
        %1079 = vmatpush1.bf16.xpose.msra.mxu0 0
        %1080 = vmatprep.subr.bf16.mxu0 0
        %1081 = vmatpush1.bf16.xpose.msra.mxu0 0
        %1082 = vmatprep.subr.bf16.mxu0 0
        %1083 = vmatpush1.bf16.xpose.msra.mxu0 0
        %1084 = vmatprep.subr.bf16.mxu0 0
        %1085 = vmatpush1.bf16.xpose.msra.mxu0 0
        %1086 = vmatprep.subr.bf16.mxu0 0
        %1087 = vmatpush1.bf16.xpose.msra.mxu0 0
        %1088 = vmatprep.subr.bf16.mxu0 0
        %1089 = vmatpush1.bf16.xpose.msra.mxu0 0
        %1090 = vmatprep.subr.bf16.mxu0 0
        %1091 = vmatpush1.bf16.xpose.msra.mxu0 0
        %1092 = vmatprep.subr.bf16.mxu0 0
        %1093 = vmatpush1.bf16.xpose.msra.mxu0 %v1076
        %1094 = vmatprep.subr.bf16.mxu0 0
        %1095 = vmatpush2.bf16.xpose.msra.mxu0 0
        %1096 = vmatprep.subr.bf16.mxu0 0
        %1097 = vmatpush2.bf16.xpose.msra.mxu0 0
        %1098 = vmatprep.subr.bf16.mxu0 0
        %1099 = vmatpush2.bf16.xpose.msra.mxu0 0
        %1100 = vmatprep.subr.bf16.mxu0 0
        %1101 = vmatpush2.bf16.xpose.msra.mxu0 0
        %1102 = vmatprep.subr.bf16.mxu0 0
        %1103 = vmatpush2.bf16.xpose.msra.mxu0 0
        %1104 = vmatprep.subr.bf16.mxu0 0
        %1105 = vmatpush2.bf16.xpose.msra.mxu0 0
        %1106 = vmatprep.subr.bf16.mxu0 0
        %1107 = vmatpush2.bf16.xpose.msra.mxu0 0
        %1108 = vmatprep.subr.bf16.mxu0 0
        %1109 = vmatpush2.bf16.xpose.msra.mxu0 0
        %1110 = vmatprep.mubr.bf16.mxu0 0
        %1111 = vmatmul.mubr.bf16.gmra.mxu0 %v1073
        %v1112 = vpop.f32.mrf.mxu0
        %v1113 = vadd.f32 %v823, %v1112
        %v1114 = vpop.f32.mrf.mxu0
        %v1115 = vpop.f32.mrf.mxu0
        %v1116 = vadd.f32 %v824, %v1115
        %v1117 = vpop.f32.mrf.mxu0
        %1118 = vdwg.mxu0
        %vm1119 = vcmask 130048
        %v1120 = vsel %vm1119, %v1113, -inf
        %1121 = vmax.xlane.f32.xlu0 %v1120
        %v1122 = vpop.xlane.xlu0 %1121
        %v1123 = vsel %vm1119, %v1116, -inf
        %1124 = vmax.xlane.f32.xlu0 %v1123
        %v1125 = vpop.xlane.xlu0 %1124
        %v1126 = vsub.f32 %v1113, %v1122
        %v1127 = vsub.f32 %v1116, %v1125
        %v1128 = vmul.f32 %v1126, 1.442695
        %v1129 = vpow.pop %v1128
        %v1130 = vmul.f32 %v1127, 1.442695
        %v1131 = vpow.pop %v1130
        %v1132 = vsel %vm1119, %v1129, 0.0
        %1133 = vadd.xlane.f32.xlu0 %v1132
        %v1134 = vpop.xlane.xlu0 %1133
        %v1135 = vsel %vm1119, %v1131, 0.0
        %1136 = vadd.xlane.f32.xlu0 %v1135
        %v1137 = vpop.xlane.xlu0 %1136
        %v1138 = vrcp.pop %v1134
        %v1139 = vrcp.pop %v1137
        %v1140 = vmul.f32 %v1129, %v1138
        %v1141 = vmul.f32 %v1131, %v1139
        %v1142 = vpack.c.bf16 %v1141, %v1140
        %v1143 = vpack.c.bf16 %v1064, %v1061
        %v1145 = vsel %vm1119, %v1142, 0
        %1147 = vmatprep.subr.bf16.mxu0 0
        %1148 = vmatpush1.bf16.msra.mxu0 0
        %1149 = vmatprep.subr.bf16.mxu0 0
        %1150 = vmatpush1.bf16.msra.mxu0 0
        %1151 = vmatprep.subr.bf16.mxu0 0
        %1152 = vmatpush1.bf16.msra.mxu0 0
        %1153 = vmatprep.subr.bf16.mxu0 0
        %1154 = vmatpush1.bf16.msra.mxu0 0
        %1155 = vmatprep.subr.bf16.mxu0 0
        %1156 = vmatpush1.bf16.msra.mxu0 0
        %1157 = vmatprep.subr.bf16.mxu0 0
        %1158 = vmatpush1.bf16.msra.mxu0 0
        %1159 = vmatprep.subr.bf16.mxu0 0
        %1160 = vmatpush1.bf16.msra.mxu0 0
        %1161 = vmatprep.subr.bf16.mxu0 0
        %1162 = vmatpush1.bf16.msra.mxu0 %v1143
        %1163 = vmatprep.subr.bf16.mxu0 0
        %1164 = vmatpush2.bf16.msra.mxu0 0
        %1165 = vmatprep.subr.bf16.mxu0 0
        %1166 = vmatpush2.bf16.msra.mxu0 0
        %1167 = vmatprep.subr.bf16.mxu0 0
        %1168 = vmatpush2.bf16.msra.mxu0 0
        %1169 = vmatprep.subr.bf16.mxu0 0
        %1170 = vmatpush2.bf16.msra.mxu0 0
        %1171 = vmatprep.subr.bf16.mxu0 0
        %1172 = vmatpush2.bf16.msra.mxu0 0
        %1173 = vmatprep.subr.bf16.mxu0 0
        %1174 = vmatpush2.bf16.msra.mxu0 0
        %1175 = vmatprep.subr.bf16.mxu0 0
        %1176 = vmatpush2.bf16.msra.mxu0 0
        %1177 = vmatprep.subr.bf16.mxu0 0
        %1178 = vmatpush2.bf16.msra.mxu0 0
        %1179 = vmatprep.mubr.bf16.mxu0 0
        %1180 = vmatmul.mubr.bf16.gmra.mxu0 %v1145
        %v1181 = vpop.f32.mrf.mxu0
        %v1182 = vadd.f32 0.0, %v1181
        %v1183 = vpop.f32.mrf.mxu0
        %v1184 = vpop.f32.mrf.mxu0
        %v1185 = vadd.f32 0.0, %v1184
        %v1186 = vpop.f32.mrf.mxu0
        %1187 = vdwg.mxu0
        %v1188 = vpack.c.bf16 %v1185, %v1182
        %v1189 = vld [vmem:[%s785] sm:$0xf]
        %s1190 = scalar_lea.vmem %s758, 16
        %v1191 = vld [vmem:[%s1190] sm:$0xf]
        %v1192 = vld [vmem:[%s1190 + $0x4] sm:$0xf]
        %v1193 = vld [vmem:[%s1190 + $0x8] sm:$0xf]
        %v1194 = vld [vmem:[%s1190 + $0xc] sm:$0xf]
        %s1195 = scalar_lea.vmem %s772, 1
        %v1196 = vld [vmem:[%s1195] sm:$0x1]
        %v1198 = vlaneseq
        %v1199 = vshrl.u32 %v1198, 7
        %v1200 = vsub.s32 0, %v1199
        %v1201 = vrot.slane %v1196, %v1200
        %v1207 = vunpack.c.l.b16 %v1191
        %v1208 = vunpack.c.l.b16 %v1192
        %v1209 = vunpack.c.l.b16 %v1193
        %v1210 = vunpack.c.l.b16 %v1194
        %v1211 = vpack.c.b16 %v1208, %v1207
        %v1212 = vpack.c.b16 %v1210, %v1209
        %1215 = vmatprep.subr.bf16.mxu0 0
        %1216 = vmatpush1.bf16.msra.mxu0 0
        %1217 = vmatprep.subr.bf16.mxu0 0
        %1218 = vmatpush1.bf16.msra.mxu0 0
        %1219 = vmatprep.subr.bf16.mxu0 0
        %1220 = vmatpush1.bf16.msra.mxu0 0
        %1221 = vmatprep.subr.bf16.mxu0 0
        %1222 = vmatpush1.bf16.msra.mxu0 0
        %1223 = vmatprep.subr.bf16.mxu0 0
        %1224 = vmatpush1.bf16.msra.mxu0 0
        %1225 = vmatprep.subr.bf16.mxu0 0
        %1226 = vmatpush1.bf16.msra.mxu0 0
        %1227 = vmatprep.subr.bf16.mxu0 0
        %1228 = vmatpush1.bf16.msra.mxu0 %v1212
        %1229 = vmatprep.subr.bf16.mxu0 0
        %1230 = vmatpush1.bf16.msra.mxu0 %v1211
        %1231 = vmatprep.subr.bf16.mxu0 0
        %1232 = vmatpush2.bf16.msra.mxu0 0
        %1233 = vmatprep.subr.bf16.mxu0 0
        %1234 = vmatpush2.bf16.msra.mxu0 0
        %1235 = vmatprep.subr.bf16.mxu0 0
        %1236 = vmatpush2.bf16.msra.mxu0 0
        %1237 = vmatprep.subr.bf16.mxu0 0
        %1238 = vmatpush2.bf16.msra.mxu0 0
        %1239 = vmatprep.subr.bf16.mxu0 0
        %1240 = vmatpush2.bf16.msra.mxu0 0
        %1241 = vmatprep.subr.bf16.mxu0 0
        %1242 = vmatpush2.bf16.msra.mxu0 0
        %1243 = vmatprep.subr.bf16.mxu0 0
        %1244 = vmatpush2.bf16.msra.mxu0 0
        %1245 = vmatprep.subr.bf16.mxu0 0
        %1246 = vmatpush2.bf16.msra.mxu0 0
        %1247 = vmatprep.mubr.bf16.mxu0 0
        %1248 = vmatmul.mubr.bf16.gmra.mxu0 %v896
        %v1249 = vpop.f32.mrf.mxu0
        %v1250 = vadd.f32 %v1201, %v1249
        %v1251 = vpop.f32.mrf.mxu0
        %v1252 = vpop.f32.mrf.mxu0
        %v1253 = vadd.f32 %v1201, %v1252
        %v1254 = vpop.f32.mrf.mxu0
        %1255 = vdwg.mxu0
        %s1256 = scalar_lea.vmem %s763, 16
        %v1257 = vld [vmem:[%s1256] sm:$0xf]
        %v1258 = vld [vmem:[%s1256 + $0x4] sm:$0xf]
        %v1259 = vld [vmem:[%s1256 + $0x8] sm:$0xf]
        %v1260 = vld [vmem:[%s1256 + $0xc] sm:$0xf]
        %s1261 = scalar_lea.vmem %s776, 1
        %v1262 = vld [vmem:[%s1261] sm:$0x1]
        %v1264 = vlaneseq
        %v1265 = vshrl.u32 %v1264, 7
        %v1266 = vsub.s32 0, %v1265
        %v1267 = vrot.slane %v1262, %v1266
        %v1273 = vunpack.c.l.b16 %v1257
        %v1274 = vunpack.c.l.b16 %v1258
        %v1275 = vunpack.c.l.b16 %v1259
        %v1276 = vunpack.c.l.b16 %v1260
        %v1277 = vpack.c.b16 %v1274, %v1273
        %v1278 = vpack.c.b16 %v1276, %v1275
        %1281 = vmatprep.subr.bf16.mxu0 0
        %1282 = vmatpush1.bf16.msra.mxu0 0
        %1283 = vmatprep.subr.bf16.mxu0 0
        %1284 = vmatpush1.bf16.msra.mxu0 0
        %1285 = vmatprep.subr.bf16.mxu0 0
        %1286 = vmatpush1.bf16.msra.mxu0 0
        %1287 = vmatprep.subr.bf16.mxu0 0
        %1288 = vmatpush1.bf16.msra.mxu0 0
        %1289 = vmatprep.subr.bf16.mxu0 0
        %1290 = vmatpush1.bf16.msra.mxu0 0
        %1291 = vmatprep.subr.bf16.mxu0 0
        %1292 = vmatpush1.bf16.msra.mxu0 0
        %1293 = vmatprep.subr.bf16.mxu0 0
        %1294 = vmatpush1.bf16.msra.mxu0 %v1278
        %1295 = vmatprep.subr.bf16.mxu0 0
        %1296 = vmatpush1.bf16.msra.mxu0 %v1277
        %1297 = vmatprep.subr.bf16.mxu0 0
        %1298 = vmatpush2.bf16.msra.mxu0 0
        %1299 = vmatprep.subr.bf16.mxu0 0
        %1300 = vmatpush2.bf16.msra.mxu0 0
        %1301 = vmatprep.subr.bf16.mxu0 0
        %1302 = vmatpush2.bf16.msra.mxu0 0
        %1303 = vmatprep.subr.bf16.mxu0 0
        %1304 = vmatpush2.bf16.msra.mxu0 0
        %1305 = vmatprep.subr.bf16.mxu0 0
        %1306 = vmatpush2.bf16.msra.mxu0 0
        %1307 = vmatprep.subr.bf16.mxu0 0
        %1308 = vmatpush2.bf16.msra.mxu0 0
        %1309 = vmatprep.subr.bf16.mxu0 0
        %1310 = vmatpush2.bf16.msra.mxu0 0
        %1311 = vmatprep.subr.bf16.mxu0 0
        %1312 = vmatpush2.bf16.msra.mxu0 0
        %1313 = vmatprep.mubr.bf16.mxu0 0
        %1314 = vmatmul.mubr.bf16.gmra.mxu0 %v896
        %v1315 = vpop.f32.mrf.mxu0
        %v1316 = vadd.f32 %v1267, %v1315
        %v1317 = vpop.f32.mrf.mxu0
        %v1318 = vpop.f32.mrf.mxu0
        %v1319 = vadd.f32 %v1267, %v1318
        %v1320 = vpop.f32.mrf.mxu0
        %1321 = vdwg.mxu0
        %s1322 = scalar_lea.vmem %s768, 16
        %v1323 = vld [vmem:[%s1322] sm:$0xf]
        %v1324 = vld [vmem:[%s1322 + $0x4] sm:$0xf]
        %v1325 = vld [vmem:[%s1322 + $0x8] sm:$0xf]
        %v1326 = vld [vmem:[%s1322 + $0xc] sm:$0xf]
        %s1327 = scalar_lea.vmem %s780, 1
        %v1328 = vld [vmem:[%s1327] sm:$0x1]
        %v1330 = vlaneseq
        %v1331 = vshrl.u32 %v1330, 7
        %v1332 = vsub.s32 0, %v1331
        %v1333 = vrot.slane %v1328, %v1332
        %v1339 = vunpack.c.l.b16 %v1323
        %v1340 = vunpack.c.l.b16 %v1324
        %v1341 = vunpack.c.l.b16 %v1325
        %v1342 = vunpack.c.l.b16 %v1326
        %v1343 = vpack.c.b16 %v1340, %v1339
        %v1344 = vpack.c.b16 %v1342, %v1341
        %1347 = vmatprep.subr.bf16.mxu0 0
        %1348 = vmatpush1.bf16.msra.mxu0 0
        %1349 = vmatprep.subr.bf16.mxu0 0
        %1350 = vmatpush1.bf16.msra.mxu0 0
        %1351 = vmatprep.subr.bf16.mxu0 0
        %1352 = vmatpush1.bf16.msra.mxu0 0
        %1353 = vmatprep.subr.bf16.mxu0 0
        %1354 = vmatpush1.bf16.msra.mxu0 0
        %1355 = vmatprep.subr.bf16.mxu0 0
        %1356 = vmatpush1.bf16.msra.mxu0 0
        %1357 = vmatprep.subr.bf16.mxu0 0
        %1358 = vmatpush1.bf16.msra.mxu0 0
        %1359 = vmatprep.subr.bf16.mxu0 0
        %1360 = vmatpush1.bf16.msra.mxu0 %v1344
        %1361 = vmatprep.subr.bf16.mxu0 0
        %1362 = vmatpush1.bf16.msra.mxu0 %v1343
        %1363 = vmatprep.subr.bf16.mxu0 0
        %1364 = vmatpush2.bf16.msra.mxu0 0
        %1365 = vmatprep.subr.bf16.mxu0 0
        %1366 = vmatpush2.bf16.msra.mxu0 0
        %1367 = vmatprep.subr.bf16.mxu0 0
        %1368 = vmatpush2.bf16.msra.mxu0 0
        %1369 = vmatprep.subr.bf16.mxu0 0
        %1370 = vmatpush2.bf16.msra.mxu0 0
        %1371 = vmatprep.subr.bf16.mxu0 0
        %1372 = vmatpush2.bf16.msra.mxu0 0
        %1373 = vmatprep.subr.bf16.mxu0 0
        %1374 = vmatpush2.bf16.msra.mxu0 0
        %1375 = vmatprep.subr.bf16.mxu0 0
        %1376 = vmatpush2.bf16.msra.mxu0 0
        %1377 = vmatprep.subr.bf16.mxu0 0
        %1378 = vmatpush2.bf16.msra.mxu0 0
        %1379 = vmatprep.mubr.bf16.mxu0 0
        %1380 = vmatmul.mubr.bf16.gmra.mxu0 %v896
        %v1381 = vpop.f32.mrf.mxu0
        %v1382 = vadd.f32 %v1333, %v1381
        %v1383 = vpop.f32.mrf.mxu0
        %v1384 = vpop.f32.mrf.mxu0
        %v1385 = vadd.f32 %v1333, %v1384
        %v1386 = vpop.f32.mrf.mxu0
        %1387 = vdwg.mxu0
        %v1388 = vmul.f32 %v1250, 0.35355338
        %v1389 = vmul.f32 %v1253, 0.35355338
        %v1390 = vpack.c.bf16 %v1389, %v1388
        %v1391 = vpack.c.bf16 %v1319, %v1316
        %v1393 = vsel %vm1071, %v1390, 0
        %v1396 = vsel %vm1071, %v1391, 0
        %1398 = vmatprep.subr.bf16.mxu0 0
        %1399 = vmatpush1.bf16.xpose.msra.mxu0 0
        %1400 = vmatprep.subr.bf16.mxu0 0
        %1401 = vmatpush1.bf16.xpose.msra.mxu0 0
        %1402 = vmatprep.subr.bf16.mxu0 0
        %1403 = vmatpush1.bf16.xpose.msra.mxu0 0
        %1404 = vmatprep.subr.bf16.mxu0 0
        %1405 = vmatpush1.bf16.xpose.msra.mxu0 0
        %1406 = vmatprep.subr.bf16.mxu0 0
        %1407 = vmatpush1.bf16.xpose.msra.mxu0 0
        %1408 = vmatprep.subr.bf16.mxu0 0
        %1409 = vmatpush1.bf16.xpose.msra.mxu0 0
        %1410 = vmatprep.subr.bf16.mxu0 0
        %1411 = vmatpush1.bf16.xpose.msra.mxu0 0
        %1412 = vmatprep.subr.bf16.mxu0 0
        %1413 = vmatpush1.bf16.xpose.msra.mxu0 %v1396
        %1414 = vmatprep.subr.bf16.mxu0 0
        %1415 = vmatpush2.bf16.xpose.msra.mxu0 0
        %1416 = vmatprep.subr.bf16.mxu0 0
        %1417 = vmatpush2.bf16.xpose.msra.mxu0 0
        %1418 = vmatprep.subr.bf16.mxu0 0
        %1419 = vmatpush2.bf16.xpose.msra.mxu0 0
        %1420 = vmatprep.subr.bf16.mxu0 0
        %1421 = vmatpush2.bf16.xpose.msra.mxu0 0
        %1422 = vmatprep.subr.bf16.mxu0 0
        %1423 = vmatpush2.bf16.xpose.msra.mxu0 0
        %1424 = vmatprep.subr.bf16.mxu0 0
        %1425 = vmatpush2.bf16.xpose.msra.mxu0 0
        %1426 = vmatprep.subr.bf16.mxu0 0
        %1427 = vmatpush2.bf16.xpose.msra.mxu0 0
        %1428 = vmatprep.subr.bf16.mxu0 0
        %1429 = vmatpush2.bf16.xpose.msra.mxu0 0
        %1430 = vmatprep.mubr.bf16.mxu0 0
        %1431 = vmatmul.mubr.bf16.gmra.mxu0 %v1393
        %v1432 = vpop.f32.mrf.mxu0
        %v1433 = vadd.f32 %v823, %v1432
        %v1434 = vpop.f32.mrf.mxu0
        %v1435 = vpop.f32.mrf.mxu0
        %v1436 = vadd.f32 %v824, %v1435
        %v1437 = vpop.f32.mrf.mxu0
        %1438 = vdwg.mxu0
        %v1439 = vsel %vm1119, %v1433, -inf
        %1440 = vmax.xlane.f32.xlu0 %v1439
        %v1441 = vpop.xlane.xlu0 %1440
        %v1442 = vsel %vm1119, %v1436, -inf
        %1443 = vmax.xlane.f32.xlu0 %v1442
        %v1444 = vpop.xlane.xlu0 %1443
        %v1445 = vsub.f32 %v1433, %v1441
        %v1446 = vsub.f32 %v1436, %v1444
        %v1447 = vmul.f32 %v1445, 1.442695
        %v1448 = vpow.pop %v1447
        %v1449 = vmul.f32 %v1446, 1.442695
        %v1450 = vpow.pop %v1449
        %v1451 = vsel %vm1119, %v1448, 0.0
        %1452 = vadd.xlane.f32.xlu0 %v1451
        %v1453 = vpop.xlane.xlu0 %1452
        %v1454 = vsel %vm1119, %v1450, 0.0
        %1455 = vadd.xlane.f32.xlu0 %v1454
        %v1456 = vpop.xlane.xlu0 %1455
        %v1457 = vrcp.pop %v1453
        %v1458 = vrcp.pop %v1456
        %v1459 = vmul.f32 %v1448, %v1457
        %v1460 = vmul.f32 %v1450, %v1458
        %v1461 = vpack.c.bf16 %v1460, %v1459
        %v1462 = vpack.c.bf16 %v1385, %v1382
        %v1464 = vsel %vm1119, %v1461, 0
        %1466 = vmatprep.subr.bf16.mxu0 0
        %1467 = vmatpush1.bf16.msra.mxu0 0
        %1468 = vmatprep.subr.bf16.mxu0 0
        %1469 = vmatpush1.bf16.msra.mxu0 0
        %1470 = vmatprep.subr.bf16.mxu0 0
        %1471 = vmatpush1.bf16.msra.mxu0 0
        %1472 = vmatprep.subr.bf16.mxu0 0
        %1473 = vmatpush1.bf16.msra.mxu0 0
        %1474 = vmatprep.subr.bf16.mxu0 0
        %1475 = vmatpush1.bf16.msra.mxu0 0
        %1476 = vmatprep.subr.bf16.mxu0 0
        %1477 = vmatpush1.bf16.msra.mxu0 0
        %1478 = vmatprep.subr.bf16.mxu0 0
        %1479 = vmatpush1.bf16.msra.mxu0 0
        %1480 = vmatprep.subr.bf16.mxu0 0
        %1481 = vmatpush1.bf16.msra.mxu0 %v1462
        %1482 = vmatprep.subr.bf16.mxu0 0
        %1483 = vmatpush2.bf16.msra.mxu0 0
        %1484 = vmatprep.subr.bf16.mxu0 0
        %1485 = vmatpush2.bf16.msra.mxu0 0
        %1486 = vmatprep.subr.bf16.mxu0 0
        %1487 = vmatpush2.bf16.msra.mxu0 0
        %1488 = vmatprep.subr.bf16.mxu0 0
        %1489 = vmatpush2.bf16.msra.mxu0 0
        %1490 = vmatprep.subr.bf16.mxu0 0
        %1491 = vmatpush2.bf16.msra.mxu0 0
        %1492 = vmatprep.subr.bf16.mxu0 0
        %1493 = vmatpush2.bf16.msra.mxu0 0
        %1494 = vmatprep.subr.bf16.mxu0 0
        %1495 = vmatpush2.bf16.msra.mxu0 0
        %1496 = vmatprep.subr.bf16.mxu0 0
        %1497 = vmatpush2.bf16.msra.mxu0 0
        %1498 = vmatprep.mubr.bf16.mxu0 0
        %1499 = vmatmul.mubr.bf16.gmra.mxu0 %v1464
        %v1500 = vpop.f32.mrf.mxu0
        %v1501 = vadd.f32 0.0, %v1500
        %v1502 = vpop.f32.mrf.mxu0
        %v1503 = vpop.f32.mrf.mxu0
        %v1504 = vadd.f32 0.0, %v1503
        %v1505 = vpop.f32.mrf.mxu0
        %1506 = vdwg.mxu0
        %v1507 = vpack.c.bf16 %v1504, %v1501
        %s1508 = scalar_lea.vmem %s785, 4
        %v1509 = vld [vmem:[%s1508] sm:$0xf]
        %v1511 = vsel %vm1071, %v1507, 0
        %vm1513 = vcmask 1043456
        %v1515 = vsel %vm1513, %v1509, 0
        %1517 = vmatprep.subr.bf16.mxu0 0
        %1518 = vmatpush1.bf16.msra.mxu0 0
        %1519 = vmatprep.subr.bf16.mxu0 0
        %1520 = vmatpush1.bf16.msra.mxu0 0
        %1521 = vmatprep.subr.bf16.mxu0 0
        %1522 = vmatpush1.bf16.msra.mxu0 0
        %1523 = vmatprep.subr.bf16.mxu0 0
        %1524 = vmatpush1.bf16.msra.mxu0 0
        %1525 = vmatprep.subr.bf16.mxu0 0
        %1526 = vmatpush1.bf16.msra.mxu0 0
        %1527 = vmatprep.subr.bf16.mxu0 0
        %1528 = vmatpush1.bf16.msra.mxu0 0
        %1529 = vmatprep.subr.bf16.mxu0 0
        %1530 = vmatpush1.bf16.msra.mxu0 0
        %1531 = vmatprep.subr.bf16.mxu0 0
        %1532 = vmatpush1.bf16.msra.mxu0 %v1515
        %1533 = vmatprep.subr.bf16.mxu0 0
        %1534 = vmatpush2.bf16.msra.mxu0 0
        %1535 = vmatprep.subr.bf16.mxu0 0
        %1536 = vmatpush2.bf16.msra.mxu0 0
        %1537 = vmatprep.subr.bf16.mxu0 0
        %1538 = vmatpush2.bf16.msra.mxu0 0
        %1539 = vmatprep.subr.bf16.mxu0 0
        %1540 = vmatpush2.bf16.msra.mxu0 0
        %1541 = vmatprep.subr.bf16.mxu0 0
        %1542 = vmatpush2.bf16.msra.mxu0 0
        %1543 = vmatprep.subr.bf16.mxu0 0
        %1544 = vmatpush2.bf16.msra.mxu0 0
        %1545 = vmatprep.subr.bf16.mxu0 0
        %1546 = vmatpush2.bf16.msra.mxu0 0
        %1547 = vmatprep.subr.bf16.mxu0 0
        %1548 = vmatpush2.bf16.msra.mxu0 0
        %1549 = vmatprep.mubr.bf16.mxu0 0
        %1550 = vmatmul.mubr.bf16.gmra.mxu0 %v1511
        %v1551 = vpop.f32.mrf.mxu0
        %v1552 = vadd.f32 0.0, %v1551
        %v1553 = vpop.f32.mrf.mxu0
        %v1554 = vpop.f32.mrf.mxu0
        %v1555 = vadd.f32 0.0, %v1554
        %v1556 = vpop.f32.mrf.mxu0
        %1557 = vdwg.mxu0
        %v1559 = vsel %vm1071, %v1188, 0
        %v1562 = vsel %vm1513, %v1189, 0
        %1564 = vmatprep.subr.bf16.mxu0 0
        %1565 = vmatpush1.bf16.msra.mxu0 0
        %1566 = vmatprep.subr.bf16.mxu0 0
        %1567 = vmatpush1.bf16.msra.mxu0 0
        %1568 = vmatprep.subr.bf16.mxu0 0
        %1569 = vmatpush1.bf16.msra.mxu0 0
        %1570 = vmatprep.subr.bf16.mxu0 0
        %1571 = vmatpush1.bf16.msra.mxu0 0
        %1572 = vmatprep.subr.bf16.mxu0 0
        %1573 = vmatpush1.bf16.msra.mxu0 0
        %1574 = vmatprep.subr.bf16.mxu0 0
        %1575 = vmatpush1.bf16.msra.mxu0 0
        %1576 = vmatprep.subr.bf16.mxu0 0
        %1577 = vmatpush1.bf16.msra.mxu0 0
        %1578 = vmatprep.subr.bf16.mxu0 0
        %1579 = vmatpush1.bf16.msra.mxu0 %v1562
        %1580 = vmatprep.subr.bf16.mxu0 0
        %1581 = vmatpush2.bf16.msra.mxu0 0
        %1582 = vmatprep.subr.bf16.mxu0 0
        %1583 = vmatpush2.bf16.msra.mxu0 0
        %1584 = vmatprep.subr.bf16.mxu0 0
        %1585 = vmatpush2.bf16.msra.mxu0 0
        %1586 = vmatprep.subr.bf16.mxu0 0
        %1587 = vmatpush2.bf16.msra.mxu0 0
        %1588 = vmatprep.subr.bf16.mxu0 0
        %1589 = vmatpush2.bf16.msra.mxu0 0
        %1590 = vmatprep.subr.bf16.mxu0 0
        %1591 = vmatpush2.bf16.msra.mxu0 0
        %1592 = vmatprep.subr.bf16.mxu0 0
        %1593 = vmatpush2.bf16.msra.mxu0 0
        %1594 = vmatprep.subr.bf16.mxu0 0
        %1595 = vmatpush2.bf16.msra.mxu0 0
        %1596 = vmatprep.mubr.bf16.mxu0 0
        %1597 = vmatmul.mubr.bf16.gmra.mxu0 %v1559
        %v1598 = vpop.f32.mrf.mxu0
        %v1599 = vadd.f32 %v1552, %v1598
        %v1600 = vpop.f32.mrf.mxu0
        %v1601 = vpop.f32.mrf.mxu0
        %v1602 = vadd.f32 %v1555, %v1601
        %v1603 = vpop.f32.mrf.mxu0
        %1604 = vdwg.mxu0
        %s1605 = scalar_lea.vmem %s758, 32
        %v1606 = vld [vmem:[%s1605] sm:$0xf]
        %v1607 = vld [vmem:[%s1605 + $0x4] sm:$0xf]
        %v1608 = vld [vmem:[%s1605 + $0x8] sm:$0xf]
        %v1609 = vld [vmem:[%s1605 + $0xc] sm:$0xf]
        %s1610 = scalar_lea.vmem %s772, 2
        %v1611 = vld [vmem:[%s1610] sm:$0x1]
        %v1613 = vlaneseq
        %v1614 = vshrl.u32 %v1613, 7
        %v1615 = vsub.s32 0, %v1614
        %v1616 = vrot.slane %v1611, %v1615
        %v1622 = vunpack.c.l.b16 %v1606
        %v1623 = vunpack.c.l.b16 %v1607
        %v1624 = vunpack.c.l.b16 %v1608
        %v1625 = vunpack.c.l.b16 %v1609
        %v1626 = vpack.c.b16 %v1623, %v1622
        %v1627 = vpack.c.b16 %v1625, %v1624
        %1630 = vmatprep.subr.bf16.mxu0 0
        %1631 = vmatpush1.bf16.msra.mxu0 0
        %1632 = vmatprep.subr.bf16.mxu0 0
        %1633 = vmatpush1.bf16.msra.mxu0 0
        %1634 = vmatprep.subr.bf16.mxu0 0
        %1635 = vmatpush1.bf16.msra.mxu0 0
        %1636 = vmatprep.subr.bf16.mxu0 0
        %1637 = vmatpush1.bf16.msra.mxu0 0
        %1638 = vmatprep.subr.bf16.mxu0 0
        %1639 = vmatpush1.bf16.msra.mxu0 0
        %1640 = vmatprep.subr.bf16.mxu0 0
        %1641 = vmatpush1.bf16.msra.mxu0 0
        %1642 = vmatprep.subr.bf16.mxu0 0
        %1643 = vmatpush1.bf16.msra.mxu0 %v1627
        %1644 = vmatprep.subr.bf16.mxu0 0
        %1645 = vmatpush1.bf16.msra.mxu0 %v1626
        %1646 = vmatprep.subr.bf16.mxu0 0
        %1647 = vmatpush2.bf16.msra.mxu0 0
        %1648 = vmatprep.subr.bf16.mxu0 0
        %1649 = vmatpush2.bf16.msra.mxu0 0
        %1650 = vmatprep.subr.bf16.mxu0 0
        %1651 = vmatpush2.bf16.msra.mxu0 0
        %1652 = vmatprep.subr.bf16.mxu0 0
        %1653 = vmatpush2.bf16.msra.mxu0 0
        %1654 = vmatprep.subr.bf16.mxu0 0
        %1655 = vmatpush2.bf16.msra.mxu0 0
        %1656 = vmatprep.subr.bf16.mxu0 0
        %1657 = vmatpush2.bf16.msra.mxu0 0
        %1658 = vmatprep.subr.bf16.mxu0 0
        %1659 = vmatpush2.bf16.msra.mxu0 0
        %1660 = vmatprep.subr.bf16.mxu0 0
        %1661 = vmatpush2.bf16.msra.mxu0 0
        %1662 = vmatprep.mubr.bf16.mxu0 0
        %1663 = vmatmul.mubr.bf16.gmra.mxu0 %v896
        %v1664 = vpop.f32.mrf.mxu0
        %v1665 = vadd.f32 %v1616, %v1664
        %v1666 = vpop.f32.mrf.mxu0
        %v1667 = vpop.f32.mrf.mxu0
        %v1668 = vadd.f32 %v1616, %v1667
        %v1669 = vpop.f32.mrf.mxu0
        %1670 = vdwg.mxu0
        %s1671 = scalar_lea.vmem %s763, 32
        %v1672 = vld [vmem:[%s1671] sm:$0xf]
        %v1673 = vld [vmem:[%s1671 + $0x4] sm:$0xf]
        %v1674 = vld [vmem:[%s1671 + $0x8] sm:$0xf]
        %v1675 = vld [vmem:[%s1671 + $0xc] sm:$0xf]
        %s1676 = scalar_lea.vmem %s776, 2
        %v1677 = vld [vmem:[%s1676] sm:$0x1]
        %v1679 = vlaneseq
        %v1680 = vshrl.u32 %v1679, 7
        %v1681 = vsub.s32 0, %v1680
        %v1682 = vrot.slane %v1677, %v1681
        %v1688 = vunpack.c.l.b16 %v1672
        %v1689 = vunpack.c.l.b16 %v1673
        %v1690 = vunpack.c.l.b16 %v1674
        %v1691 = vunpack.c.l.b16 %v1675
        %v1692 = vpack.c.b16 %v1689, %v1688
        %v1693 = vpack.c.b16 %v1691, %v1690
        %1696 = vmatprep.subr.bf16.mxu0 0
        %1697 = vmatpush1.bf16.msra.mxu0 0
        %1698 = vmatprep.subr.bf16.mxu0 0
        %1699 = vmatpush1.bf16.msra.mxu0 0
        %1700 = vmatprep.subr.bf16.mxu0 0
        %1701 = vmatpush1.bf16.msra.mxu0 0
        %1702 = vmatprep.subr.bf16.mxu0 0
        %1703 = vmatpush1.bf16.msra.mxu0 0
        %1704 = vmatprep.subr.bf16.mxu0 0
        %1705 = vmatpush1.bf16.msra.mxu0 0
        %1706 = vmatprep.subr.bf16.mxu0 0
        %1707 = vmatpush1.bf16.msra.mxu0 0
        %1708 = vmatprep.subr.bf16.mxu0 0
        %1709 = vmatpush1.bf16.msra.mxu0 %v1693
        %1710 = vmatprep.subr.bf16.mxu0 0
        %1711 = vmatpush1.bf16.msra.mxu0 %v1692
        %1712 = vmatprep.subr.bf16.mxu0 0
        %1713 = vmatpush2.bf16.msra.mxu0 0
        %1714 = vmatprep.subr.bf16.mxu0 0
        %1715 = vmatpush2.bf16.msra.mxu0 0
        %1716 = vmatprep.subr.bf16.mxu0 0
        %1717 = vmatpush2.bf16.msra.mxu0 0
        %1718 = vmatprep.subr.bf16.mxu0 0
        %1719 = vmatpush2.bf16.msra.mxu0 0
        %1720 = vmatprep.subr.bf16.mxu0 0
        %1721 = vmatpush2.bf16.msra.mxu0 0
        %1722 = vmatprep.subr.bf16.mxu0 0
        %1723 = vmatpush2.bf16.msra.mxu0 0
        %1724 = vmatprep.subr.bf16.mxu0 0
        %1725 = vmatpush2.bf16.msra.mxu0 0
        %1726 = vmatprep.subr.bf16.mxu0 0
        %1727 = vmatpush2.bf16.msra.mxu0 0
        %1728 = vmatprep.mubr.bf16.mxu0 0
        %1729 = vmatmul.mubr.bf16.gmra.mxu0 %v896
        %v1730 = vpop.f32.mrf.mxu0
        %v1731 = vadd.f32 %v1682, %v1730
        %v1732 = vpop.f32.mrf.mxu0
        %v1733 = vpop.f32.mrf.mxu0
        %v1734 = vadd.f32 %v1682, %v1733
        %v1735 = vpop.f32.mrf.mxu0
        %1736 = vdwg.mxu0
        %s1737 = scalar_lea.vmem %s768, 32
        %v1738 = vld [vmem:[%s1737] sm:$0xf]
        %v1739 = vld [vmem:[%s1737 + $0x4] sm:$0xf]
        %v1740 = vld [vmem:[%s1737 + $0x8] sm:$0xf]
        %v1741 = vld [vmem:[%s1737 + $0xc] sm:$0xf]
        %s1742 = scalar_lea.vmem %s780, 2
        %v1743 = vld [vmem:[%s1742] sm:$0x1]
        %v1745 = vlaneseq
        %v1746 = vshrl.u32 %v1745, 7
        %v1747 = vsub.s32 0, %v1746
        %v1748 = vrot.slane %v1743, %v1747
        %v1754 = vunpack.c.l.b16 %v1738
        %v1755 = vunpack.c.l.b16 %v1739
        %v1756 = vunpack.c.l.b16 %v1740
        %v1757 = vunpack.c.l.b16 %v1741
        %v1758 = vpack.c.b16 %v1755, %v1754
        %v1759 = vpack.c.b16 %v1757, %v1756
        %1762 = vmatprep.subr.bf16.mxu0 0
        %1763 = vmatpush1.bf16.msra.mxu0 0
        %1764 = vmatprep.subr.bf16.mxu0 0
        %1765 = vmatpush1.bf16.msra.mxu0 0
        %1766 = vmatprep.subr.bf16.mxu0 0
        %1767 = vmatpush1.bf16.msra.mxu0 0
        %1768 = vmatprep.subr.bf16.mxu0 0
        %1769 = vmatpush1.bf16.msra.mxu0 0
        %1770 = vmatprep.subr.bf16.mxu0 0
        %1771 = vmatpush1.bf16.msra.mxu0 0
        %1772 = vmatprep.subr.bf16.mxu0 0
        %1773 = vmatpush1.bf16.msra.mxu0 0
        %1774 = vmatprep.subr.bf16.mxu0 0
        %1775 = vmatpush1.bf16.msra.mxu0 %v1759
        %1776 = vmatprep.subr.bf16.mxu0 0
        %1777 = vmatpush1.bf16.msra.mxu0 %v1758
        %1778 = vmatprep.subr.bf16.mxu0 0
        %1779 = vmatpush2.bf16.msra.mxu0 0
        %1780 = vmatprep.subr.bf16.mxu0 0
        %1781 = vmatpush2.bf16.msra.mxu0 0
        %1782 = vmatprep.subr.bf16.mxu0 0
        %1783 = vmatpush2.bf16.msra.mxu0 0
        %1784 = vmatprep.subr.bf16.mxu0 0
        %1785 = vmatpush2.bf16.msra.mxu0 0
        %1786 = vmatprep.subr.bf16.mxu0 0
        %1787 = vmatpush2.bf16.msra.mxu0 0
        %1788 = vmatprep.subr.bf16.mxu0 0
        %1789 = vmatpush2.bf16.msra.mxu0 0
        %1790 = vmatprep.subr.bf16.mxu0 0
        %1791 = vmatpush2.bf16.msra.mxu0 0
        %1792 = vmatprep.subr.bf16.mxu0 0
        %1793 = vmatpush2.bf16.msra.mxu0 0
        %1794 = vmatprep.mubr.bf16.mxu0 0
        %1795 = vmatmul.mubr.bf16.gmra.mxu0 %v896
        %v1796 = vpop.f32.mrf.mxu0
        %v1797 = vadd.f32 %v1748, %v1796
        %v1798 = vpop.f32.mrf.mxu0
        %v1799 = vpop.f32.mrf.mxu0
        %v1800 = vadd.f32 %v1748, %v1799
        %v1801 = vpop.f32.mrf.mxu0
        %1802 = vdwg.mxu0
        %v1803 = vmul.f32 %v1665, 0.35355338
        %v1804 = vmul.f32 %v1668, 0.35355338
        %v1805 = vpack.c.bf16 %v1804, %v1803
        %v1806 = vpack.c.bf16 %v1734, %v1731
        %v1808 = vsel %vm1071, %v1805, 0
        %v1811 = vsel %vm1071, %v1806, 0
        %1813 = vmatprep.subr.bf16.mxu0 0
        %1814 = vmatpush1.bf16.xpose.msra.mxu0 0
        %1815 = vmatprep.subr.bf16.mxu0 0
        %1816 = vmatpush1.bf16.xpose.msra.mxu0 0
        %1817 = vmatprep.subr.bf16.mxu0 0
        %1818 = vmatpush1.bf16.xpose.msra.mxu0 0
        %1819 = vmatprep.subr.bf16.mxu0 0
        %1820 = vmatpush1.bf16.xpose.msra.mxu0 0
        %1821 = vmatprep.subr.bf16.mxu0 0
        %1822 = vmatpush1.bf16.xpose.msra.mxu0 0
        %1823 = vmatprep.subr.bf16.mxu0 0
        %1824 = vmatpush1.bf16.xpose.msra.mxu0 0
        %1825 = vmatprep.subr.bf16.mxu0 0
        %1826 = vmatpush1.bf16.xpose.msra.mxu0 0
        %1827 = vmatprep.subr.bf16.mxu0 0
        %1828 = vmatpush1.bf16.xpose.msra.mxu0 %v1811
        %1829 = vmatprep.subr.bf16.mxu0 0
        %1830 = vmatpush2.bf16.xpose.msra.mxu0 0
        %1831 = vmatprep.subr.bf16.mxu0 0
        %1832 = vmatpush2.bf16.xpose.msra.mxu0 0
        %1833 = vmatprep.subr.bf16.mxu0 0
        %1834 = vmatpush2.bf16.xpose.msra.mxu0 0
        %1835 = vmatprep.subr.bf16.mxu0 0
        %1836 = vmatpush2.bf16.xpose.msra.mxu0 0
        %1837 = vmatprep.subr.bf16.mxu0 0
        %1838 = vmatpush2.bf16.xpose.msra.mxu0 0
        %1839 = vmatprep.subr.bf16.mxu0 0
        %1840 = vmatpush2.bf16.xpose.msra.mxu0 0
        %1841 = vmatprep.subr.bf16.mxu0 0
        %1842 = vmatpush2.bf16.xpose.msra.mxu0 0
        %1843 = vmatprep.subr.bf16.mxu0 0
        %1844 = vmatpush2.bf16.xpose.msra.mxu0 0
        %1845 = vmatprep.mubr.bf16.mxu0 0
        %1846 = vmatmul.mubr.bf16.gmra.mxu0 %v1808
        %v1847 = vpop.f32.mrf.mxu0
        %v1848 = vadd.f32 %v823, %v1847
        %v1849 = vpop.f32.mrf.mxu0
        %v1850 = vpop.f32.mrf.mxu0
        %v1851 = vadd.f32 %v824, %v1850
        %v1852 = vpop.f32.mrf.mxu0
        %1853 = vdwg.mxu0
        %v1854 = vsel %vm1119, %v1848, -inf
        %1855 = vmax.xlane.f32.xlu0 %v1854
        %v1856 = vpop.xlane.xlu0 %1855
        %v1857 = vsel %vm1119, %v1851, -inf
        %1858 = vmax.xlane.f32.xlu0 %v1857
        %v1859 = vpop.xlane.xlu0 %1858
        %v1860 = vsub.f32 %v1848, %v1856
        %v1861 = vsub.f32 %v1851, %v1859
        %v1862 = vmul.f32 %v1860, 1.442695
        %v1863 = vpow.pop %v1862
        %v1864 = vmul.f32 %v1861, 1.442695
        %v1865 = vpow.pop %v1864
        %v1866 = vsel %vm1119, %v1863, 0.0
        %1867 = vadd.xlane.f32.xlu0 %v1866
        %v1868 = vpop.xlane.xlu0 %1867
        %v1869 = vsel %vm1119, %v1865, 0.0
        %1870 = vadd.xlane.f32.xlu0 %v1869
        %v1871 = vpop.xlane.xlu0 %1870
        %v1872 = vrcp.pop %v1868
        %v1873 = vrcp.pop %v1871
        %v1874 = vmul.f32 %v1863, %v1872
        %v1875 = vmul.f32 %v1865, %v1873
        %v1876 = vpack.c.bf16 %v1875, %v1874
        %v1877 = vpack.c.bf16 %v1800, %v1797
        %v1879 = vsel %vm1119, %v1876, 0
        %1881 = vmatprep.subr.bf16.mxu0 0
        %1882 = vmatpush1.bf16.msra.mxu0 0
        %1883 = vmatprep.subr.bf16.mxu0 0
        %1884 = vmatpush1.bf16.msra.mxu0 0
        %1885 = vmatprep.subr.bf16.mxu0 0
        %1886 = vmatpush1.bf16.msra.mxu0 0
        %1887 = vmatprep.subr.bf16.mxu0 0
        %1888 = vmatpush1.bf16.msra.mxu0 0
        %1889 = vmatprep.subr.bf16.mxu0 0
        %1890 = vmatpush1.bf16.msra.mxu0 0
        %1891 = vmatprep.subr.bf16.mxu0 0
        %1892 = vmatpush1.bf16.msra.mxu0 0
        %1893 = vmatprep.subr.bf16.mxu0 0
        %1894 = vmatpush1.bf16.msra.mxu0 0
        %1895 = vmatprep.subr.bf16.mxu0 0
        %1896 = vmatpush1.bf16.msra.mxu0 %v1877
        %1897 = vmatprep.subr.bf16.mxu0 0
        %1898 = vmatpush2.bf16.msra.mxu0 0
        %1899 = vmatprep.subr.bf16.mxu0 0
        %1900 = vmatpush2.bf16.msra.mxu0 0
        %1901 = vmatprep.subr.bf16.mxu0 0
        %1902 = vmatpush2.bf16.msra.mxu0 0
        %1903 = vmatprep.subr.bf16.mxu0 0
        %1904 = vmatpush2.bf16.msra.mxu0 0
        %1905 = vmatprep.subr.bf16.mxu0 0
        %1906 = vmatpush2.bf16.msra.mxu0 0
        %1907 = vmatprep.subr.bf16.mxu0 0
        %1908 = vmatpush2.bf16.msra.mxu0 0
        %1909 = vmatprep.subr.bf16.mxu0 0
        %1910 = vmatpush2.bf16.msra.mxu0 0
        %1911 = vmatprep.subr.bf16.mxu0 0
        %1912 = vmatpush2.bf16.msra.mxu0 0
        %1913 = vmatprep.mubr.bf16.mxu0 0
        %1914 = vmatmul.mubr.bf16.gmra.mxu0 %v1879
        %v1915 = vpop.f32.mrf.mxu0
        %v1916 = vadd.f32 0.0, %v1915
        %v1917 = vpop.f32.mrf.mxu0
        %v1918 = vpop.f32.mrf.mxu0
        %v1919 = vadd.f32 0.0, %v1918
        %v1920 = vpop.f32.mrf.mxu0
        %1921 = vdwg.mxu0
        %v1922 = vpack.c.bf16 %v1919, %v1916
        %s1923 = scalar_lea.vmem %s785, 8
        %v1924 = vld [vmem:[%s1923] sm:$0xf]
        %v1926 = vsel %vm1071, %v1922, 0
        %v1929 = vsel %vm1513, %v1924, 0
        %1931 = vmatprep.subr.bf16.mxu0 0
        %1932 = vmatpush1.bf16.msra.mxu0 0
        %1933 = vmatprep.subr.bf16.mxu0 0
        %1934 = vmatpush1.bf16.msra.mxu0 0
        %1935 = vmatprep.subr.bf16.mxu0 0
        %1936 = vmatpush1.bf16.msra.mxu0 0
        %1937 = vmatprep.subr.bf16.mxu0 0
        %1938 = vmatpush1.bf16.msra.mxu0 0
        %1939 = vmatprep.subr.bf16.mxu0 0
        %1940 = vmatpush1.bf16.msra.mxu0 0
        %1941 = vmatprep.subr.bf16.mxu0 0
        %1942 = vmatpush1.bf16.msra.mxu0 0
        %1943 = vmatprep.subr.bf16.mxu0 0
        %1944 = vmatpush1.bf16.msra.mxu0 0
        %1945 = vmatprep.subr.bf16.mxu0 0
        %1946 = vmatpush1.bf16.msra.mxu0 %v1929
        %1947 = vmatprep.subr.bf16.mxu0 0
        %1948 = vmatpush2.bf16.msra.mxu0 0
        %1949 = vmatprep.subr.bf16.mxu0 0
        %1950 = vmatpush2.bf16.msra.mxu0 0
        %1951 = vmatprep.subr.bf16.mxu0 0
        %1952 = vmatpush2.bf16.msra.mxu0 0
        %1953 = vmatprep.subr.bf16.mxu0 0
        %1954 = vmatpush2.bf16.msra.mxu0 0
        %1955 = vmatprep.subr.bf16.mxu0 0
        %1956 = vmatpush2.bf16.msra.mxu0 0
        %1957 = vmatprep.subr.bf16.mxu0 0
        %1958 = vmatpush2.bf16.msra.mxu0 0
        %1959 = vmatprep.subr.bf16.mxu0 0
        %1960 = vmatpush2.bf16.msra.mxu0 0
        %1961 = vmatprep.subr.bf16.mxu0 0
        %1962 = vmatpush2.bf16.msra.mxu0 0
        %1963 = vmatprep.mubr.bf16.mxu0 0
        %1964 = vmatmul.mubr.bf16.gmra.mxu0 %v1926
        %v1965 = vpop.f32.mrf.mxu0
        %v1966 = vadd.f32 0.0, %v1965
        %v1967 = vpop.f32.mrf.mxu0
        %v1968 = vpop.f32.mrf.mxu0
        %v1969 = vadd.f32 0.0, %v1968
        %v1970 = vpop.f32.mrf.mxu0
        %1971 = vdwg.mxu0
        %v1972 = vadd.f32 %v1599, %v1966
        %v1973 = vadd.f32 %v1602, %v1969
        %s1974 = scalar_lea.vmem %s758, 48
        %v1975 = vld [vmem:[%s1974] sm:$0xf]
        %v1976 = vld [vmem:[%s1974 + $0x4] sm:$0xf]
        %v1977 = vld [vmem:[%s1974 + $0x8] sm:$0xf]
        %v1978 = vld [vmem:[%s1974 + $0xc] sm:$0xf]
        %s1979 = scalar_lea.vmem %s772, 3
        %v1980 = vld [vmem:[%s1979] sm:$0x1]
        %v1982 = vlaneseq
        %v1983 = vshrl.u32 %v1982, 7
        %v1984 = vsub.s32 0, %v1983
        %v1985 = vrot.slane %v1980, %v1984
        %v1991 = vunpack.c.l.b16 %v1975
        %v1992 = vunpack.c.l.b16 %v1976
        %v1993 = vunpack.c.l.b16 %v1977
        %v1994 = vunpack.c.l.b16 %v1978
        %v1995 = vpack.c.b16 %v1992, %v1991
        %v1996 = vpack.c.b16 %v1994, %v1993
        %1999 = vmatprep.subr.bf16.mxu0 0
        %2000 = vmatpush1.bf16.msra.mxu0 0
        %2001 = vmatprep.subr.bf16.mxu0 0
        %2002 = vmatpush1.bf16.msra.mxu0 0
        %2003 = vmatprep.subr.bf16.mxu0 0
        %2004 = vmatpush1.bf16.msra.mxu0 0
        %2005 = vmatprep.subr.bf16.mxu0 0
        %2006 = vmatpush1.bf16.msra.mxu0 0
        %2007 = vmatprep.subr.bf16.mxu0 0
        %2008 = vmatpush1.bf16.msra.mxu0 0
        %2009 = vmatprep.subr.bf16.mxu0 0
        %2010 = vmatpush1.bf16.msra.mxu0 0
        %2011 = vmatprep.subr.bf16.mxu0 0
        %2012 = vmatpush1.bf16.msra.mxu0 %v1996
        %2013 = vmatprep.subr.bf16.mxu0 0
        %2014 = vmatpush1.bf16.msra.mxu0 %v1995
        %2015 = vmatprep.subr.bf16.mxu0 0
        %2016 = vmatpush2.bf16.msra.mxu0 0
        %2017 = vmatprep.subr.bf16.mxu0 0
        %2018 = vmatpush2.bf16.msra.mxu0 0
        %2019 = vmatprep.subr.bf16.mxu0 0
        %2020 = vmatpush2.bf16.msra.mxu0 0
        %2021 = vmatprep.subr.bf16.mxu0 0
        %2022 = vmatpush2.bf16.msra.mxu0 0
        %2023 = vmatprep.subr.bf16.mxu0 0
        %2024 = vmatpush2.bf16.msra.mxu0 0
        %2025 = vmatprep.subr.bf16.mxu0 0
        %2026 = vmatpush2.bf16.msra.mxu0 0
        %2027 = vmatprep.subr.bf16.mxu0 0
        %2028 = vmatpush2.bf16.msra.mxu0 0
        %2029 = vmatprep.subr.bf16.mxu0 0
        %2030 = vmatpush2.bf16.msra.mxu0 0
        %2031 = vmatprep.mubr.bf16.mxu0 0
        %2032 = vmatmul.mubr.bf16.gmra.mxu0 %v896
        %v2033 = vpop.f32.mrf.mxu0
        %v2034 = vadd.f32 %v1985, %v2033
        %v2035 = vpop.f32.mrf.mxu0
        %v2036 = vpop.f32.mrf.mxu0
        %v2037 = vadd.f32 %v1985, %v2036
        %v2038 = vpop.f32.mrf.mxu0
        %2039 = vdwg.mxu0
        %s2040 = scalar_lea.vmem %s763, 48
        %v2041 = vld [vmem:[%s2040] sm:$0xf]
        %v2042 = vld [vmem:[%s2040 + $0x4] sm:$0xf]
        %v2043 = vld [vmem:[%s2040 + $0x8] sm:$0xf]
        %v2044 = vld [vmem:[%s2040 + $0xc] sm:$0xf]
        %s2045 = scalar_lea.vmem %s776, 3
        %v2046 = vld [vmem:[%s2045] sm:$0x1]
        %v2048 = vlaneseq
        %v2049 = vshrl.u32 %v2048, 7
        %v2050 = vsub.s32 0, %v2049
        %v2051 = vrot.slane %v2046, %v2050
        %v2057 = vunpack.c.l.b16 %v2041
        %v2058 = vunpack.c.l.b16 %v2042
        %v2059 = vunpack.c.l.b16 %v2043
        %v2060 = vunpack.c.l.b16 %v2044
        %v2061 = vpack.c.b16 %v2058, %v2057
        %v2062 = vpack.c.b16 %v2060, %v2059
        %2065 = vmatprep.subr.bf16.mxu0 0
        %2066 = vmatpush1.bf16.msra.mxu0 0
        %2067 = vmatprep.subr.bf16.mxu0 0
        %2068 = vmatpush1.bf16.msra.mxu0 0
        %2069 = vmatprep.subr.bf16.mxu0 0
        %2070 = vmatpush1.bf16.msra.mxu0 0
        %2071 = vmatprep.subr.bf16.mxu0 0
        %2072 = vmatpush1.bf16.msra.mxu0 0
        %2073 = vmatprep.subr.bf16.mxu0 0
        %2074 = vmatpush1.bf16.msra.mxu0 0
        %2075 = vmatprep.subr.bf16.mxu0 0
        %2076 = vmatpush1.bf16.msra.mxu0 0
        %2077 = vmatprep.subr.bf16.mxu0 0
        %2078 = vmatpush1.bf16.msra.mxu0 %v2062
        %2079 = vmatprep.subr.bf16.mxu0 0
        %2080 = vmatpush1.bf16.msra.mxu0 %v2061
        %2081 = vmatprep.subr.bf16.mxu0 0
        %2082 = vmatpush2.bf16.msra.mxu0 0
        %2083 = vmatprep.subr.bf16.mxu0 0
        %2084 = vmatpush2.bf16.msra.mxu0 0
        %2085 = vmatprep.subr.bf16.mxu0 0
        %2086 = vmatpush2.bf16.msra.mxu0 0
        %2087 = vmatprep.subr.bf16.mxu0 0
        %2088 = vmatpush2.bf16.msra.mxu0 0
        %2089 = vmatprep.subr.bf16.mxu0 0
        %2090 = vmatpush2.bf16.msra.mxu0 0
        %2091 = vmatprep.subr.bf16.mxu0 0
        %2092 = vmatpush2.bf16.msra.mxu0 0
        %2093 = vmatprep.subr.bf16.mxu0 0
        %2094 = vmatpush2.bf16.msra.mxu0 0
        %2095 = vmatprep.subr.bf16.mxu0 0
        %2096 = vmatpush2.bf16.msra.mxu0 0
        %2097 = vmatprep.mubr.bf16.mxu0 0
        %2098 = vmatmul.mubr.bf16.gmra.mxu0 %v896
        %v2099 = vpop.f32.mrf.mxu0
        %v2100 = vadd.f32 %v2051, %v2099
        %v2101 = vpop.f32.mrf.mxu0
        %v2102 = vpop.f32.mrf.mxu0
        %v2103 = vadd.f32 %v2051, %v2102
        %v2104 = vpop.f32.mrf.mxu0
        %2105 = vdwg.mxu0
        %s2106 = scalar_lea.vmem %s768, 48
        %v2107 = vld [vmem:[%s2106] sm:$0xf]
        %v2108 = vld [vmem:[%s2106 + $0x4] sm:$0xf]
        %v2109 = vld [vmem:[%s2106 + $0x8] sm:$0xf]
        %v2110 = vld [vmem:[%s2106 + $0xc] sm:$0xf]
        %s2111 = scalar_lea.vmem %s780, 3
        %v2112 = vld [vmem:[%s2111] sm:$0x1]
        %v2114 = vlaneseq
        %v2115 = vshrl.u32 %v2114, 7
        %v2116 = vsub.s32 0, %v2115
        %v2117 = vrot.slane %v2112, %v2116
        %v2123 = vunpack.c.l.b16 %v2107
        %v2124 = vunpack.c.l.b16 %v2108
        %v2125 = vunpack.c.l.b16 %v2109
        %v2126 = vunpack.c.l.b16 %v2110
        %v2127 = vpack.c.b16 %v2124, %v2123
        %v2128 = vpack.c.b16 %v2126, %v2125
        %2131 = vmatprep.subr.bf16.mxu0 0
        %2132 = vmatpush1.bf16.msra.mxu0 0
        %2133 = vmatprep.subr.bf16.mxu0 0
        %2134 = vmatpush1.bf16.msra.mxu0 0
        %2135 = vmatprep.subr.bf16.mxu0 0
        %2136 = vmatpush1.bf16.msra.mxu0 0
        %2137 = vmatprep.subr.bf16.mxu0 0
        %2138 = vmatpush1.bf16.msra.mxu0 0
        %2139 = vmatprep.subr.bf16.mxu0 0
        %2140 = vmatpush1.bf16.msra.mxu0 0
        %2141 = vmatprep.subr.bf16.mxu0 0
        %2142 = vmatpush1.bf16.msra.mxu0 0
        %2143 = vmatprep.subr.bf16.mxu0 0
        %2144 = vmatpush1.bf16.msra.mxu0 %v2128
        %2145 = vmatprep.subr.bf16.mxu0 0
        %2146 = vmatpush1.bf16.msra.mxu0 %v2127
        %2147 = vmatprep.subr.bf16.mxu0 0
        %2148 = vmatpush2.bf16.msra.mxu0 0
        %2149 = vmatprep.subr.bf16.mxu0 0
        %2150 = vmatpush2.bf16.msra.mxu0 0
        %2151 = vmatprep.subr.bf16.mxu0 0
        %2152 = vmatpush2.bf16.msra.mxu0 0
        %2153 = vmatprep.subr.bf16.mxu0 0
        %2154 = vmatpush2.bf16.msra.mxu0 0
        %2155 = vmatprep.subr.bf16.mxu0 0
        %2156 = vmatpush2.bf16.msra.mxu0 0
        %2157 = vmatprep.subr.bf16.mxu0 0
        %2158 = vmatpush2.bf16.msra.mxu0 0
        %2159 = vmatprep.subr.bf16.mxu0 0
        %2160 = vmatpush2.bf16.msra.mxu0 0
        %2161 = vmatprep.subr.bf16.mxu0 0
        %2162 = vmatpush2.bf16.msra.mxu0 0
        %2163 = vmatprep.mubr.bf16.mxu0 0
        %2164 = vmatmul.mubr.bf16.gmra.mxu0 %v896
        %v2165 = vpop.f32.mrf.mxu0
        %v2166 = vadd.f32 %v2117, %v2165
        %v2167 = vpop.f32.mrf.mxu0
        %v2168 = vpop.f32.mrf.mxu0
        %v2169 = vadd.f32 %v2117, %v2168
        %v2170 = vpop.f32.mrf.mxu0
        %2171 = vdwg.mxu0
        %v2172 = vmul.f32 %v2034, 0.35355338
        %v2173 = vmul.f32 %v2037, 0.35355338
        %v2174 = vpack.c.bf16 %v2173, %v2172
        %v2175 = vpack.c.bf16 %v2103, %v2100
        %v2177 = vsel %vm1071, %v2174, 0
        %v2180 = vsel %vm1071, %v2175, 0
        %2182 = vmatprep.subr.bf16.mxu0 0
        %2183 = vmatpush1.bf16.xpose.msra.mxu0 0
        %2184 = vmatprep.subr.bf16.mxu0 0
        %2185 = vmatpush1.bf16.xpose.msra.mxu0 0
        %2186 = vmatprep.subr.bf16.mxu0 0
        %2187 = vmatpush1.bf16.xpose.msra.mxu0 0
        %2188 = vmatprep.subr.bf16.mxu0 0
        %2189 = vmatpush1.bf16.xpose.msra.mxu0 0
        %2190 = vmatprep.subr.bf16.mxu0 0
        %2191 = vmatpush1.bf16.xpose.msra.mxu0 0
        %2192 = vmatprep.subr.bf16.mxu0 0
        %2193 = vmatpush1.bf16.xpose.msra.mxu0 0
        %2194 = vmatprep.subr.bf16.mxu0 0
        %2195 = vmatpush1.bf16.xpose.msra.mxu0 0
        %2196 = vmatprep.subr.bf16.mxu0 0
        %2197 = vmatpush1.bf16.xpose.msra.mxu0 %v2180
        %2198 = vmatprep.subr.bf16.mxu0 0
        %2199 = vmatpush2.bf16.xpose.msra.mxu0 0
        %2200 = vmatprep.subr.bf16.mxu0 0
        %2201 = vmatpush2.bf16.xpose.msra.mxu0 0
        %2202 = vmatprep.subr.bf16.mxu0 0
        %2203 = vmatpush2.bf16.xpose.msra.mxu0 0
        %2204 = vmatprep.subr.bf16.mxu0 0
        %2205 = vmatpush2.bf16.xpose.msra.mxu0 0
        %2206 = vmatprep.subr.bf16.mxu0 0
        %2207 = vmatpush2.bf16.xpose.msra.mxu0 0
        %2208 = vmatprep.subr.bf16.mxu0 0
        %2209 = vmatpush2.bf16.xpose.msra.mxu0 0
        %2210 = vmatprep.subr.bf16.mxu0 0
        %2211 = vmatpush2.bf16.xpose.msra.mxu0 0
        %2212 = vmatprep.subr.bf16.mxu0 0
        %2213 = vmatpush2.bf16.xpose.msra.mxu0 0
        %2214 = vmatprep.mubr.bf16.mxu0 0
        %2215 = vmatmul.mubr.bf16.gmra.mxu0 %v2177
        %v2216 = vpop.f32.mrf.mxu0
        %v2217 = vadd.f32 %v823, %v2216
        %v2218 = vpop.f32.mrf.mxu0
        %v2219 = vpop.f32.mrf.mxu0
        %v2220 = vadd.f32 %v824, %v2219
        %v2221 = vpop.f32.mrf.mxu0
        %2222 = vdwg.mxu0
        %v2223 = vsel %vm1119, %v2217, -inf
        %2224 = vmax.xlane.f32.xlu0 %v2223
        %v2225 = vpop.xlane.xlu0 %2224
        %v2226 = vsel %vm1119, %v2220, -inf
        %2227 = vmax.xlane.f32.xlu0 %v2226
        %v2228 = vpop.xlane.xlu0 %2227
        %v2229 = vsub.f32 %v2217, %v2225
        %v2230 = vsub.f32 %v2220, %v2228
        %v2231 = vmul.f32 %v2229, 1.442695
        %v2232 = vpow.pop %v2231
        %v2233 = vmul.f32 %v2230, 1.442695
        %v2234 = vpow.pop %v2233
        %v2235 = vsel %vm1119, %v2232, 0.0
        %2236 = vadd.xlane.f32.xlu0 %v2235
        %v2237 = vpop.xlane.xlu0 %2236
        %v2238 = vsel %vm1119, %v2234, 0.0
        %2239 = vadd.xlane.f32.xlu0 %v2238
        %v2240 = vpop.xlane.xlu0 %2239
        %v2241 = vrcp.pop %v2237
        %v2242 = vrcp.pop %v2240
        %v2243 = vmul.f32 %v2232, %v2241
        %v2244 = vmul.f32 %v2234, %v2242
        %v2245 = vpack.c.bf16 %v2244, %v2243
        %v2246 = vpack.c.bf16 %v2169, %v2166
        %v2248 = vsel %vm1119, %v2245, 0
        %2250 = vmatprep.subr.bf16.mxu0 0
        %2251 = vmatpush1.bf16.msra.mxu0 0
        %2252 = vmatprep.subr.bf16.mxu0 0
        %2253 = vmatpush1.bf16.msra.mxu0 0
        %2254 = vmatprep.subr.bf16.mxu0 0
        %2255 = vmatpush1.bf16.msra.mxu0 0
        %2256 = vmatprep.subr.bf16.mxu0 0
        %2257 = vmatpush1.bf16.msra.mxu0 0
        %2258 = vmatprep.subr.bf16.mxu0 0
        %2259 = vmatpush1.bf16.msra.mxu0 0
        %2260 = vmatprep.subr.bf16.mxu0 0
        %2261 = vmatpush1.bf16.msra.mxu0 0
        %2262 = vmatprep.subr.bf16.mxu0 0
        %2263 = vmatpush1.bf16.msra.mxu0 0
        %2264 = vmatprep.subr.bf16.mxu0 0
        %2265 = vmatpush1.bf16.msra.mxu0 %v2246
        %2266 = vmatprep.subr.bf16.mxu0 0
        %2267 = vmatpush2.bf16.msra.mxu0 0
        %2268 = vmatprep.subr.bf16.mxu0 0
        %2269 = vmatpush2.bf16.msra.mxu0 0
        %2270 = vmatprep.subr.bf16.mxu0 0
        %2271 = vmatpush2.bf16.msra.mxu0 0
        %2272 = vmatprep.subr.bf16.mxu0 0
        %2273 = vmatpush2.bf16.msra.mxu0 0
        %2274 = vmatprep.subr.bf16.mxu0 0
        %2275 = vmatpush2.bf16.msra.mxu0 0
        %2276 = vmatprep.subr.bf16.mxu0 0
        %2277 = vmatpush2.bf16.msra.mxu0 0
        %2278 = vmatprep.subr.bf16.mxu0 0
        %2279 = vmatpush2.bf16.msra.mxu0 0
        %2280 = vmatprep.subr.bf16.mxu0 0
        %2281 = vmatpush2.bf16.msra.mxu0 0
        %2282 = vmatprep.mubr.bf16.mxu0 0
        %2283 = vmatmul.mubr.bf16.gmra.mxu0 %v2248
        %v2284 = vpop.f32.mrf.mxu0
        %v2285 = vadd.f32 0.0, %v2284
        %v2286 = vpop.f32.mrf.mxu0
        %v2287 = vpop.f32.mrf.mxu0
        %v2288 = vadd.f32 0.0, %v2287
        %v2289 = vpop.f32.mrf.mxu0
        %2290 = vdwg.mxu0
        %v2291 = vpack.c.bf16 %v2288, %v2285
        %s2292 = scalar_lea.vmem %s785, 12
        %v2293 = vld [vmem:[%s2292] sm:$0xf]
        %v2295 = vsel %vm1071, %v2291, 0
        %v2298 = vsel %vm1513, %v2293, 0
        %2300 = vmatprep.subr.bf16.mxu0 0
        %2301 = vmatpush1.bf16.msra.mxu0 0
        %2302 = vmatprep.subr.bf16.mxu0 0
        %2303 = vmatpush1.bf16.msra.mxu0 0
        %2304 = vmatprep.subr.bf16.mxu0 0
        %2305 = vmatpush1.bf16.msra.mxu0 0
        %2306 = vmatprep.subr.bf16.mxu0 0
        %2307 = vmatpush1.bf16.msra.mxu0 0
        %2308 = vmatprep.subr.bf16.mxu0 0
        %2309 = vmatpush1.bf16.msra.mxu0 0
        %2310 = vmatprep.subr.bf16.mxu0 0
        %2311 = vmatpush1.bf16.msra.mxu0 0
        %2312 = vmatprep.subr.bf16.mxu0 0
        %2313 = vmatpush1.bf16.msra.mxu0 0
        %2314 = vmatprep.subr.bf16.mxu0 0
        %2315 = vmatpush1.bf16.msra.mxu0 %v2298
        %2316 = vmatprep.subr.bf16.mxu0 0
        %2317 = vmatpush2.bf16.msra.mxu0 0
        %2318 = vmatprep.subr.bf16.mxu0 0
        %2319 = vmatpush2.bf16.msra.mxu0 0
        %2320 = vmatprep.subr.bf16.mxu0 0
        %2321 = vmatpush2.bf16.msra.mxu0 0
        %2322 = vmatprep.subr.bf16.mxu0 0
        %2323 = vmatpush2.bf16.msra.mxu0 0
        %2324 = vmatprep.subr.bf16.mxu0 0
        %2325 = vmatpush2.bf16.msra.mxu0 0
        %2326 = vmatprep.subr.bf16.mxu0 0
        %2327 = vmatpush2.bf16.msra.mxu0 0
        %2328 = vmatprep.subr.bf16.mxu0 0
        %2329 = vmatpush2.bf16.msra.mxu0 0
        %2330 = vmatprep.subr.bf16.mxu0 0
        %2331 = vmatpush2.bf16.msra.mxu0 0
        %2332 = vmatprep.mubr.bf16.mxu0 0
        %2333 = vmatmul.mubr.bf16.gmra.mxu0 %v2295
        %v2334 = vpop.f32.mrf.mxu0
        %v2335 = vadd.f32 0.0, %v2334
        %v2336 = vpop.f32.mrf.mxu0
        %v2337 = vpop.f32.mrf.mxu0
        %v2338 = vadd.f32 0.0, %v2337
        %v2339 = vpop.f32.mrf.mxu0
        %2340 = vdwg.mxu0
        %v2341 = vadd.f32 %v1972, %v2335
        %v2342 = vadd.f32 %v1973, %v2338
        %v2343 = vadd.f32 %v821, %v2341
        %v2344 = vadd.f32 %v822, %v2342
        %v2345 = vld [vmem:[%s788] sm:$0x1]
        %v2347 = vlaneseq
        %v2348 = vshrl.u32 %v2347, 7
        %v2349 = vsub.s32 0, %v2348
        %v2350 = vrot.slane %v2345, %v2349
        %v2352 = vadd.f32 %v2343, %v2350
        %v2353 = vadd.f32 %v2344, %v2350
        %v2354 = vld [vmem:[%s791] sm:$0x1]
        %v2355 = vld [vmem:[%s794] sm:$0x1]
        %v2356 = vsel %vm827, %v2352, 0.0
        %2357 = vadd.xlane.f32.xlu0 %v2356
        %v2358 = vpop.xlane.xlu0 %2357
        %v2359 = vsel %vm827, %v2353, 0.0
        %2360 = vadd.xlane.f32.xlu0 %v2359
        %v2361 = vpop.xlane.xlu0 %2360
        %v2362 = vmul.f32 %v2358, %v834
        %v2363 = vmul.f32 %v2361, %v834
        %v2364 = vsub.f32 %v2352, %v2362
        %v2365 = vsub.f32 %v2353, %v2363
        %v2366 = vmul.f32 %v2364, %v2364
        %v2367 = vmul.f32 %v2365, %v2365
        %v2368 = vsel %vm827, %v2366, 0.0
        %2369 = vadd.xlane.f32.xlu0 %v2368
        %v2370 = vpop.xlane.xlu0 %2369
        %v2371 = vsel %vm827, %v2367, 0.0
        %2372 = vadd.xlane.f32.xlu0 %v2371
        %v2373 = vpop.xlane.xlu0 %2372
        %v2374 = vmul.f32 %v2370, %v834
        %v2375 = vmul.f32 %v2373, %v834
        %v2376 = vadd.f32 %v2374, 1e-05
        %v2377 = vadd.f32 %v2375, 1e-05
        %v2378 = vrsqrt.pop %v2376
        %v2379 = vrsqrt.pop %v2377
        %v2380 = vmul.f32 %v2364, %v2378
        %v2381 = vmul.f32 %v2365, %v2379
        %v2383 = vlaneseq
        %v2384 = vshrl.u32 %v2383, 7
        %v2385 = vsub.s32 0, %v2384
        %v2386 = vrot.slane %v2354, %v2385
        %v2388 = vmul.f32 %v2380, %v2386
        %v2389 = vmul.f32 %v2381, %v2386
        %v2391 = vlaneseq
        %v2392 = vshrl.u32 %v2391, 7
        %v2393 = vsub.s32 0, %v2392
        %v2394 = vrot.slane %v2355, %v2393
        %v2396 = vadd.f32 %v2388, %v2394
        %v2397 = vadd.f32 %v2389, %v2394
        %v2398 = vpack.c.bf16 %v2397, %v2396
        %v2399 = vld [vmem:[%s799] sm:$0xf]
        %v2400 = vld [vmem:[%s799 + $0x4] sm:$0xf]
        %v2401 = vld [vmem:[%s799 + $0x8] sm:$0xf]
        %v2402 = vld [vmem:[%s799 + $0xc] sm:$0xf]
        %v2403 = vld [vmem:[%s802] sm:$0x1]
        %v2405 = vlaneseq
        %v2406 = vshrl.u32 %v2405, 7
        %v2407 = vsub.s32 0, %v2406
        %v2408 = vrot.slane %v2403, %v2407
        %v2414 = vunpack.c.l.b16 %v2399
        %v2415 = vunpack.c.l.b16 %v2400
        %v2416 = vunpack.c.l.b16 %v2401
        %v2417 = vunpack.c.l.b16 %v2402
        %v2418 = vpack.c.b16 %v2415, %v2414
        %v2419 = vpack.c.b16 %v2417, %v2416
        %v2423 = vsel %vm827, %v2398, 0
        %2425 = vmatprep.subr.bf16.mxu0 0
        %2426 = vmatpush1.bf16.msra.mxu0 0
        %2427 = vmatprep.subr.bf16.mxu0 0
        %2428 = vmatpush1.bf16.msra.mxu0 0
        %2429 = vmatprep.subr.bf16.mxu0 0
        %2430 = vmatpush1.bf16.msra.mxu0 0
        %2431 = vmatprep.subr.bf16.mxu0 0
        %2432 = vmatpush1.bf16.msra.mxu0 0
        %2433 = vmatprep.subr.bf16.mxu0 0
        %2434 = vmatpush1.bf16.msra.mxu0 0
        %2435 = vmatprep.subr.bf16.mxu0 0
        %2436 = vmatpush1.bf16.msra.mxu0 0
        %2437 = vmatprep.subr.bf16.mxu0 0
        %2438 = vmatpush1.bf16.msra.mxu0 %v2419
        %2439 = vmatprep.subr.bf16.mxu0 0
        %2440 = vmatpush1.bf16.msra.mxu0 %v2418
        %2441 = vmatprep.subr.bf16.mxu0 0
        %2442 = vmatpush2.bf16.msra.mxu0 0
        %2443 = vmatprep.subr.bf16.mxu0 0
        %2444 = vmatpush2.bf16.msra.mxu0 0
        %2445 = vmatprep.subr.bf16.mxu0 0
        %2446 = vmatpush2.bf16.msra.mxu0 0
        %2447 = vmatprep.subr.bf16.mxu0 0
        %2448 = vmatpush2.bf16.msra.mxu0 0
        %2449 = vmatprep.subr.bf16.mxu0 0
        %2450 = vmatpush2.bf16.msra.mxu0 0
        %2451 = vmatprep.subr.bf16.mxu0 0
        %2452 = vmatpush2.bf16.msra.mxu0 0
        %2453 = vmatprep.subr.bf16.mxu0 0
        %2454 = vmatpush2.bf16.msra.mxu0 0
        %2455 = vmatprep.subr.bf16.mxu0 0
        %2456 = vmatpush2.bf16.msra.mxu0 0
        %2457 = vmatprep.mubr.bf16.mxu0 0
        %2458 = vmatmul.mubr.bf16.gmra.mxu0 %v2423
        %v2459 = vpop.f32.mrf.mxu0
        %v2460 = vadd.f32 %v2408, %v2459
        %v2461 = vpop.f32.mrf.mxu0
        %v2462 = vpop.f32.mrf.mxu0
        %v2463 = vadd.f32 %v2408, %v2462
        %v2464 = vpop.f32.mrf.mxu0
        %2465 = vdwg.mxu0
        %v2466 = vmul.f32 %v2460, 0.5
        %v2467 = vmul.f32 %v2463, 0.5
        %v2468 = vmul.f32 %v2460, 0.70710677
        %v2469 = vmul.f32 %v2463, 0.70710677
        %v2470 = vand.u32 2147483647, %v2468
        %v2471 = vand.u32 2147483647, %v2469
        %v2472 = vmul.f32 %v2470, 0.3275911
        %v2473 = vmul.f32 %v2471, 0.3275911
        %v2474 = vadd.f32 %v2472, 1.0
        %v2475 = vadd.f32 %v2473, 1.0
        %v2476 = vrcp.pop %v2474
        %v2477 = vmul.f32 1.0, %v2476
        %v2478 = vrcp.pop %v2475
        %v2479 = vmul.f32 1.0, %v2478
        %v2480 = vmul.f32 %v2477, 1.0614054
        %v2481 = vmul.f32 %v2479, 1.0614054
        %v2482 = vadd.f32 %v2480, -1.4531521
        %v2483 = vadd.f32 %v2481, -1.4531521
        %v2484 = vmul.f32 %v2482, %v2477
        %v2485 = vmul.f32 %v2483, %v2479
        %v2486 = vadd.f32 %v2484, 1.4214138
        %v2487 = vadd.f32 %v2485, 1.4214138
        %v2488 = vmul.f32 %v2486, %v2477
        %v2489 = vmul.f32 %v2487, %v2479
        %v2490 = vadd.f32 %v2488, -0.28449672
        %v2491 = vadd.f32 %v2489, -0.28449672
        %v2492 = vmul.f32 %v2490, %v2477
        %v2493 = vmul.f32 %v2491, %v2479
        %v2494 = vadd.f32 %v2492, 0.2548296
        %v2495 = vadd.f32 %v2493, 0.2548296
        %v2496 = vmul.f32 %v2494, %v2477
        %v2497 = vmul.f32 %v2495, %v2479
        %v2498 = vsub.f32 0.0, %v2470
        %v2499 = vsub.f32 0.0, %v2471
        %v2500 = vmul.f32 %v2498, %v2470
        %v2501 = vmul.f32 %v2499, %v2471
        %v2502 = vmul.f32 %v2500, 1.442695
        %v2503 = vpow.pop %v2502
        %v2504 = vmul.f32 %v2501, 1.442695
        %v2505 = vpow.pop %v2504
        %v2506 = vmul.f32 %v2496, %v2503
        %v2507 = vmul.f32 %v2497, %v2505
        %v2508 = vsub.f32 1.0, %v2506
        %v2509 = vsub.f32 1.0, %v2507
        %vm2510 = vcmp.lt.f32.partialorder %v2468, 0.0
        %vm2511 = vcmp.lt.f32.partialorder %v2469, 0.0
        %v2512 = vsub.f32 0.0, %v2508
        %v2513 = vsub.f32 0.0, %v2509
        %v2514 = vsel %vm2510, %v2512, %v2508
        %v2515 = vsel %vm2511, %v2513, %v2509
        %v2516 = vadd.f32 %v2514, 1.0
        %v2517 = vadd.f32 %v2515, 1.0
        %v2518 = vmul.f32 %v2466, %v2516
        %v2519 = vmul.f32 %v2467, %v2517
        %v2520 = vpack.c.bf16 %v2519, %v2518
        %v2521 = vld [vmem:[%s807] sm:$0xf]
        %v2522 = vld [vmem:[%s807 + $0x4] sm:$0xf]
        %v2523 = vld [vmem:[%s807 + $0x8] sm:$0xf]
        %v2524 = vld [vmem:[%s807 + $0xc] sm:$0xf]
        %v2525 = vld [vmem:[%s807 + $0x10] sm:$0xf]
        %v2526 = vld [vmem:[%s807 + $0x14] sm:$0xf]
        %v2527 = vld [vmem:[%s807 + $0x18] sm:$0xf]
        %v2528 = vld [vmem:[%s807 + $0x1c] sm:$0xf]
        %v2529 = vld [vmem:[%s810] sm:$0x1]
        %v2531 = vlaneseq
        %v2532 = vshrl.u32 %v2531, 7
        %v2533 = vsub.s32 0, %v2532
        %v2534 = vrot.slane %v2529, %v2533
        %v2544 = vunpack.c.l.b16 %v2521
        %v2545 = vunpack.c.l.b16 %v2522
        %v2546 = vunpack.c.l.b16 %v2523
        %v2547 = vunpack.c.l.b16 %v2524
        %v2548 = vunpack.c.l.b16 %v2525
        %v2549 = vunpack.c.l.b16 %v2526
        %v2550 = vunpack.c.l.b16 %v2527
        %v2551 = vunpack.c.l.b16 %v2528
        %v2552 = vpack.c.b16 %v2545, %v2544
        %v2553 = vpack.c.b16 %v2547, %v2546
        %v2554 = vpack.c.b16 %v2549, %v2548
        %v2555 = vpack.c.b16 %v2551, %v2550
        %vm2560 = vcmask 523264
        %v2562 = vsel %vm2560, %v2520, 0
        %2564 = vmatprep.subr.bf16.mxu0 0
        %2565 = vmatpush1.bf16.msra.mxu0 0
        %2566 = vmatprep.subr.bf16.mxu0 0
        %2567 = vmatpush1.bf16.msra.mxu0 0
        %2568 = vmatprep.subr.bf16.mxu0 0
        %2569 = vmatpush1.bf16.msra.mxu0 0
        %2570 = vmatprep.subr.bf16.mxu0 0
        %2571 = vmatpush1.bf16.msra.mxu0 0
        %2572 = vmatprep.subr.bf16.mxu0 0
        %2573 = vmatpush1.bf16.msra.mxu0 %v2555
        %2574 = vmatprep.subr.bf16.mxu0 0
        %2575 = vmatpush1.bf16.msra.mxu0 %v2554
        %2576 = vmatprep.subr.bf16.mxu0 0
        %2577 = vmatpush1.bf16.msra.mxu0 %v2553
        %2578 = vmatprep.subr.bf16.mxu0 0
        %2579 = vmatpush1.bf16.msra.mxu0 %v2552
        %2580 = vmatprep.subr.bf16.mxu0 0
        %2581 = vmatpush2.bf16.msra.mxu0 0
        %2582 = vmatprep.subr.bf16.mxu0 0
        %2583 = vmatpush2.bf16.msra.mxu0 0
        %2584 = vmatprep.subr.bf16.mxu0 0
        %2585 = vmatpush2.bf16.msra.mxu0 0
        %2586 = vmatprep.subr.bf16.mxu0 0
        %2587 = vmatpush2.bf16.msra.mxu0 0
        %2588 = vmatprep.subr.bf16.mxu0 0
        %2589 = vmatpush2.bf16.msra.mxu0 0
        %2590 = vmatprep.subr.bf16.mxu0 0
        %2591 = vmatpush2.bf16.msra.mxu0 0
        %2592 = vmatprep.subr.bf16.mxu0 0
        %2593 = vmatpush2.bf16.msra.mxu0 0
        %2594 = vmatprep.subr.bf16.mxu0 0
        %2595 = vmatpush2.bf16.msra.mxu0 0
        %2596 = vmatprep.mubr.bf16.mxu0 0
        %2597 = vmatmul.mubr.bf16.gmra.mxu0 %v2562
        %v2598 = vpop.f32.mrf.mxu0
        %v2599 = vadd.f32 %v2534, %v2598
        %v2600 = vpop.f32.mrf.mxu0
        %v2601 = vpop.f32.mrf.mxu0
        %v2602 = vadd.f32 %v2534, %v2601
        %v2603 = vpop.f32.mrf.mxu0
        %2604 = vdwg.mxu0
        %v2605 = vadd.f32 %v2352, %v2599
        %v2606 = vadd.f32 %v2353, %v2602
        %2607 = vst.msk [vmem:[#allocation2] sm:$0xff] %vm827, %v2605
        %2608 = vst.msk [vmem:[#allocation2 + $0x8] sm:$0xff] %vm827, %v2606
        // Predicated region
        $region97: #{transformer_encoder_forward.1} parent=91 // pred_check
          %p2609 = pneg %p501
        $region98: #{transformer_encoder_forward.1} parent=91 // pred_check_branch
          %2611 = sbr.rel (%p2609) target = $region100
        $region99: #{transformer_encoder_forward.1} parent=91 // pred_region
          %s2613 = ssub.s32 256, 256
          %2614 = vsyncadd [#allocation3], %s2613
          %s2615 = sshll.u32 [#allocation2], 4
          %s2616 = int_to_ptr.vmem [resolvable:$true] %s2615
          %2621 = dma.vmem_to_hbm [thread:$0]  %s2616, 256, %s18, [#allocation3], 128, 128, 8
        $region100: #{transformer_encoder_forward.1} parent=91 // pred_fallthru
          _
        // Predicated region
        $region101: #{transformer_encoder_forward.1} parent=91 // pred_check
          %p2622 = pneg %p501
        $region102: #{transformer_encoder_forward.1} parent=91 // pred_check_branch
          %2624 = sbr.rel (%p2622) target = $region104
        $region103: #{transformer_encoder_forward.1} parent=91 // pred_region
          %2625 = dma.done [#allocation3], 256
        $region104: #{transformer_encoder_forward.1} parent=91 // pred_fallthru
          _
      $region92: #{transformer_encoder_forward.1} parent=5 // pred_fallthru
        _
      %p2626 = scmp.le.s32.totalorder 2, %s25
      // Predicated region
      $region105: #{transformer_encoder_forward.1} parent=5 // pred_check
        %p2627 = pneg %p2626
      $region106: #{transformer_encoder_forward.1} parent=5 // pred_check_branch
        %2629 = sbr.rel (%p2627) target = $region108
      $region107: #{transformer_encoder_forward.1} parent=5 // pred_region
        %s2630 = ssub.s32 %s25, 2
      $region108: #{transformer_encoder_forward.1} parent=5 // pred_fallthru
        _
    $region6: #{transformer_encoder_forward.1} parent=1 // loop_footer
      %s29 = sadd.s32 1, %s25
    $region7: #{transformer_encoder_forward.1} parent=1 // loop_footer_branch
      %24 = sbr.rel target = $region3
    $region8: #{transformer_encoder_forward.1} parent=1 // loop_exit
      _
    %2631 = vsyncpa [#allocation3], 1
    %s2632 = scalar_lea.sflag [#allocation3], 1
    %2633 = vsyncpa %s2632, 1

</llo_original>
